<compile_context>
chip_gen: v6e
topology: v6e:2x2x1
jax: 0.10.0
libtpu: 0.0.40
codegen_flags: <defaults>
</compile_context>

<pallas_src>
import functools
import math

import jax
import jax.numpy as jnp
from jax import lax
from jax.experimental import pallas as pl
from jax.experimental.pallas import tpu as pltpu


# ----------------------------------------------------------------------------
# Pallas kernels
# ----------------------------------------------------------------------------
def _mha_seq_kernel(x_ref, wqkv_ref, bqkv_ref, wo_ref, bo_ref, bias_ref,
                    o_ref, ctx_ref, *, num_heads):
    """One (T, H) sequence of multi-head self-attention.

    wqkv/bqkv already carry the 1/sqrt(dh) scale folded into the Q columns.
    Per-head context vectors are written into the (T, H) VMEM scratch so the
    output projection is a single (T,H)@(H,H) matmul.
    """
    T, H = x_ref.shape[1], x_ref.shape[2]
    dh = H // num_heads

    x = x_ref[0]                                                     # (T, H)
    qkv = (jnp.dot(x, wqkv_ref[...], preferred_element_type=jnp.float32)
           + bqkv_ref[...])                                          # (T, 3H)

    for h in range(num_heads):                                       # small, unrolled
        q_h = qkv[:, h * dh:(h + 1) * dh]                            # (T, dh), pre-scaled
        k_h = qkv[:, H + h * dh:H + (h + 1) * dh]                    # (T, dh)
        v_h = qkv[:, 2 * H + h * dh:2 * H + (h + 1) * dh]            # (T, dh)
        # q @ k^T without a transpose: contract last dims.
        s = lax.dot_general(q_h, k_h, (((1,), (1,)), ((), ())),
                            preferred_element_type=jnp.float32)      # (T, T)
        s = s + bias_ref[h]
        s = s - jnp.max(s, axis=-1, keepdims=True)
        p = jnp.exp(s)
        p = p / jnp.sum(p, axis=-1, keepdims=True)
        ctx_ref[:, h * dh:(h + 1) * dh] = jnp.dot(
            p, v_h, preferred_element_type=jnp.float32)              # (T, dh)

    o_ref[0] = (jnp.dot(ctx_ref[...], wo_ref[...],
                        preferred_element_type=jnp.float32) + bo_ref[...])


def pallas_mha_batched(x, p, attn_bias, num_heads):
    """x: (B, T, H); attn_bias: (num_heads, T, T) additive logit bias."""
    B, T, H = x.shape
    NH = num_heads
    kernel = functools.partial(_mha_seq_kernel, num_heads=num_heads)
    return pl.pallas_call(
        kernel,
        out_shape=jax.ShapeDtypeStruct((B, T, H), jnp.float32),
        grid=(B,),
        in_specs=[
            pl.BlockSpec((1, T, H), lambda b: (b, 0, 0)),          # streamed
            pl.BlockSpec((H, 3 * H), lambda b: (0, 0)),            # resident
            pl.BlockSpec((1, 3 * H), lambda b: (0, 0)),
            pl.BlockSpec((H, H), lambda b: (0, 0)),
            pl.BlockSpec((1, H), lambda b: (0, 0)),
            pl.BlockSpec((NH, T, T), lambda b: (0, 0, 0)),
        ],
        out_specs=pl.BlockSpec((1, T, H), lambda b: (b, 0, 0)),
        scratch_shapes=[pltpu.VMEM((T, H), jnp.float32)],
        compiler_params=pltpu.CompilerParams(
            dimension_semantics=("parallel",)),
    )(x, p["wqkv"], p["bqkv"], p["wo"], p["bo"], attn_bias)


def _cls_attn_kernel(xt_ref, wkv_ref, bkv_ref, q_ref, wo_ref, bo_ref,
                     o_ref, ctx_ref, *, num_heads):
    """CLS-token-only attention for a block of Mb motifs.

    xt_ref: (Mb, L, H) with the CLS token prepended as row 0 of each motif.
    q_ref : (1, H) pre-scaled CLS query (same for every motif).
    Only the CLS query row is computed — the rest of the rows are never used
    by the PyTorch module, so their scores / contexts are skipped entirely.
    """
    Mb, L, H = xt_ref.shape
    dh = H // num_heads

    xt = xt_ref[...].reshape(Mb * L, H)
    kv = (jnp.dot(xt, wkv_ref[...], preferred_element_type=jnp.float32)
          + bkv_ref[...])                                            # (Mb*L, 2H)
    kv3 = kv.reshape(Mb, L, 2 * H)
    q = q_ref[...]                                                   # (1, H)

    for h in range(num_heads):
        q_h = jnp.broadcast_to(q[:, h * dh:(h + 1) * dh][None, :, :],
                               (Mb, 1, dh))                          # (Mb, 1, dh)
        k_h = kv3[:, :, h * dh:(h + 1) * dh]                         # (Mb, L, dh)
        v_h = kv3[:, :, H + h * dh:H + (h + 1) * dh]                 # (Mb, L, dh)
        s = jnp.einsum('bqd,bkd->bqk', q_h, k_h,
                       preferred_element_type=jnp.float32)           # (Mb, 1, L)
        s = s - jnp.max(s, axis=-1, keepdims=True)
        p = jnp.exp(s)
        p = p / jnp.sum(p, axis=-1, keepdims=True)
        ctx = jnp.einsum('bqk,bkd->bqd', p, v_h,
                         preferred_element_type=jnp.float32)         # (Mb, 1, dh)
        ctx_ref[:, h * dh:(h + 1) * dh] = ctx[:, 0, :]

    o_ref[...] = (jnp.dot(ctx_ref[...], wo_ref[...],
                          preferred_element_type=jnp.float32) + bo_ref[...])


def pallas_cls_attn(motif_x, p, num_heads, motifs_per_step=8):
    """motif_x: (M, ms, H) -> (M, H) via CLS-token attention (CLS row only)."""
    M, ms, H = motif_x.shape
    L = ms + 1
    token = jnp.broadcast_to(p["token"][None, :, :], (M, 1, H))
    xt = jnp.concatenate([token, motif_x], axis=1)                   # (M, L, H)

    Mb = motifs_per_step
    n_blocks = pl.cdiv(M, Mb)
    Mp = n_blocks * Mb
    if Mp != M:                                                      # pad, slice later
        xt = jnp.concatenate(
            [xt, jnp.zeros((Mp - M, L, H), xt.dtype)], axis=0)

    kernel = functools.partial(_cls_attn_kernel, num_heads=num_heads)
    out = pl.pallas_call(
        kernel,
        out_shape=jax.ShapeDtypeStruct((Mp, H), jnp.float32),
        grid=(n_blocks,),
        in_specs=[
            pl.BlockSpec((Mb, L, H), lambda i: (i, 0, 0)),           # streamed
            pl.BlockSpec((H, 2 * H), lambda i: (0, 0)),              # resident
            pl.BlockSpec((1, 2 * H), lambda i: (0, 0)),
            pl.BlockSpec((1, H), lambda i: (0, 0)),
            pl.BlockSpec((H, H), lambda i: (0, 0)),
            pl.BlockSpec((1, H), lambda i: (0, 0)),
        ],
        out_specs=pl.BlockSpec((Mb, H), lambda i: (i, 0)),
        scratch_shapes=[pltpu.VMEM((Mb, H), jnp.float32)],
        compiler_params=pltpu.CompilerParams(
            dimension_semantics=("parallel",)),
    )(xt, p["wkv"], p["bkv"], p["q_cls"], p["wo"], p["bo"])
    return out[:M]


def _gcn_relu_kernel(x_ref, adj_ref, w_ref, b_ref, o_ref):
    # per snapshot: o = relu(adj @ (x @ w) + b)
    support = jnp.dot(x_ref[0], w_ref[...], preferred_element_type=jnp.float32)
    out = (jnp.dot(adj_ref[0], support, preferred_element_type=jnp.float32)
           + b_ref[...])
    o_ref[0] = jnp.maximum(out, 0.0)


def pallas_gcn_relu(x, adj, w, b):
    """x: (S, N, F), adj: (S, N, N) -> (S, N, H); grid over snapshots."""
    # TODO(synk): at realistic N, tile rows of adj (grid (S, N//tm[, K])) with a
    # resident (F,H) weight + f32 accumulator, and batch snapshots per step at
    # tiny N to amortize per-grid-step overhead; budgets re-derived for v7x.
    S, N, F = x.shape
    F2, H = w.shape
    assert F == F2 and adj.shape == (S, N, N)
    return pl.pallas_call(
        _gcn_relu_kernel,
        out_shape=jax.ShapeDtypeStruct((S, N, H), jnp.float32),
        grid=(S,),
        in_specs=[
            pl.BlockSpec((1, N, F), lambda i: (i, 0, 0)),
            pl.BlockSpec((1, N, N), lambda i: (i, 0, 0)),
            pl.BlockSpec((F, H), lambda i: (0, 0)),
            pl.BlockSpec((1, H), lambda i: (0, 0)),
        ],
        out_specs=pl.BlockSpec((1, N, H), lambda i: (i, 0, 0)),
        compiler_params=pltpu.CompilerParams(
            dimension_semantics=("parallel",)),
    )(x, adj, w, b)


def _xxt_kernel(x_ref, o_ref):
    x = x_ref[0]
    # x @ x^T without an explicit transpose: contract last dims.
    o_ref[0] = lax.dot_general(x, x, (((1,), (1,)), ((), ())),
                               preferred_element_type=jnp.float32)


def pallas_xxt(x):
    """x: (S, N, H) -> (S, N, N); grid over snapshots."""
    # TODO(synk): at realistic N, tile the (N,N) output into (tm,tn) blocks;
    # at tiny S*N, batch several snapshots per grid step instead.
    S, N, H = x.shape
    return pl.pallas_call(
        _xxt_kernel,
        out_shape=jax.ShapeDtypeStruct((S, N, N), jnp.float32),
        grid=(S,),
        in_specs=[pl.BlockSpec((1, N, H), lambda i: (i, 0, 0))],
        out_specs=pl.BlockSpec((1, N, N), lambda i: (i, 0, 0)),
        compiler_params=pltpu.CompilerParams(
            dimension_semantics=("parallel",)),
    )(x)


# ----------------------------------------------------------------------------
# Parameter preparation (done ONCE, outside the per-forward hot path)
# ----------------------------------------------------------------------------
def prepare_mha_params(p, num_heads):
    """Fuse Q|K|V and fold the 1/sqrt(dh) scale into the Q columns."""
    hid = p["wq"].shape[0]
    scale = 1.0 / math.sqrt(hid // num_heads)
    wqkv = jnp.concatenate([p["wq"] * scale, p["wk"], p["wv"]], axis=1)  # (H, 3H)
    bqkv = jnp.concatenate([p["bq"] * scale, p["bk"], p["bv"]], axis=1)  # (1, 3H)
    return {"wqkv": wqkv, "bqkv": bqkv, "wo": p["wo"], "bo": p["bo"]}


def prepare_cls_params(mfe, num_heads):
    """MotifFeatExtract: fuse K|V, precompute the (scaled) CLS-token query."""
    p = mfe["attn"]
    hid = p["wq"].shape[0]
    scale = 1.0 / math.sqrt(hid // num_heads)
    q_cls = (mfe["motif_token"] @ p["wq"] + p["bq"]) * scale             # (1, H)
    wkv = jnp.concatenate([p["wk"], p["wv"]], axis=1)                    # (H, 2H)
    bkv = jnp.concatenate([p["bk"], p["bv"]], axis=1)                    # (1, 2H)
    return {"token": mfe["motif_token"], "q_cls": q_cls,
            "wkv": wkv, "bkv": bkv, "wo": p["wo"], "bo": p["bo"]}


def prepare_params(params, num_heads):
    out = dict(params)
    out["attn"] = prepare_mha_params(params["attn"], num_heads)
    out["mfe1"] = prepare_cls_params(params["mfe1"], num_heads)
    out["mfe2"] = prepare_cls_params(params["mfe2"], num_heads)
    return out


# ----------------------------------------------------------------------------
# Model forward (JAX glue around the Pallas kernels)
# ----------------------------------------------------------------------------
def build_relative_matrix(snap_len):
    idx = jnp.arange(snap_len)
    return idx[None, :] - idx[:, None] + snap_len - 1                    # (S, S)


def minibatch_model_forward(params, snap_adjs, batch_size, snap_batch_nodes,
                            snap_motifs_id, pos_id, adj_sample, num_heads):
    # Per-snapshot work is batched into stacked tensors with a leading snapshot
    # axis (one pallas_call per stage).  Assumes uniform per-snapshot shapes.
    # TODO(synk): ragged snapshots would need padding or a per-snapshot fallback.
    snap_len = len(snap_adjs)
    nm = len(snap_motifs_id[0])                  # motifs per snapshot (uniform)

    # node embedding gathers (glue)
    x = [params["node_embedding"][bn] for bn in snap_batch_nodes]

    # --- MotifFE1: all snapshots' motifs in ONE CLS-attention call -----------
    motif_x = jnp.stack([x[i][m] for i in range(snap_len)
                         for m in snap_motifs_id[i]])                # (S*nm, ms, feat)
    motif_embs = pallas_cls_attn(motif_x, params["mfe1"], num_heads)
    motif_embs = motif_embs.reshape(snap_len, nm, -1)                # (S, nm, hid)

    # --- shared GCN encoder, batched over snapshots ---------------------------
    xin = jnp.stack([jnp.concatenate([x[i], motif_embs[i]], axis=0)
                     for i in range(snap_len)])                      # (S, n+nm, feat)
    adjs = jnp.stack([snap_adjs[i][adj_sample[i]][:, adj_sample[i]]
                      for i in range(snap_len)])                     # (S, n+nm, n+nm)
    h = pallas_gcn_relu(xin, adjs, params["enc"]["gc1_w"], params["enc"]["gc1_b"])
    hid = h.shape[-1]

    # drop motif rows + scatter output[pos_idx] = x  (glue)
    enc_out = [jnp.zeros((batch_size, hid), jnp.float32)
               .at[pos_id[i]].set(h[i, :-nm]) for i in range(snap_len)]
    xs = jnp.stack(enc_out).transpose(1, 0, 2)                       # (B, S, hid)

    # --- temporal attention with relative-time bias (grid over batch) --------
    rel = build_relative_matrix(snap_len)
    attn_bias = jnp.transpose(params["time_encoder"][rel], (2, 0, 1))  # (NH,S,S)
    xs = pallas_mha_batched(xs, params["attn"], attn_bias, num_heads)  # (B, S, hid)
    xs = xs.transpose(1, 0, 2)                                       # (S, B, hid)

    # --- MotifFE2 + structure decoder, batched over snapshots -----------------
    xi = [xs[i][pos_id[i]] for i in range(snap_len)]                 # each (n, hid)
    motif_x2 = jnp.stack([xi[i][m] for i in range(snap_len)
                          for m in snap_motifs_id[i]])               # (S*nm, ms, hid)
    mfeat = pallas_cls_attn(motif_x2, params["mfe2"], num_heads)
    mfeat = mfeat.reshape(snap_len, nm, hid)                         # (S, nm, hid)
    xcat = jnp.stack([jnp.concatenate([xi[i], mfeat[i]], axis=0)
                      for i in range(snap_len)])                     # (S, n+nm, hid)
    out = pallas_xxt(xcat)                                           # (S, n+nm, n+nm)
    return [out[i] for i in range(snap_len)]


# ----------------------------------------------------------------------------
# Deterministic parameter / input construction
# ----------------------------------------------------------------------------
def _normal(key, shape, std=0.02):
    return std * jax.random.normal(key, shape, dtype=jnp.float32)


def init_mha_params(key, hid):
    ks = jax.random.split(key, 4)
    return {
        "wq": _normal(ks[0], (hid, hid)), "bq": jnp.zeros((1, hid), jnp.float32),
        "wk": _normal(ks[1], (hid, hid)), "bk": jnp.zeros((1, hid), jnp.float32),
        "wv": _normal(ks[2], (hid, hid)), "bv": jnp.zeros((1, hid), jnp.float32),
        "wo": _normal(ks[3], (hid, hid)), "bo": jnp.zeros((1, hid), jnp.float32),
    }


def init_model_params(key, nodes_num, snap_len, feat, hid, num_heads):
    ks = jax.random.split(key, 8)
    return {
        "node_embedding": _normal(ks[0], (nodes_num, feat)),
        "time_encoder": _normal(ks[1], (2 * snap_len - 1, num_heads)),
        "enc": {"gc1_w": _normal(ks[2], (feat, hid)),
                "gc1_b": jnp.zeros((1, hid), jnp.float32)},
        "attn": init_mha_params(ks[3], hid),
        "mfe1": {"motif_token": _normal(ks[4], (1, hid)),
                 "attn": init_mha_params(ks[5], hid)},
        "mfe2": {"motif_token": _normal(ks[6], (1, hid)),
                 "attn": init_mha_params(ks[7], hid)},
    }


if __name__ == "__main__":
    key = jax.random.PRNGKey(0)

    # small config; feat == hid (required by the torch cat()s) and a multiple
    # of 128 so every kernel output / weight is lane-dense.
    nodes_num = 16
    snap_len = 3
    feat = hid = 128
    num_heads = 4
    batch_size = 8          # pad_n
    n_per_snap = 6          # sampled batch nodes per snapshot
    n_motifs, motif_size = 2, 3
    adj_full = 24           # full motif_norm_adj side per snapshot

    k_params, k_adj = jax.random.split(key)
    raw_params = init_model_params(k_params, nodes_num, snap_len, feat, hid,
                                   num_heads)
    params = prepare_params(raw_params, num_heads)   # fuse QKV / fold scale ONCE

    adj_keys = jax.random.split(k_adj, snap_len)
    snap_adjs = [0.1 * jax.random.normal(adj_keys[i], (adj_full, adj_full),
                                         jnp.float32)
                 for i in range(snap_len)]

    # deterministic index structures
    snap_batch_nodes = [
        jnp.array([(i + 2 * j) % nodes_num for j in range(n_per_snap)], jnp.int32)
        for i in range(snap_len)
    ]
    snap_motifs_id = [
        [jnp.array([0, 1, 2], jnp.int32), jnp.array([(i + 1) % 6, 3, 5], jnp.int32)]
        for i in range(snap_len)
    ]
    pos_id = [
        jnp.array([(i + j) % batch_size for j in range(n_per_snap)], jnp.int32)
        for i in range(snap_len)
    ]
    adj_sample = [
        jnp.array([(3 * i + 2 * j) % adj_full for j in range(n_per_snap + n_motifs)],
                  jnp.int32)
        for i in range(snap_len)
    ]

    # TODO(synk): dropout layers are identity (eval mode); no Pallas op needed.
    outputs = minibatch_model_forward(
        params, snap_adjs, batch_size, snap_batch_nodes,
        snap_motifs_id, pos_id, adj_sample, num_heads,
    )
    for o in outputs:
        jax.block_until_ready(o)
        assert o.shape == (n_per_snap + n_motifs, n_per_snap + n_motifs)
        assert jnp.all(jnp.isfinite(o))

    print("KERNEL_OK")
</pallas_src>

<mosaic_0001>
module attributes {stable_mosaic.version = 11 : i64} {
  func.func @_cls_attn_kernel(%arg0: i32, %arg1: memref<8x4x128xf32, #tpu.memory_space<vmem>>, %arg2: memref<128x256xf32, #tpu.memory_space<vmem>>, %arg3: memref<1x256xf32, #tpu.memory_space<vmem>>, %arg4: memref<1x128xf32, #tpu.memory_space<vmem>>, %arg5: memref<128x128xf32, #tpu.memory_space<vmem>>, %arg6: memref<1x128xf32, #tpu.memory_space<vmem>>, %arg7: memref<8x128xf32, #tpu.memory_space<vmem>>, %arg8: memref<8x128xf32, #tpu.memory_space<vmem>>) attributes {dimension_semantics = [#tpu.dimension_semantics<parallel>], iteration_bounds = array<i64: 1>, scalar_prefetch = 0 : i64, scratch_operands = 1 : i64, tpu.core_type = #tpu.core_type<tc>, window_params = [{transform_indices = @transform_0, window_bounds = array<i64: 8, 4, 128>}, {pipeline_mode = #tpu.pipeline_mode<synchronous>, transform_indices = @transform_1, window_bounds = array<i64: 128, 256>}, {pipeline_mode = #tpu.pipeline_mode<synchronous>, transform_indices = @transform_2, window_bounds = array<i64: 1, 256>}, {pipeline_mode = #tpu.pipeline_mode<synchronous>, transform_indices = @transform_3, window_bounds = array<i64: 1, 128>}, {pipeline_mode = #tpu.pipeline_mode<synchronous>, transform_indices = @transform_4, window_bounds = array<i64: 128, 128>}, {pipeline_mode = #tpu.pipeline_mode<synchronous>, transform_indices = @transform_5, window_bounds = array<i64: 1, 128>}, {transform_indices = @transform_6, window_bounds = array<i64: 8, 128>}]} {
    %c0 = arith.constant 0 : index
    %c0_0 = arith.constant 0 : index
    %c0_1 = arith.constant 0 : index
    %0 = vector.load %arg1[%c0, %c0_0, %c0_1] : memref<8x4x128xf32, #tpu.memory_space<vmem>>, vector<8x4x128xf32>
    %1 = vector.shape_cast %0 : vector<8x4x128xf32> to vector<32x128xf32>
    %c0_2 = arith.constant 0 : index
    %c0_3 = arith.constant 0 : index
    %2 = vector.load %arg2[%c0_2, %c0_3] : memref<128x256xf32, #tpu.memory_space<vmem>>, vector<128x256xf32>
    %cst = arith.constant dense<0.000000e+00> : vector<32x256xf32>
    %3 = tpu.matmul %1, %2, %cst {dimension_numbers = #tpu.dot_dimension_numbers<[1], [0], [0], [1], [0, 0, 1, 1], [], []>} : vector<32x128xf32>, vector<128x256xf32>, vector<32x256xf32> -> vector<32x256xf32>
    %c0_4 = arith.constant 0 : index
    %c0_5 = arith.constant 0 : index
    %4 = vector.load %arg3[%c0_4, %c0_5] : memref<1x256xf32, #tpu.memory_space<vmem>>, vector<1x256xf32>
    %5 = vector.broadcast %4 : vector<1x256xf32> to vector<32x256xf32>
    %6 = arith.addf %3, %5 : vector<32x256xf32>
    %7 = vector.shape_cast %6 : vector<32x256xf32> to vector<8x4x256xf32>
    %c0_6 = arith.constant 0 : index
    %c0_7 = arith.constant 0 : index
    %8 = vector.load %arg4[%c0_6, %c0_7] : memref<1x128xf32, #tpu.memory_space<vmem>>, vector<1x128xf32>
    %9 = vector.extract_strided_slice %8 {offsets = [0, 0], sizes = [1, 32], strides = [1, 1]} : vector<1x128xf32> to vector<1x32xf32>
    %10 = vector.shape_cast %9 : vector<1x32xf32> to vector<1x1x32xf32>
    %11 = vector.shape_cast %10 : vector<1x1x32xf32> to vector<1x1x32xf32>
    %12 = vector.broadcast %11 : vector<1x1x32xf32> to vector<8x1x32xf32>
    %13 = vector.extract_strided_slice %7 {offsets = [0, 0, 0], sizes = [8, 4, 32], strides = [1, 1, 1]} : vector<8x4x256xf32> to vector<8x4x32xf32>
    %14 = vector.extract_strided_slice %7 {offsets = [0, 0, 128], sizes = [8, 4, 32], strides = [1, 1, 1]} : vector<8x4x256xf32> to vector<8x4x32xf32>
    "tpu.trace_start"() <{level = 10 : i32, message = "bqd,bkd->bqk"}> : () -> ()
    %cst_8 = arith.constant dense<0.000000e+00> : vector<8x1x4xf32>
    %15 = tpu.matmul %12, %13, %cst_8 {dimension_numbers = #tpu.dot_dimension_numbers<[2], [2], [1], [1], [0, 0, 0, 1, 1, 1], [0], [0]>} : vector<8x1x32xf32>, vector<8x4x32xf32>, vector<8x1x4xf32> -> vector<8x1x4xf32>
    "tpu.trace_stop"() : () -> ()
    %cst_9 = arith.constant dense<0xFF800000> : vector<8x1xf32>
    %16 = vector.multi_reduction <maximumf>, %15, %cst_9 [2] : vector<8x1x4xf32> to vector<8x1xf32>
    %17 = vector.shape_cast %16 : vector<8x1xf32> to vector<8x1x1xf32>
    %18 = vector.broadcast %17 : vector<8x1x1xf32> to vector<8x1x4xf32>
    %19 = arith.subf %15, %18 : vector<8x1x4xf32>
    %20 = math.exp %19 : vector<8x1x4xf32>
    %cst_10 = arith.constant dense<0.000000e+00> : vector<8x1xf32>
    %21 = vector.multi_reduction <add>, %20, %cst_10 [2] : vector<8x1x4xf32> to vector<8x1xf32>
    %22 = vector.shape_cast %21 : vector<8x1xf32> to vector<8x1x1xf32>
    %23 = vector.broadcast %22 : vector<8x1x1xf32> to vector<8x1x4xf32>
    %24 = arith.divf %20, %23 : vector<8x1x4xf32>
    "tpu.trace_start"() <{level = 10 : i32, message = "bqk,bkd->bqd"}> : () -> ()
    %cst_11 = arith.constant dense<0.000000e+00> : vector<8x1x32xf32>
    %25 = tpu.matmul %24, %14, %cst_11 {dimension_numbers = #tpu.dot_dimension_numbers<[2], [1], [1], [2], [0, 0, 0, 1, 1, 2], [0], [0]>} : vector<8x1x4xf32>, vector<8x4x32xf32>, vector<8x1x32xf32> -> vector<8x1x32xf32>
    "tpu.trace_stop"() : () -> ()
    %26 = vector.shape_cast %25 : vector<8x1x32xf32> to vector<8x32xf32>
    %c0_12 = arith.constant 0 : index
    %c0_13 = arith.constant 0 : index
    %27 = vector.load %arg8[%c0_12, %c0_13] : memref<8x128xf32, #tpu.memory_space<vmem>>, vector<8x32xf32>
    tpu.vector_store %arg8[%c0_12, %c0_13], %26 {strides = array<i32>} : memref<8x128xf32, #tpu.memory_space<vmem>>, vector<8x32xf32>,
    %28 = vector.extract_strided_slice %8 {offsets = [0, 32], sizes = [1, 32], strides = [1, 1]} : vector<1x128xf32> to vector<1x32xf32>
    %29 = vector.shape_cast %28 : vector<1x32xf32> to vector<1x1x32xf32>
    %30 = vector.shape_cast %29 : vector<1x1x32xf32> to vector<1x1x32xf32>
    %31 = vector.broadcast %30 : vector<1x1x32xf32> to vector<8x1x32xf32>
    %32 = vector.extract_strided_slice %7 {offsets = [0, 0, 32], sizes = [8, 4, 32], strides = [1, 1, 1]} : vector<8x4x256xf32> to vector<8x4x32xf32>
    %33 = vector.extract_strided_slice %7 {offsets = [0, 0, 160], sizes = [8, 4, 32], strides = [1, 1, 1]} : vector<8x4x256xf32> to vector<8x4x32xf32>
    "tpu.trace_start"() <{level = 10 : i32, message = "bqd,bkd->bqk"}> : () -> ()
    %cst_14 = arith.constant dense<0.000000e+00> : vector<8x1x4xf32>
    %34 = tpu.matmul %31, %32, %cst_14 {dimension_numbers = #tpu.dot_dimension_numbers<[2], [2], [1], [1], [0, 0, 0, 1, 1, 1], [0], [0]>} : vector<8x1x32xf32>, vector<8x4x32xf32>, vector<8x1x4xf32> -> vector<8x1x4xf32>
    "tpu.trace_stop"() : () -> ()
    %cst_15 = arith.constant dense<0xFF800000> : vector<8x1xf32>
    %35 = vector.multi_reduction <maximumf>, %34, %cst_15 [2] : vector<8x1x4xf32> to vector<8x1xf32>
    %36 = vector.shape_cast %35 : vector<8x1xf32> to vector<8x1x1xf32>
    %37 = vector.broadcast %36 : vector<8x1x1xf32> to vector<8x1x4xf32>
    %38 = arith.subf %34, %37 : vector<8x1x4xf32>
    %39 = math.exp %38 : vector<8x1x4xf32>
    %cst_16 = arith.constant dense<0.000000e+00> : vector<8x1xf32>
    %40 = vector.multi_reduction <add>, %39, %cst_16 [2] : vector<8x1x4xf32> to vector<8x1xf32>
    %41 = vector.shape_cast %40 : vector<8x1xf32> to vector<8x1x1xf32>
    %42 = vector.broadcast %41 : vector<8x1x1xf32> to vector<8x1x4xf32>
    %43 = arith.divf %39, %42 : vector<8x1x4xf32>
    "tpu.trace_start"() <{level = 10 : i32, message = "bqk,bkd->bqd"}> : () -> ()
    %cst_17 = arith.constant dense<0.000000e+00> : vector<8x1x32xf32>
    %44 = tpu.matmul %43, %33, %cst_17 {dimension_numbers = #tpu.dot_dimension_numbers<[2], [1], [1], [2], [0, 0, 0, 1, 1, 2], [0], [0]>} : vector<8x1x4xf32>, vector<8x4x32xf32>, vector<8x1x32xf32> -> vector<8x1x32xf32>
    "tpu.trace_stop"() : () -> ()
    %45 = vector.shape_cast %44 : vector<8x1x32xf32> to vector<8x32xf32>
    %c0_18 = arith.constant 0 : index
    %c32 = arith.constant 32 : index
    %46 = vector.load %arg8[%c0_18, %c32] : memref<8x128xf32, #tpu.memory_space<vmem>>, vector<8x32xf32>
    tpu.vector_store %arg8[%c0_18, %c32], %45 {strides = array<i32>} : memref<8x128xf32, #tpu.memory_space<vmem>>, vector<8x32xf32>,
    %47 = vector.extract_strided_slice %8 {offsets = [0, 64], sizes = [1, 32], strides = [1, 1]} : vector<1x128xf32> to vector<1x32xf32>
    %48 = vector.shape_cast %47 : vector<1x32xf32> to vector<1x1x32xf32>
    %49 = vector.shape_cast %48 : vector<1x1x32xf32> to vector<1x1x32xf32>
    %50 = vector.broadcast %49 : vector<1x1x32xf32> to vector<8x1x32xf32>
    %51 = vector.extract_strided_slice %7 {offsets = [0, 0, 64], sizes = [8, 4, 32], strides = [1, 1, 1]} : vector<8x4x256xf32> to vector<8x4x32xf32>
    %52 = vector.extract_strided_slice %7 {offsets = [0, 0, 192], sizes = [8, 4, 32], strides = [1, 1, 1]} : vector<8x4x256xf32> to vector<8x4x32xf32>
    "tpu.trace_start"() <{level = 10 : i32, message = "bqd,bkd->bqk"}> : () -> ()
    %cst_19 = arith.constant dense<0.000000e+00> : vector<8x1x4xf32>
    %53 = tpu.matmul %50, %51, %cst_19 {dimension_numbers = #tpu.dot_dimension_numbers<[2], [2], [1], [1], [0, 0, 0, 1, 1, 1], [0], [0]>} : vector<8x1x32xf32>, vector<8x4x32xf32>, vector<8x1x4xf32> -> vector<8x1x4xf32>
    "tpu.trace_stop"() : () -> ()
    %cst_20 = arith.constant dense<0xFF800000> : vector<8x1xf32>
    %54 = vector.multi_reduction <maximumf>, %53, %cst_20 [2] : vector<8x1x4xf32> to vector<8x1xf32>
    %55 = vector.shape_cast %54 : vector<8x1xf32> to vector<8x1x1xf32>
    %56 = vector.broadcast %55 : vector<8x1x1xf32> to vector<8x1x4xf32>
    %57 = arith.subf %53, %56 : vector<8x1x4xf32>
    %58 = math.exp %57 : vector<8x1x4xf32>
    %cst_21 = arith.constant dense<0.000000e+00> : vector<8x1xf32>
    %59 = vector.multi_reduction <add>, %58, %cst_21 [2] : vector<8x1x4xf32> to vector<8x1xf32>
    %60 = vector.shape_cast %59 : vector<8x1xf32> to vector<8x1x1xf32>
    %61 = vector.broadcast %60 : vector<8x1x1xf32> to vector<8x1x4xf32>
    %62 = arith.divf %58, %61 : vector<8x1x4xf32>
    "tpu.trace_start"() <{level = 10 : i32, message = "bqk,bkd->bqd"}> : () -> ()
    %cst_22 = arith.constant dense<0.000000e+00> : vector<8x1x32xf32>
    %63 = tpu.matmul %62, %52, %cst_22 {dimension_numbers = #tpu.dot_dimension_numbers<[2], [1], [1], [2], [0, 0, 0, 1, 1, 2], [0], [0]>} : vector<8x1x4xf32>, vector<8x4x32xf32>, vector<8x1x32xf32> -> vector<8x1x32xf32>
    "tpu.trace_stop"() : () -> ()
    %64 = vector.shape_cast %63 : vector<8x1x32xf32> to vector<8x32xf32>
    %c0_23 = arith.constant 0 : index
    %c64 = arith.constant 64 : index
    %65 = vector.load %arg8[%c0_23, %c64] : memref<8x128xf32, #tpu.memory_space<vmem>>, vector<8x32xf32>
    tpu.vector_store %arg8[%c0_23, %c64], %64 {strides = array<i32>} : memref<8x128xf32, #tpu.memory_space<vmem>>, vector<8x32xf32>,
    %66 = vector.extract_strided_slice %8 {offsets = [0, 96], sizes = [1, 32], strides = [1, 1]} : vector<1x128xf32> to vector<1x32xf32>
    %67 = vector.shape_cast %66 : vector<1x32xf32> to vector<1x1x32xf32>
    %68 = vector.shape_cast %67 : vector<1x1x32xf32> to vector<1x1x32xf32>
    %69 = vector.broadcast %68 : vector<1x1x32xf32> to vector<8x1x32xf32>
    %70 = vector.extract_strided_slice %7 {offsets = [0, 0, 96], sizes = [8, 4, 32], strides = [1, 1, 1]} : vector<8x4x256xf32> to vector<8x4x32xf32>
    %71 = vector.extract_strided_slice %7 {offsets = [0, 0, 224], sizes = [8, 4, 32], strides = [1, 1, 1]} : vector<8x4x256xf32> to vector<8x4x32xf32>
    "tpu.trace_start"() <{level = 10 : i32, message = "bqd,bkd->bqk"}> : () -> ()
    %cst_24 = arith.constant dense<0.000000e+00> : vector<8x1x4xf32>
    %72 = tpu.matmul %69, %70, %cst_24 {dimension_numbers = #tpu.dot_dimension_numbers<[2], [2], [1], [1], [0, 0, 0, 1, 1, 1], [0], [0]>} : vector<8x1x32xf32>, vector<8x4x32xf32>, vector<8x1x4xf32> -> vector<8x1x4xf32>
    "tpu.trace_stop"() : () -> ()
    %cst_25 = arith.constant dense<0xFF800000> : vector<8x1xf32>
    %73 = vector.multi_reduction <maximumf>, %72, %cst_25 [2] : vector<8x1x4xf32> to vector<8x1xf32>
    %74 = vector.shape_cast %73 : vector<8x1xf32> to vector<8x1x1xf32>
    %75 = vector.broadcast %74 : vector<8x1x1xf32> to vector<8x1x4xf32>
    %76 = arith.subf %72, %75 : vector<8x1x4xf32>
    %77 = math.exp %76 : vector<8x1x4xf32>
    %cst_26 = arith.constant dense<0.000000e+00> : vector<8x1xf32>
    %78 = vector.multi_reduction <add>, %77, %cst_26 [2] : vector<8x1x4xf32> to vector<8x1xf32>
    %79 = vector.shape_cast %78 : vector<8x1xf32> to vector<8x1x1xf32>
    %80 = vector.broadcast %79 : vector<8x1x1xf32> to vector<8x1x4xf32>
    %81 = arith.divf %77, %80 : vector<8x1x4xf32>
    "tpu.trace_start"() <{level = 10 : i32, message = "bqk,bkd->bqd"}> : () -> ()
    %cst_27 = arith.constant dense<0.000000e+00> : vector<8x1x32xf32>
    %82 = tpu.matmul %81, %71, %cst_27 {dimension_numbers = #tpu.dot_dimension_numbers<[2], [1], [1], [2], [0, 0, 0, 1, 1, 2], [0], [0]>} : vector<8x1x4xf32>, vector<8x4x32xf32>, vector<8x1x32xf32> -> vector<8x1x32xf32>
    "tpu.trace_stop"() : () -> ()
    %83 = vector.shape_cast %82 : vector<8x1x32xf32> to vector<8x32xf32>
    %c0_28 = arith.constant 0 : index
    %c96 = arith.constant 96 : index
    %84 = vector.load %arg8[%c0_28, %c96] : memref<8x128xf32, #tpu.memory_space<vmem>>, vector<8x32xf32>
    tpu.vector_store %arg8[%c0_28, %c96], %83 {strides = array<i32>} : memref<8x128xf32, #tpu.memory_space<vmem>>, vector<8x32xf32>,
    %c0_29 = arith.constant 0 : index
    %c0_30 = arith.constant 0 : index
    %85 = vector.load %arg8[%c0_29, %c0_30] : memref<8x128xf32, #tpu.memory_space<vmem>>, vector<8x128xf32>
    %c0_31 = arith.constant 0 : index
    %c0_32 = arith.constant 0 : index
    %86 = vector.load %arg5[%c0_31, %c0_32] : memref<128x128xf32, #tpu.memory_space<vmem>>, vector<128x128xf32>
    %cst_33 = arith.constant dense<0.000000e+00> : vector<8x128xf32>
    %87 = tpu.matmul %85, %86, %cst_33 {dimension_numbers = #tpu.dot_dimension_numbers<[1], [0], [0], [1], [0, 0, 1, 1], [], []>} : vector<8x128xf32>, vector<128x128xf32>, vector<8x128xf32> -> vector<8x128xf32>
    %c0_34 = arith.constant 0 : index
    %c0_35 = arith.constant 0 : index
    %88 = vector.load %arg6[%c0_34, %c0_35] : memref<1x128xf32, #tpu.memory_space<vmem>>, vector<1x128xf32>
    %89 = vector.broadcast %88 : vector<1x128xf32> to vector<8x128xf32>
    %90 = arith.addf %87, %89 : vector<8x128xf32>
    %c0_36 = arith.constant 0 : index
    %c0_37 = arith.constant 0 : index
    %91 = vector.load %arg7[%c0_36, %c0_37] : memref<8x128xf32, #tpu.memory_space<vmem>>, vector<8x128xf32>
    tpu.vector_store %arg7[%c0_36, %c0_37], %90 {strides = array<i32>} : memref<8x128xf32, #tpu.memory_space<vmem>>, vector<8x128xf32>,
    return
  }
  func.func @transform_0(%arg0: i32) -> (i32, i32, i32) {
    %c0_i32 = arith.constant 0 : i32
    %c0_i32_0 = arith.constant 0 : i32
    %c0_i32_1 = arith.constant 0 : i32
    return %arg0, %c0_i32, %c0_i32_0 : i32, i32, i32
  }
  func.func @transform_1(%arg0: i32) -> (i32, i32) {
    %c0_i32 = arith.constant 0 : i32
    %c0_i32_0 = arith.constant 0 : i32
    %c0_i32_1 = arith.constant 0 : i32
    return %c0_i32, %c0_i32_0 : i32, i32
  }
  func.func @transform_2(%arg0: i32) -> (i32, i32) {
    %c0_i32 = arith.constant 0 : i32
    %c0_i32_0 = arith.constant 0 : i32
    %c0_i32_1 = arith.constant 0 : i32
    return %c0_i32, %c0_i32_0 : i32, i32
  }
  func.func @transform_3(%arg0: i32) -> (i32, i32) {
    %c0_i32 = arith.constant 0 : i32
    %c0_i32_0 = arith.constant 0 : i32
    %c0_i32_1 = arith.constant 0 : i32
    return %c0_i32, %c0_i32_0 : i32, i32
  }
  func.func @transform_4(%arg0: i32) -> (i32, i32) {
    %c0_i32 = arith.constant 0 : i32
    %c0_i32_0 = arith.constant 0 : i32
    %c0_i32_1 = arith.constant 0 : i32
    return %c0_i32, %c0_i32_0 : i32, i32
  }
  func.func @transform_5(%arg0: i32) -> (i32, i32) {
    %c0_i32 = arith.constant 0 : i32
    %c0_i32_0 = arith.constant 0 : i32
    %c0_i32_1 = arith.constant 0 : i32
    return %c0_i32, %c0_i32_0 : i32, i32
  }
  func.func @transform_6(%arg0: i32) -> (i32, i32) {
    %c0_i32 = arith.constant 0 : i32
    %c0_i32_0 = arith.constant 0 : i32
    return %arg0, %c0_i32 : i32, i32
  }
}

</mosaic_0001>

<llo_original>
// kernel: tpu_custom_call.1
$region0: #{tpu_custom_call.1}
  #allocation0 [shape = 'u32[]', space=smem, size = 0x4, offset = 0x4, fixed_abs, tag = 'smem constant byte address 0x4 - core index']
  #allocation1 [shape = 'u32[144,128]{1,0:T(1,128)}', space=vmem, size = 0x12000, scoped, tag = 'internal scratch']
  #allocation2 [shape = 'f32[8,128]{1,0:T(8,128)}', space=vmem, size = 0x1000, scoped, tag = 'scratch operand']
  %s0 = inlined_call_operand.hbm [shape: f32[8,4,128], index: 0, kind: input, shape index: {}]
  %s1 = inlined_call_operand.hbm [shape: f32[128,256], index: 1, kind: input, shape index: {}]
  %s2 = inlined_call_operand.vmem [shape: f32[1,256], index: 2, kind: input, shape index: {}]
  %s3 = inlined_call_operand.vmem [shape: f32[1,128], index: 3, kind: input, shape index: {}]
  %s4 = inlined_call_operand.hbm [shape: f32[128,128], index: 4, kind: input, shape index: {}]
  %s5 = inlined_call_operand.vmem [shape: f32[1,128], index: 5, kind: input, shape index: {}]
  %s6 = inlined_call_operand.hbm [shape: f32[8,128], index: 6, kind: output, shape index: {}]
  %s7 = sld [smem:[#allocation0]]
  $region46: #{tpu_custom_call.1} parent=0
    _
  %s9 = ssub.s32 1, %s7
  %s10 = scalar_select 0, %s9, %s7
  $region1: #{tpu_custom_call.1} parent=0
    #allocation3 [shape = 'u8[16384]{0}', space=vmem, size = 0x4000, scoped, tag = 'input window, operand 0, single buffered']
    #allocation4 [shape = 's32[1]{0}', space=sflag, size = 0x4, scoped, tag = 'scoped memory for tpu_custom_call.1']
    #allocation5 [shape = 's32[1]{0}', space=sflag, size = 0x4, scoped, tag = 'scoped memory for tpu_custom_call.1']
    #allocation6 [shape = 'u8[131072]{0}', space=vmem, size = 0x20000, scoped, tag = 'input window, operand 1, single buffered']
    #allocation7 [shape = 's32[1]{0}', space=sflag, size = 0x4, scoped, tag = 'scoped memory for tpu_custom_call.1']
    #allocation8 [shape = 'u8[65536]{0}', space=vmem, size = 0x10000, scoped, tag = 'input window, operand 4, single buffered']
    #allocation9 [shape = 'u8[4096]{0}', space=vmem, size = 0x1000, scoped, tag = 'output window, operand 0, single buffered']
    %11 = vsyncpa [#allocation4], 0
    %12 = vsyncpa [#allocation7], 0
    %13 = vsyncpa [#allocation5], 0
    // Predicated region
    $region2: #{tpu_custom_call.1} parent=1 // pred_check
      _
    $region3: #{tpu_custom_call.1} parent=1 // pred_check_branch
      %15 = sbr.rel (0) target = $region5
    $region4: #{tpu_custom_call.1} parent=1 // pred_region
      %s17 = ssub.s32 512, 512
      %18 = vsyncadd [#allocation4], %s17
      %s19 = sshll.u32 [#allocation3], 4
      %s20 = int_to_ptr.vmem [resolvable:$true] %s19
      %25 = dma.hbm_to_vmem [thread:$0]  %s0, 512, %s20, [#allocation4], 64, 64, 4
    $region5: #{tpu_custom_call.1} parent=1 // pred_fallthru
      _
    // Predicated region
    $region6: #{tpu_custom_call.1} parent=1 // pred_check
      _
    $region7: #{tpu_custom_call.1} parent=1 // pred_check_branch
      %27 = sbr.rel (0) target = $region9
    $region8: #{tpu_custom_call.1} parent=1 // pred_region
      %s29 = ssub.s32 4096, 4096
      %30 = vsyncadd [#allocation7], %s29
      %s31 = sshll.u32 [#allocation6], 4
      %s32 = int_to_ptr.vmem [resolvable:$true] %s31
      %37 = dma.hbm_to_vmem [thread:$0]  %s1, 4096, %s32, [#allocation7], 256, 256, 16
    $region9: #{tpu_custom_call.1} parent=1 // pred_fallthru
      _
    // Predicated region
    $region10: #{tpu_custom_call.1} parent=1 // pred_check
      _
    $region11: #{tpu_custom_call.1} parent=1 // pred_check_branch
      %39 = sbr.rel (0) target = $region13
    $region12: #{tpu_custom_call.1} parent=1 // pred_region
      _
    $region13: #{tpu_custom_call.1} parent=1 // pred_fallthru
      _
    // Predicated region
    $region14: #{tpu_custom_call.1} parent=1 // pred_check
      _
    $region15: #{tpu_custom_call.1} parent=1 // pred_check_branch
      %41 = sbr.rel (0) target = $region17
    $region16: #{tpu_custom_call.1} parent=1 // pred_region
      _
    $region17: #{tpu_custom_call.1} parent=1 // pred_fallthru
      _
    // Predicated region
    $region18: #{tpu_custom_call.1} parent=1 // pred_check
      _
    $region19: #{tpu_custom_call.1} parent=1 // pred_check_branch
      %43 = sbr.rel (0) target = $region21
    $region20: #{tpu_custom_call.1} parent=1 // pred_region
      %s45 = ssub.s32 2048, 2048
      %46 = vsyncadd [#allocation7], %s45
      %s47 = sshll.u32 [#allocation8], 4
      %s48 = int_to_ptr.vmem [resolvable:$true] %s47
      %53 = dma.hbm_to_vmem [thread:$0]  %s4, 2048, %s48, [#allocation7], 128, 128, 8
    $region21: #{tpu_custom_call.1} parent=1 // pred_fallthru
      _
    // Predicated region
    $region22: #{tpu_custom_call.1} parent=1 // pred_check
      _
    $region23: #{tpu_custom_call.1} parent=1 // pred_check_branch
      %55 = sbr.rel (0) target = $region25
    $region24: #{tpu_custom_call.1} parent=1 // pred_region
      _
    $region25: #{tpu_custom_call.1} parent=1 // pred_fallthru
      _
    // Predicated region
    $region26: #{tpu_custom_call.1} parent=1 // pred_check
      _
    $region27: #{tpu_custom_call.1} parent=1 // pred_check_branch
      %57 = sbr.rel (0) target = $region29
    $region28: #{tpu_custom_call.1} parent=1 // pred_region
      %58 = dma.done [#allocation4], 512
    $region29: #{tpu_custom_call.1} parent=1 // pred_fallthru
      _
    // Predicated region
    $region30: #{tpu_custom_call.1} parent=1 // pred_check
      _
    $region31: #{tpu_custom_call.1} parent=1 // pred_check_branch
      %60 = sbr.rel (0) target = $region33
    $region32: #{tpu_custom_call.1} parent=1 // pred_region
      %61 = dma.done [#allocation7], 4096
    $region33: #{tpu_custom_call.1} parent=1 // pred_fallthru
      _
    // Predicated region
    $region34: #{tpu_custom_call.1} parent=1 // pred_check
      _
    $region35: #{tpu_custom_call.1} parent=1 // pred_check_branch
      %63 = sbr.rel (0) target = $region37
    $region36: #{tpu_custom_call.1} parent=1 // pred_region
      %64 = dma.done [#allocation7], 2048
    $region37: #{tpu_custom_call.1} parent=1 // pred_fallthru
      _
    %v65 = vld [vmem:[#allocation3] sm:$0xf]
    %v66 = vld [vmem:[#allocation3 + $0x4] sm:$0xf]
    %v67 = vld [vmem:[#allocation3 + $0x8] sm:$0xf]
    %v68 = vld [vmem:[#allocation3 + $0xc] sm:$0xf]
    %v69 = vld [vmem:[#allocation3 + $0x10] sm:$0xf]
    %v70 = vld [vmem:[#allocation3 + $0x14] sm:$0xf]
    %v71 = vld [vmem:[#allocation3 + $0x18] sm:$0xf]
    %v72 = vld [vmem:[#allocation3 + $0x1c] sm:$0xf]
    %v73 = vld [vmem:[#allocation6] sm:$0xff]
    %v74 = vld [vmem:[#allocation6 + $0x8] sm:$0xff]
    %v75 = vld [vmem:[#allocation6 + $0x10] sm:$0xff]
    %v76 = vld [vmem:[#allocation6 + $0x18] sm:$0xff]
    %v77 = vld [vmem:[#allocation6 + $0x20] sm:$0xff]
    %v78 = vld [vmem:[#allocation6 + $0x28] sm:$0xff]
    %v79 = vld [vmem:[#allocation6 + $0x30] sm:$0xff]
    %v80 = vld [vmem:[#allocation6 + $0x38] sm:$0xff]
    %v81 = vld [vmem:[#allocation6 + $0x40] sm:$0xff]
    %v82 = vld [vmem:[#allocation6 + $0x48] sm:$0xff]
    %v83 = vld [vmem:[#allocation6 + $0x50] sm:$0xff]
    %v84 = vld [vmem:[#allocation6 + $0x58] sm:$0xff]
    %v85 = vld [vmem:[#allocation6 + $0x60] sm:$0xff]
    %v86 = vld [vmem:[#allocation6 + $0x68] sm:$0xff]
    %v87 = vld [vmem:[#allocation6 + $0x70] sm:$0xff]
    %v88 = vld [vmem:[#allocation6 + $0x78] sm:$0xff]
    %v89 = vld [vmem:[#allocation6 + $0x80] sm:$0xff]
    %v90 = vld [vmem:[#allocation6 + $0x88] sm:$0xff]
    %v91 = vld [vmem:[#allocation6 + $0x90] sm:$0xff]
    %v92 = vld [vmem:[#allocation6 + $0x98] sm:$0xff]
    %v93 = vld [vmem:[#allocation6 + $0xa0] sm:$0xff]
    %v94 = vld [vmem:[#allocation6 + $0xa8] sm:$0xff]
    %v95 = vld [vmem:[#allocation6 + $0xb0] sm:$0xff]
    %v96 = vld [vmem:[#allocation6 + $0xb8] sm:$0xff]
    %v97 = vld [vmem:[#allocation6 + $0xc0] sm:$0xff]
    %v98 = vld [vmem:[#allocation6 + $0xc8] sm:$0xff]
    %v99 = vld [vmem:[#allocation6 + $0xd0] sm:$0xff]
    %v100 = vld [vmem:[#allocation6 + $0xd8] sm:$0xff]
    %v101 = vld [vmem:[#allocation6 + $0xe0] sm:$0xff]
    %v102 = vld [vmem:[#allocation6 + $0xe8] sm:$0xff]
    %v103 = vld [vmem:[#allocation6 + $0xf0] sm:$0xff]
    %v104 = vld [vmem:[#allocation6 + $0xf8] sm:$0xff]
    %v105 = vld [vmem:[%s2] sm:$0x3]
    %v107 = vlaneseq
    %v108 = vshrl.u32 %v107, 7
    %v109 = vsub.s32 0, %v108
    %v110 = vrot.slane %v105, %v109
    %v111 = vlaneseq
    %v112 = vshrl.u32 %v111, 7
    %v113 = vsub.s32 1, %v112
    %v114 = vrot.slane %v105, %v113
    %v125 = vcombine.low %v65, %v66
    %v126 = vcombine.low %v67, %v68
    %v127 = vcombine.low %v69, %v70
    %v128 = vcombine.low %v71, %v72
    %133 = vmatprep.subr.mxu0 %v104
    %134 = vmatpush1.msra.mxu0 %v103
    %135 = vmatprep.subr.mxu0 %v102
    %136 = vmatpush1.msra.mxu0 %v101
    %137 = vmatprep.subr.mxu0 %v100
    %138 = vmatpush1.msra.mxu0 %v99
    %139 = vmatprep.subr.mxu0 %v98
    %140 = vmatpush1.msra.mxu0 %v97
    %141 = vmatprep.subr.mxu0 %v96
    %142 = vmatpush1.msra.mxu0 %v95
    %143 = vmatprep.subr.mxu0 %v94
    %144 = vmatpush1.msra.mxu0 %v93
    %145 = vmatprep.subr.mxu0 %v92
    %146 = vmatpush1.msra.mxu0 %v91
    %147 = vmatprep.subr.mxu0 %v90
    %148 = vmatpush1.msra.mxu0 %v89
    %149 = vmatprep.subr.mxu0 %v88
    %150 = vmatpush1.msra.mxu0 %v87
    %151 = vmatprep.subr.mxu0 %v86
    %152 = vmatpush1.msra.mxu0 %v85
    %153 = vmatprep.subr.mxu0 %v84
    %154 = vmatpush1.msra.mxu0 %v83
    %155 = vmatprep.subr.mxu0 %v82
    %156 = vmatpush1.msra.mxu0 %v81
    %157 = vmatprep.subr.mxu0 %v80
    %158 = vmatpush1.msra.mxu0 %v79
    %159 = vmatprep.subr.mxu0 %v78
    %160 = vmatpush1.msra.mxu0 %v77
    %161 = vmatprep.subr.mxu0 %v76
    %162 = vmatpush1.msra.mxu0 %v75
    %163 = vmatprep.subr.mxu0 %v74
    %164 = vmatpush1.msra.mxu0 %v73
    %165 = vmatprep.subr.mxu0 0.0
    %166 = vmatpush2.msra.mxu0 0.0
    %167 = vmatprep.subr.mxu0 0.0
    %168 = vmatpush2.msra.mxu0 0.0
    %169 = vmatprep.subr.mxu0 0.0
    %170 = vmatpush2.msra.mxu0 0.0
    %171 = vmatprep.subr.mxu0 0.0
    %172 = vmatpush2.msra.mxu0 0.0
    %173 = vmatprep.subr.mxu0 0.0
    %174 = vmatpush2.msra.mxu0 0.0
    %175 = vmatprep.subr.mxu0 0.0
    %176 = vmatpush2.msra.mxu0 0.0
    %177 = vmatprep.subr.mxu0 0.0
    %178 = vmatpush2.msra.mxu0 0.0
    %179 = vmatprep.subr.mxu0 0.0
    %180 = vmatpush2.msra.mxu0 0.0
    %181 = vmatprep.subr.mxu0 0.0
    %182 = vmatpush2.msra.mxu0 0.0
    %183 = vmatprep.subr.mxu0 0.0
    %184 = vmatpush2.msra.mxu0 0.0
    %185 = vmatprep.subr.mxu0 0.0
    %186 = vmatpush2.msra.mxu0 0.0
    %187 = vmatprep.subr.mxu0 0.0
    %188 = vmatpush2.msra.mxu0 0.0
    %189 = vmatprep.subr.mxu0 0.0
    %190 = vmatpush2.msra.mxu0 0.0
    %191 = vmatprep.subr.mxu0 0.0
    %192 = vmatpush2.msra.mxu0 0.0
    %193 = vmatprep.subr.mxu0 0.0
    %194 = vmatpush2.msra.mxu0 0.0
    %195 = vmatprep.subr.mxu0 0.0
    %196 = vmatpush2.msra.mxu0 0.0
    %197 = vmatprep.mubr.f32.mxu0 0.0
    %198 = vmatmul.mubr.f32.gmra.mxu0 %v125
    %v199 = vpop.f32.mrf.mxu0
    %v200 = vadd.f32 %v110, %v199
    %v201 = vpop.f32.mrf.mxu0
    %v202 = vadd.f32 %v114, %v201
    %203 = vmatprep.mubr.f32.mxu0 0.0
    %204 = vmatmul.mubr.f32.gmra.mxu0 %v126
    %v205 = vpop.f32.mrf.mxu0
    %v206 = vadd.f32 %v110, %v205
    %v207 = vpop.f32.mrf.mxu0
    %v208 = vadd.f32 %v114, %v207
    %209 = vmatprep.mubr.f32.mxu0 0.0
    %210 = vmatmul.mubr.f32.gmra.mxu0 %v127
    %v211 = vpop.f32.mrf.mxu0
    %v212 = vadd.f32 %v110, %v211
    %v213 = vpop.f32.mrf.mxu0
    %v214 = vadd.f32 %v114, %v213
    %215 = vmatprep.mubr.f32.mxu0 0.0
    %216 = vmatmul.mubr.f32.gmra.mxu0 %v128
    %v217 = vpop.f32.mrf.mxu0
    %v218 = vadd.f32 %v110, %v217
    %v219 = vpop.f32.mrf.mxu0
    %v220 = vadd.f32 %v114, %v219
    %221 = vdwg.mxu0
    %v230 = vcombine.low %v200, %v202
    %v231 = vcombine.high %v200, %v202
    %v232 = vcombine.low %v206, %v208
    %v233 = vcombine.high %v206, %v208
    %v234 = vcombine.low %v212, %v214
    %v235 = vcombine.high %v212, %v214
    %v236 = vcombine.low %v218, %v220
    %v237 = vcombine.high %v218, %v220
    %v238 = vld [vmem:[%s3] sm:$0x1]
    %vm239 = vcmask 261120
    %v241 = vsel %vm239, %v238, 0
    %v243 = vsel %vm239, %v230, 0
    %245 = vmatprep.subr.mxu0 0.0
    %246 = vmatpush1.xpose.msra.mxu0 0.0
    %247 = vmatprep.subr.mxu0 0.0
    %248 = vmatpush1.xpose.msra.mxu0 0.0
    %249 = vmatprep.subr.mxu0 0.0
    %250 = vmatpush1.xpose.msra.mxu0 0.0
    %251 = vmatprep.subr.mxu0 0.0
    %252 = vmatpush1.xpose.msra.mxu0 0.0
    %253 = vmatprep.subr.mxu0 0.0
    %254 = vmatpush1.xpose.msra.mxu0 0.0
    %255 = vmatprep.subr.mxu0 0.0
    %256 = vmatpush1.xpose.msra.mxu0 0.0
    %257 = vmatprep.subr.mxu0 0.0
    %258 = vmatpush1.xpose.msra.mxu0 0.0
    %259 = vmatprep.subr.mxu0 0.0
    %260 = vmatpush1.xpose.msra.mxu0 0.0
    %261 = vmatprep.subr.mxu0 0.0
    %262 = vmatpush1.xpose.msra.mxu0 0.0
    %263 = vmatprep.subr.mxu0 0.0
    %264 = vmatpush1.xpose.msra.mxu0 0.0
    %265 = vmatprep.subr.mxu0 0.0
    %266 = vmatpush1.xpose.msra.mxu0 0.0
    %267 = vmatprep.subr.mxu0 0.0
    %268 = vmatpush1.xpose.msra.mxu0 0.0
    %269 = vmatprep.subr.mxu0 0.0
    %270 = vmatpush1.xpose.msra.mxu0 0.0
    %271 = vmatprep.subr.mxu0 0.0
    %272 = vmatpush1.xpose.msra.mxu0 0.0
    %273 = vmatprep.subr.mxu0 0.0
    %274 = vmatpush1.xpose.msra.mxu0 0.0
    %275 = vmatprep.subr.mxu0 0.0
    %276 = vmatpush1.xpose.msra.mxu0 %v243
    %277 = vmatprep.subr.mxu0 0.0
    %278 = vmatpush2.xpose.msra.mxu0 0.0
    %279 = vmatprep.subr.mxu0 0.0
    %280 = vmatpush2.xpose.msra.mxu0 0.0
    %281 = vmatprep.subr.mxu0 0.0
    %282 = vmatpush2.xpose.msra.mxu0 0.0
    %283 = vmatprep.subr.mxu0 0.0
    %284 = vmatpush2.xpose.msra.mxu0 0.0
    %285 = vmatprep.subr.mxu0 0.0
    %286 = vmatpush2.xpose.msra.mxu0 0.0
    %287 = vmatprep.subr.mxu0 0.0
    %288 = vmatpush2.xpose.msra.mxu0 0.0
    %289 = vmatprep.subr.mxu0 0.0
    %290 = vmatpush2.xpose.msra.mxu0 0.0
    %291 = vmatprep.subr.mxu0 0.0
    %292 = vmatpush2.xpose.msra.mxu0 0.0
    %293 = vmatprep.subr.mxu0 0.0
    %294 = vmatpush2.xpose.msra.mxu0 0.0
    %295 = vmatprep.subr.mxu0 0.0
    %296 = vmatpush2.xpose.msra.mxu0 0.0
    %297 = vmatprep.subr.mxu0 0.0
    %298 = vmatpush2.xpose.msra.mxu0 0.0
    %299 = vmatprep.subr.mxu0 0.0
    %300 = vmatpush2.xpose.msra.mxu0 0.0
    %301 = vmatprep.subr.mxu0 0.0
    %302 = vmatpush2.xpose.msra.mxu0 0.0
    %303 = vmatprep.subr.mxu0 0.0
    %304 = vmatpush2.xpose.msra.mxu0 0.0
    %305 = vmatprep.subr.mxu0 0.0
    %306 = vmatpush2.xpose.msra.mxu0 0.0
    %307 = vmatprep.subr.mxu0 0.0
    %308 = vmatpush2.xpose.msra.mxu0 0.0
    %309 = vmatprep.mubr.f32.mxu0 0.0
    %310 = vmatmul.mubr.f32.gmra.mxu0 %v241
    %v311 = vpop.f32.mrf.mxu0
    %v312 = vadd.f32 0.0, %v311
    %v313 = vpop.f32.mrf.mxu0
    %314 = vdwg.mxu0
    %v315 = vsel %vm239, %v231, 0
    %317 = vmatprep.subr.mxu0 0.0
    %318 = vmatpush1.xpose.msra.mxu0 0.0
    %319 = vmatprep.subr.mxu0 0.0
    %320 = vmatpush1.xpose.msra.mxu0 0.0
    %321 = vmatprep.subr.mxu0 0.0
    %322 = vmatpush1.xpose.msra.mxu0 0.0
    %323 = vmatprep.subr.mxu0 0.0
    %324 = vmatpush1.xpose.msra.mxu0 0.0
    %325 = vmatprep.subr.mxu0 0.0
    %326 = vmatpush1.xpose.msra.mxu0 0.0
    %327 = vmatprep.subr.mxu0 0.0
    %328 = vmatpush1.xpose.msra.mxu0 0.0
    %329 = vmatprep.subr.mxu0 0.0
    %330 = vmatpush1.xpose.msra.mxu0 0.0
    %331 = vmatprep.subr.mxu0 0.0
    %332 = vmatpush1.xpose.msra.mxu0 0.0
    %333 = vmatprep.subr.mxu0 0.0
    %334 = vmatpush1.xpose.msra.mxu0 0.0
    %335 = vmatprep.subr.mxu0 0.0
    %336 = vmatpush1.xpose.msra.mxu0 0.0
    %337 = vmatprep.subr.mxu0 0.0
    %338 = vmatpush1.xpose.msra.mxu0 0.0
    %339 = vmatprep.subr.mxu0 0.0
    %340 = vmatpush1.xpose.msra.mxu0 0.0
    %341 = vmatprep.subr.mxu0 0.0
    %342 = vmatpush1.xpose.msra.mxu0 0.0
    %343 = vmatprep.subr.mxu0 0.0
    %344 = vmatpush1.xpose.msra.mxu0 0.0
    %345 = vmatprep.subr.mxu0 0.0
    %346 = vmatpush1.xpose.msra.mxu0 0.0
    %347 = vmatprep.subr.mxu0 0.0
    %348 = vmatpush1.xpose.msra.mxu0 %v315
    %349 = vmatprep.subr.mxu0 0.0
    %350 = vmatpush2.xpose.msra.mxu0 0.0
    %351 = vmatprep.subr.mxu0 0.0
    %352 = vmatpush2.xpose.msra.mxu0 0.0
    %353 = vmatprep.subr.mxu0 0.0
    %354 = vmatpush2.xpose.msra.mxu0 0.0
    %355 = vmatprep.subr.mxu0 0.0
    %356 = vmatpush2.xpose.msra.mxu0 0.0
    %357 = vmatprep.subr.mxu0 0.0
    %358 = vmatpush2.xpose.msra.mxu0 0.0
    %359 = vmatprep.subr.mxu0 0.0
    %360 = vmatpush2.xpose.msra.mxu0 0.0
    %361 = vmatprep.subr.mxu0 0.0
    %362 = vmatpush2.xpose.msra.mxu0 0.0
    %363 = vmatprep.subr.mxu0 0.0
    %364 = vmatpush2.xpose.msra.mxu0 0.0
    %365 = vmatprep.subr.mxu0 0.0
    %366 = vmatpush2.xpose.msra.mxu0 0.0
    %367 = vmatprep.subr.mxu0 0.0
    %368 = vmatpush2.xpose.msra.mxu0 0.0
    %369 = vmatprep.subr.mxu0 0.0
    %370 = vmatpush2.xpose.msra.mxu0 0.0
    %371 = vmatprep.subr.mxu0 0.0
    %372 = vmatpush2.xpose.msra.mxu0 0.0
    %373 = vmatprep.subr.mxu0 0.0
    %374 = vmatpush2.xpose.msra.mxu0 0.0
    %375 = vmatprep.subr.mxu0 0.0
    %376 = vmatpush2.xpose.msra.mxu0 0.0
    %377 = vmatprep.subr.mxu0 0.0
    %378 = vmatpush2.xpose.msra.mxu0 0.0
    %379 = vmatprep.subr.mxu0 0.0
    %380 = vmatpush2.xpose.msra.mxu0 0.0
    %381 = vmatprep.mubr.f32.mxu0 0.0
    %382 = vmatmul.mubr.f32.gmra.mxu0 %v241
    %v383 = vpop.f32.mrf.mxu0
    %v384 = vadd.f32 0.0, %v383
    %v385 = vpop.f32.mrf.mxu0
    %386 = vdwg.mxu0
    %v387 = vsel %vm239, %v232, 0
    %389 = vmatprep.subr.mxu0 0.0
    %390 = vmatpush1.xpose.msra.mxu0 0.0
    %391 = vmatprep.subr.mxu0 0.0
    %392 = vmatpush1.xpose.msra.mxu0 0.0
    %393 = vmatprep.subr.mxu0 0.0
    %394 = vmatpush1.xpose.msra.mxu0 0.0
    %395 = vmatprep.subr.mxu0 0.0
    %396 = vmatpush1.xpose.msra.mxu0 0.0
    %397 = vmatprep.subr.mxu0 0.0
    %398 = vmatpush1.xpose.msra.mxu0 0.0
    %399 = vmatprep.subr.mxu0 0.0
    %400 = vmatpush1.xpose.msra.mxu0 0.0
    %401 = vmatprep.subr.mxu0 0.0
    %402 = vmatpush1.xpose.msra.mxu0 0.0
    %403 = vmatprep.subr.mxu0 0.0
    %404 = vmatpush1.xpose.msra.mxu0 0.0
    %405 = vmatprep.subr.mxu0 0.0
    %406 = vmatpush1.xpose.msra.mxu0 0.0
    %407 = vmatprep.subr.mxu0 0.0
    %408 = vmatpush1.xpose.msra.mxu0 0.0
    %409 = vmatprep.subr.mxu0 0.0
    %410 = vmatpush1.xpose.msra.mxu0 0.0
    %411 = vmatprep.subr.mxu0 0.0
    %412 = vmatpush1.xpose.msra.mxu0 0.0
    %413 = vmatprep.subr.mxu0 0.0
    %414 = vmatpush1.xpose.msra.mxu0 0.0
    %415 = vmatprep.subr.mxu0 0.0
    %416 = vmatpush1.xpose.msra.mxu0 0.0
    %417 = vmatprep.subr.mxu0 0.0
    %418 = vmatpush1.xpose.msra.mxu0 0.0
    %419 = vmatprep.subr.mxu0 0.0
    %420 = vmatpush1.xpose.msra.mxu0 %v387
    %421 = vmatprep.subr.mxu0 0.0
    %422 = vmatpush2.xpose.msra.mxu0 0.0
    %423 = vmatprep.subr.mxu0 0.0
    %424 = vmatpush2.xpose.msra.mxu0 0.0
    %425 = vmatprep.subr.mxu0 0.0
    %426 = vmatpush2.xpose.msra.mxu0 0.0
    %427 = vmatprep.subr.mxu0 0.0
    %428 = vmatpush2.xpose.msra.mxu0 0.0
    %429 = vmatprep.subr.mxu0 0.0
    %430 = vmatpush2.xpose.msra.mxu0 0.0
    %431 = vmatprep.subr.mxu0 0.0
    %432 = vmatpush2.xpose.msra.mxu0 0.0
    %433 = vmatprep.subr.mxu0 0.0
    %434 = vmatpush2.xpose.msra.mxu0 0.0
    %435 = vmatprep.subr.mxu0 0.0
    %436 = vmatpush2.xpose.msra.mxu0 0.0
    %437 = vmatprep.subr.mxu0 0.0
    %438 = vmatpush2.xpose.msra.mxu0 0.0
    %439 = vmatprep.subr.mxu0 0.0
    %440 = vmatpush2.xpose.msra.mxu0 0.0
    %441 = vmatprep.subr.mxu0 0.0
    %442 = vmatpush2.xpose.msra.mxu0 0.0
    %443 = vmatprep.subr.mxu0 0.0
    %444 = vmatpush2.xpose.msra.mxu0 0.0
    %445 = vmatprep.subr.mxu0 0.0
    %446 = vmatpush2.xpose.msra.mxu0 0.0
    %447 = vmatprep.subr.mxu0 0.0
    %448 = vmatpush2.xpose.msra.mxu0 0.0
    %449 = vmatprep.subr.mxu0 0.0
    %450 = vmatpush2.xpose.msra.mxu0 0.0
    %451 = vmatprep.subr.mxu0 0.0
    %452 = vmatpush2.xpose.msra.mxu0 0.0
    %453 = vmatprep.mubr.f32.mxu0 0.0
    %454 = vmatmul.mubr.f32.gmra.mxu0 %v241
    %v455 = vpop.f32.mrf.mxu0
    %v456 = vadd.f32 0.0, %v455
    %v457 = vpop.f32.mrf.mxu0
    %458 = vdwg.mxu0
    %v459 = vsel %vm239, %v233, 0
    %461 = vmatprep.subr.mxu0 0.0
    %462 = vmatpush1.xpose.msra.mxu0 0.0
    %463 = vmatprep.subr.mxu0 0.0
    %464 = vmatpush1.xpose.msra.mxu0 0.0
    %465 = vmatprep.subr.mxu0 0.0
    %466 = vmatpush1.xpose.msra.mxu0 0.0
    %467 = vmatprep.subr.mxu0 0.0
    %468 = vmatpush1.xpose.msra.mxu0 0.0
    %469 = vmatprep.subr.mxu0 0.0
    %470 = vmatpush1.xpose.msra.mxu0 0.0
    %471 = vmatprep.subr.mxu0 0.0
    %472 = vmatpush1.xpose.msra.mxu0 0.0
    %473 = vmatprep.subr.mxu0 0.0
    %474 = vmatpush1.xpose.msra.mxu0 0.0
    %475 = vmatprep.subr.mxu0 0.0
    %476 = vmatpush1.xpose.msra.mxu0 0.0
    %477 = vmatprep.subr.mxu0 0.0
    %478 = vmatpush1.xpose.msra.mxu0 0.0
    %479 = vmatprep.subr.mxu0 0.0
    %480 = vmatpush1.xpose.msra.mxu0 0.0
    %481 = vmatprep.subr.mxu0 0.0
    %482 = vmatpush1.xpose.msra.mxu0 0.0
    %483 = vmatprep.subr.mxu0 0.0
    %484 = vmatpush1.xpose.msra.mxu0 0.0
    %485 = vmatprep.subr.mxu0 0.0
    %486 = vmatpush1.xpose.msra.mxu0 0.0
    %487 = vmatprep.subr.mxu0 0.0
    %488 = vmatpush1.xpose.msra.mxu0 0.0
    %489 = vmatprep.subr.mxu0 0.0
    %490 = vmatpush1.xpose.msra.mxu0 0.0
    %491 = vmatprep.subr.mxu0 0.0
    %492 = vmatpush1.xpose.msra.mxu0 %v459
    %493 = vmatprep.subr.mxu0 0.0
    %494 = vmatpush2.xpose.msra.mxu0 0.0
    %495 = vmatprep.subr.mxu0 0.0
    %496 = vmatpush2.xpose.msra.mxu0 0.0
    %497 = vmatprep.subr.mxu0 0.0
    %498 = vmatpush2.xpose.msra.mxu0 0.0
    %499 = vmatprep.subr.mxu0 0.0
    %500 = vmatpush2.xpose.msra.mxu0 0.0
    %501 = vmatprep.subr.mxu0 0.0
    %502 = vmatpush2.xpose.msra.mxu0 0.0
    %503 = vmatprep.subr.mxu0 0.0
    %504 = vmatpush2.xpose.msra.mxu0 0.0
    %505 = vmatprep.subr.mxu0 0.0
    %506 = vmatpush2.xpose.msra.mxu0 0.0
    %507 = vmatprep.subr.mxu0 0.0
    %508 = vmatpush2.xpose.msra.mxu0 0.0
    %509 = vmatprep.subr.mxu0 0.0
    %510 = vmatpush2.xpose.msra.mxu0 0.0
    %511 = vmatprep.subr.mxu0 0.0
    %512 = vmatpush2.xpose.msra.mxu0 0.0
    %513 = vmatprep.subr.mxu0 0.0
    %514 = vmatpush2.xpose.msra.mxu0 0.0
    %515 = vmatprep.subr.mxu0 0.0
    %516 = vmatpush2.xpose.msra.mxu0 0.0
    %517 = vmatprep.subr.mxu0 0.0
    %518 = vmatpush2.xpose.msra.mxu0 0.0
    %519 = vmatprep.subr.mxu0 0.0
    %520 = vmatpush2.xpose.msra.mxu0 0.0
    %521 = vmatprep.subr.mxu0 0.0
    %522 = vmatpush2.xpose.msra.mxu0 0.0
    %523 = vmatprep.subr.mxu0 0.0
    %524 = vmatpush2.xpose.msra.mxu0 0.0
    %525 = vmatprep.mubr.f32.mxu0 0.0
    %526 = vmatmul.mubr.f32.gmra.mxu0 %v241
    %v527 = vpop.f32.mrf.mxu0
    %v528 = vadd.f32 0.0, %v527
    %v529 = vpop.f32.mrf.mxu0
    %530 = vdwg.mxu0
    %v531 = vsel %vm239, %v234, 0
    %533 = vmatprep.subr.mxu0 0.0
    %534 = vmatpush1.xpose.msra.mxu0 0.0
    %535 = vmatprep.subr.mxu0 0.0
    %536 = vmatpush1.xpose.msra.mxu0 0.0
    %537 = vmatprep.subr.mxu0 0.0
    %538 = vmatpush1.xpose.msra.mxu0 0.0
    %539 = vmatprep.subr.mxu0 0.0
    %540 = vmatpush1.xpose.msra.mxu0 0.0
    %541 = vmatprep.subr.mxu0 0.0
    %542 = vmatpush1.xpose.msra.mxu0 0.0
    %543 = vmatprep.subr.mxu0 0.0
    %544 = vmatpush1.xpose.msra.mxu0 0.0
    %545 = vmatprep.subr.mxu0 0.0
    %546 = vmatpush1.xpose.msra.mxu0 0.0
    %547 = vmatprep.subr.mxu0 0.0
    %548 = vmatpush1.xpose.msra.mxu0 0.0
    %549 = vmatprep.subr.mxu0 0.0
    %550 = vmatpush1.xpose.msra.mxu0 0.0
    %551 = vmatprep.subr.mxu0 0.0
    %552 = vmatpush1.xpose.msra.mxu0 0.0
    %553 = vmatprep.subr.mxu0 0.0
    %554 = vmatpush1.xpose.msra.mxu0 0.0
    %555 = vmatprep.subr.mxu0 0.0
    %556 = vmatpush1.xpose.msra.mxu0 0.0
    %557 = vmatprep.subr.mxu0 0.0
    %558 = vmatpush1.xpose.msra.mxu0 0.0
    %559 = vmatprep.subr.mxu0 0.0
    %560 = vmatpush1.xpose.msra.mxu0 0.0
    %561 = vmatprep.subr.mxu0 0.0
    %562 = vmatpush1.xpose.msra.mxu0 0.0
    %563 = vmatprep.subr.mxu0 0.0
    %564 = vmatpush1.xpose.msra.mxu0 %v531
    %565 = vmatprep.subr.mxu0 0.0
    %566 = vmatpush2.xpose.msra.mxu0 0.0
    %567 = vmatprep.subr.mxu0 0.0
    %568 = vmatpush2.xpose.msra.mxu0 0.0
    %569 = vmatprep.subr.mxu0 0.0
    %570 = vmatpush2.xpose.msra.mxu0 0.0
    %571 = vmatprep.subr.mxu0 0.0
    %572 = vmatpush2.xpose.msra.mxu0 0.0
    %573 = vmatprep.subr.mxu0 0.0
    %574 = vmatpush2.xpose.msra.mxu0 0.0
    %575 = vmatprep.subr.mxu0 0.0
    %576 = vmatpush2.xpose.msra.mxu0 0.0
    %577 = vmatprep.subr.mxu0 0.0
    %578 = vmatpush2.xpose.msra.mxu0 0.0
    %579 = vmatprep.subr.mxu0 0.0
    %580 = vmatpush2.xpose.msra.mxu0 0.0
    %581 = vmatprep.subr.mxu0 0.0
    %582 = vmatpush2.xpose.msra.mxu0 0.0
    %583 = vmatprep.subr.mxu0 0.0
    %584 = vmatpush2.xpose.msra.mxu0 0.0
    %585 = vmatprep.subr.mxu0 0.0
    %586 = vmatpush2.xpose.msra.mxu0 0.0
    %587 = vmatprep.subr.mxu0 0.0
    %588 = vmatpush2.xpose.msra.mxu0 0.0
    %589 = vmatprep.subr.mxu0 0.0
    %590 = vmatpush2.xpose.msra.mxu0 0.0
    %591 = vmatprep.subr.mxu0 0.0
    %592 = vmatpush2.xpose.msra.mxu0 0.0
    %593 = vmatprep.subr.mxu0 0.0
    %594 = vmatpush2.xpose.msra.mxu0 0.0
    %595 = vmatprep.subr.mxu0 0.0
    %596 = vmatpush2.xpose.msra.mxu0 0.0
    %597 = vmatprep.mubr.f32.mxu0 0.0
    %598 = vmatmul.mubr.f32.gmra.mxu0 %v241
    %v599 = vpop.f32.mrf.mxu0
    %v600 = vadd.f32 0.0, %v599
    %v601 = vpop.f32.mrf.mxu0
    %602 = vdwg.mxu0
    %v603 = vsel %vm239, %v235, 0
    %605 = vmatprep.subr.mxu0 0.0
    %606 = vmatpush1.xpose.msra.mxu0 0.0
    %607 = vmatprep.subr.mxu0 0.0
    %608 = vmatpush1.xpose.msra.mxu0 0.0
    %609 = vmatprep.subr.mxu0 0.0
    %610 = vmatpush1.xpose.msra.mxu0 0.0
    %611 = vmatprep.subr.mxu0 0.0
    %612 = vmatpush1.xpose.msra.mxu0 0.0
    %613 = vmatprep.subr.mxu0 0.0
    %614 = vmatpush1.xpose.msra.mxu0 0.0
    %615 = vmatprep.subr.mxu0 0.0
    %616 = vmatpush1.xpose.msra.mxu0 0.0
    %617 = vmatprep.subr.mxu0 0.0
    %618 = vmatpush1.xpose.msra.mxu0 0.0
    %619 = vmatprep.subr.mxu0 0.0
    %620 = vmatpush1.xpose.msra.mxu0 0.0
    %621 = vmatprep.subr.mxu0 0.0
    %622 = vmatpush1.xpose.msra.mxu0 0.0
    %623 = vmatprep.subr.mxu0 0.0
    %624 = vmatpush1.xpose.msra.mxu0 0.0
    %625 = vmatprep.subr.mxu0 0.0
    %626 = vmatpush1.xpose.msra.mxu0 0.0
    %627 = vmatprep.subr.mxu0 0.0
    %628 = vmatpush1.xpose.msra.mxu0 0.0
    %629 = vmatprep.subr.mxu0 0.0
    %630 = vmatpush1.xpose.msra.mxu0 0.0
    %631 = vmatprep.subr.mxu0 0.0
    %632 = vmatpush1.xpose.msra.mxu0 0.0
    %633 = vmatprep.subr.mxu0 0.0
    %634 = vmatpush1.xpose.msra.mxu0 0.0
    %635 = vmatprep.subr.mxu0 0.0
    %636 = vmatpush1.xpose.msra.mxu0 %v603
    %637 = vmatprep.subr.mxu0 0.0
    %638 = vmatpush2.xpose.msra.mxu0 0.0
    %639 = vmatprep.subr.mxu0 0.0
    %640 = vmatpush2.xpose.msra.mxu0 0.0
    %641 = vmatprep.subr.mxu0 0.0
    %642 = vmatpush2.xpose.msra.mxu0 0.0
    %643 = vmatprep.subr.mxu0 0.0
    %644 = vmatpush2.xpose.msra.mxu0 0.0
    %645 = vmatprep.subr.mxu0 0.0
    %646 = vmatpush2.xpose.msra.mxu0 0.0
    %647 = vmatprep.subr.mxu0 0.0
    %648 = vmatpush2.xpose.msra.mxu0 0.0
    %649 = vmatprep.subr.mxu0 0.0
    %650 = vmatpush2.xpose.msra.mxu0 0.0
    %651 = vmatprep.subr.mxu0 0.0
    %652 = vmatpush2.xpose.msra.mxu0 0.0
    %653 = vmatprep.subr.mxu0 0.0
    %654 = vmatpush2.xpose.msra.mxu0 0.0
    %655 = vmatprep.subr.mxu0 0.0
    %656 = vmatpush2.xpose.msra.mxu0 0.0
    %657 = vmatprep.subr.mxu0 0.0
    %658 = vmatpush2.xpose.msra.mxu0 0.0
    %659 = vmatprep.subr.mxu0 0.0
    %660 = vmatpush2.xpose.msra.mxu0 0.0
    %661 = vmatprep.subr.mxu0 0.0
    %662 = vmatpush2.xpose.msra.mxu0 0.0
    %663 = vmatprep.subr.mxu0 0.0
    %664 = vmatpush2.xpose.msra.mxu0 0.0
    %665 = vmatprep.subr.mxu0 0.0
    %666 = vmatpush2.xpose.msra.mxu0 0.0
    %667 = vmatprep.subr.mxu0 0.0
    %668 = vmatpush2.xpose.msra.mxu0 0.0
    %669 = vmatprep.mubr.f32.mxu0 0.0
    %670 = vmatmul.mubr.f32.gmra.mxu0 %v241
    %v671 = vpop.f32.mrf.mxu0
    %v672 = vadd.f32 0.0, %v671
    %v673 = vpop.f32.mrf.mxu0
    %674 = vdwg.mxu0
    %v675 = vsel %vm239, %v236, 0
    %677 = vmatprep.subr.mxu0 0.0
    %678 = vmatpush1.xpose.msra.mxu0 0.0
    %679 = vmatprep.subr.mxu0 0.0
    %680 = vmatpush1.xpose.msra.mxu0 0.0
    %681 = vmatprep.subr.mxu0 0.0
    %682 = vmatpush1.xpose.msra.mxu0 0.0
    %683 = vmatprep.subr.mxu0 0.0
    %684 = vmatpush1.xpose.msra.mxu0 0.0
    %685 = vmatprep.subr.mxu0 0.0
    %686 = vmatpush1.xpose.msra.mxu0 0.0
    %687 = vmatprep.subr.mxu0 0.0
    %688 = vmatpush1.xpose.msra.mxu0 0.0
    %689 = vmatprep.subr.mxu0 0.0
    %690 = vmatpush1.xpose.msra.mxu0 0.0
    %691 = vmatprep.subr.mxu0 0.0
    %692 = vmatpush1.xpose.msra.mxu0 0.0
    %693 = vmatprep.subr.mxu0 0.0
    %694 = vmatpush1.xpose.msra.mxu0 0.0
    %695 = vmatprep.subr.mxu0 0.0
    %696 = vmatpush1.xpose.msra.mxu0 0.0
    %697 = vmatprep.subr.mxu0 0.0
    %698 = vmatpush1.xpose.msra.mxu0 0.0
    %699 = vmatprep.subr.mxu0 0.0
    %700 = vmatpush1.xpose.msra.mxu0 0.0
    %701 = vmatprep.subr.mxu0 0.0
    %702 = vmatpush1.xpose.msra.mxu0 0.0
    %703 = vmatprep.subr.mxu0 0.0
    %704 = vmatpush1.xpose.msra.mxu0 0.0
    %705 = vmatprep.subr.mxu0 0.0
    %706 = vmatpush1.xpose.msra.mxu0 0.0
    %707 = vmatprep.subr.mxu0 0.0
    %708 = vmatpush1.xpose.msra.mxu0 %v675
    %709 = vmatprep.subr.mxu0 0.0
    %710 = vmatpush2.xpose.msra.mxu0 0.0
    %711 = vmatprep.subr.mxu0 0.0
    %712 = vmatpush2.xpose.msra.mxu0 0.0
    %713 = vmatprep.subr.mxu0 0.0
    %714 = vmatpush2.xpose.msra.mxu0 0.0
    %715 = vmatprep.subr.mxu0 0.0
    %716 = vmatpush2.xpose.msra.mxu0 0.0
    %717 = vmatprep.subr.mxu0 0.0
    %718 = vmatpush2.xpose.msra.mxu0 0.0
    %719 = vmatprep.subr.mxu0 0.0
    %720 = vmatpush2.xpose.msra.mxu0 0.0
    %721 = vmatprep.subr.mxu0 0.0
    %722 = vmatpush2.xpose.msra.mxu0 0.0
    %723 = vmatprep.subr.mxu0 0.0
    %724 = vmatpush2.xpose.msra.mxu0 0.0
    %725 = vmatprep.subr.mxu0 0.0
    %726 = vmatpush2.xpose.msra.mxu0 0.0
    %727 = vmatprep.subr.mxu0 0.0
    %728 = vmatpush2.xpose.msra.mxu0 0.0
    %729 = vmatprep.subr.mxu0 0.0
    %730 = vmatpush2.xpose.msra.mxu0 0.0
    %731 = vmatprep.subr.mxu0 0.0
    %732 = vmatpush2.xpose.msra.mxu0 0.0
    %733 = vmatprep.subr.mxu0 0.0
    %734 = vmatpush2.xpose.msra.mxu0 0.0
    %735 = vmatprep.subr.mxu0 0.0
    %736 = vmatpush2.xpose.msra.mxu0 0.0
    %737 = vmatprep.subr.mxu0 0.0
    %738 = vmatpush2.xpose.msra.mxu0 0.0
    %739 = vmatprep.subr.mxu0 0.0
    %740 = vmatpush2.xpose.msra.mxu0 0.0
    %741 = vmatprep.mubr.f32.mxu0 0.0
    %742 = vmatmul.mubr.f32.gmra.mxu0 %v241
    %v743 = vpop.f32.mrf.mxu0
    %v744 = vadd.f32 0.0, %v743
    %v745 = vpop.f32.mrf.mxu0
    %746 = vdwg.mxu0
    %v747 = vsel %vm239, %v237, 0
    %749 = vmatprep.subr.mxu0 0.0
    %750 = vmatpush1.xpose.msra.mxu0 0.0
    %751 = vmatprep.subr.mxu0 0.0
    %752 = vmatpush1.xpose.msra.mxu0 0.0
    %753 = vmatprep.subr.mxu0 0.0
    %754 = vmatpush1.xpose.msra.mxu0 0.0
    %755 = vmatprep.subr.mxu0 0.0
    %756 = vmatpush1.xpose.msra.mxu0 0.0
    %757 = vmatprep.subr.mxu0 0.0
    %758 = vmatpush1.xpose.msra.mxu0 0.0
    %759 = vmatprep.subr.mxu0 0.0
    %760 = vmatpush1.xpose.msra.mxu0 0.0
    %761 = vmatprep.subr.mxu0 0.0
    %762 = vmatpush1.xpose.msra.mxu0 0.0
    %763 = vmatprep.subr.mxu0 0.0
    %764 = vmatpush1.xpose.msra.mxu0 0.0
    %765 = vmatprep.subr.mxu0 0.0
    %766 = vmatpush1.xpose.msra.mxu0 0.0
    %767 = vmatprep.subr.mxu0 0.0
    %768 = vmatpush1.xpose.msra.mxu0 0.0
    %769 = vmatprep.subr.mxu0 0.0
    %770 = vmatpush1.xpose.msra.mxu0 0.0
    %771 = vmatprep.subr.mxu0 0.0
    %772 = vmatpush1.xpose.msra.mxu0 0.0
    %773 = vmatprep.subr.mxu0 0.0
    %774 = vmatpush1.xpose.msra.mxu0 0.0
    %775 = vmatprep.subr.mxu0 0.0
    %776 = vmatpush1.xpose.msra.mxu0 0.0
    %777 = vmatprep.subr.mxu0 0.0
    %778 = vmatpush1.xpose.msra.mxu0 0.0
    %779 = vmatprep.subr.mxu0 0.0
    %780 = vmatpush1.xpose.msra.mxu0 %v747
    %781 = vmatprep.subr.mxu0 0.0
    %782 = vmatpush2.xpose.msra.mxu0 0.0
    %783 = vmatprep.subr.mxu0 0.0
    %784 = vmatpush2.xpose.msra.mxu0 0.0
    %785 = vmatprep.subr.mxu0 0.0
    %786 = vmatpush2.xpose.msra.mxu0 0.0
    %787 = vmatprep.subr.mxu0 0.0
    %788 = vmatpush2.xpose.msra.mxu0 0.0
    %789 = vmatprep.subr.mxu0 0.0
    %790 = vmatpush2.xpose.msra.mxu0 0.0
    %791 = vmatprep.subr.mxu0 0.0
    %792 = vmatpush2.xpose.msra.mxu0 0.0
    %793 = vmatprep.subr.mxu0 0.0
    %794 = vmatpush2.xpose.msra.mxu0 0.0
    %795 = vmatprep.subr.mxu0 0.0
    %796 = vmatpush2.xpose.msra.mxu0 0.0
    %797 = vmatprep.subr.mxu0 0.0
    %798 = vmatpush2.xpose.msra.mxu0 0.0
    %799 = vmatprep.subr.mxu0 0.0
    %800 = vmatpush2.xpose.msra.mxu0 0.0
    %801 = vmatprep.subr.mxu0 0.0
    %802 = vmatpush2.xpose.msra.mxu0 0.0
    %803 = vmatprep.subr.mxu0 0.0
    %804 = vmatpush2.xpose.msra.mxu0 0.0
    %805 = vmatprep.subr.mxu0 0.0
    %806 = vmatpush2.xpose.msra.mxu0 0.0
    %807 = vmatprep.subr.mxu0 0.0
    %808 = vmatpush2.xpose.msra.mxu0 0.0
    %809 = vmatprep.subr.mxu0 0.0
    %810 = vmatpush2.xpose.msra.mxu0 0.0
    %811 = vmatprep.subr.mxu0 0.0
    %812 = vmatpush2.xpose.msra.mxu0 0.0
    %813 = vmatprep.mubr.f32.mxu0 0.0
    %814 = vmatmul.mubr.f32.gmra.mxu0 %v241
    %v815 = vpop.f32.mrf.mxu0
    %v816 = vadd.f32 0.0, %v815
    %v817 = vpop.f32.mrf.mxu0
    %818 = vdwg.mxu0
    %vm819 = vcmask 24576
    %v820 = vsel %vm819, %v312, -inf
    %821 = vmax.xlane.f32.xlu0 %v820
    %v822 = vpop.xlane.xlu0 %821
    %v823 = vsel %vm819, %v384, -inf
    %824 = vmax.xlane.f32.xlu0 %v823
    %v825 = vpop.xlane.xlu0 %824
    %v826 = vsel %vm819, %v456, -inf
    %827 = vmax.xlane.f32.xlu0 %v826
    %v828 = vpop.xlane.xlu0 %827
    %v829 = vsel %vm819, %v528, -inf
    %830 = vmax.xlane.f32.xlu0 %v829
    %v831 = vpop.xlane.xlu0 %830
    %v832 = vsel %vm819, %v600, -inf
    %833 = vmax.xlane.f32.xlu0 %v832
    %v834 = vpop.xlane.xlu0 %833
    %v835 = vsel %vm819, %v672, -inf
    %836 = vmax.xlane.f32.xlu0 %v835
    %v837 = vpop.xlane.xlu0 %836
    %v838 = vsel %vm819, %v744, -inf
    %839 = vmax.xlane.f32.xlu0 %v838
    %v840 = vpop.xlane.xlu0 %839
    %v841 = vsel %vm819, %v816, -inf
    %842 = vmax.xlane.f32.xlu0 %v841
    %v843 = vpop.xlane.xlu0 %842
    %v844 = vsub.f32 %v312, %v822
    %v845 = vsub.f32 %v384, %v825
    %v846 = vsub.f32 %v456, %v828
    %v847 = vsub.f32 %v528, %v831
    %v848 = vsub.f32 %v600, %v834
    %v849 = vsub.f32 %v672, %v837
    %v850 = vsub.f32 %v744, %v840
    %v851 = vsub.f32 %v816, %v843
    %v852 = vmul.f32 %v844, 1.442695
    %v853 = vpow.pop %v852
    %v854 = vmul.f32 %v845, 1.442695
    %v855 = vpow.pop %v854
    %v856 = vmul.f32 %v846, 1.442695
    %v857 = vpow.pop %v856
    %v858 = vmul.f32 %v847, 1.442695
    %v859 = vpow.pop %v858
    %v860 = vmul.f32 %v848, 1.442695
    %v861 = vpow.pop %v860
    %v862 = vmul.f32 %v849, 1.442695
    %v863 = vpow.pop %v862
    %v864 = vmul.f32 %v850, 1.442695
    %v865 = vpow.pop %v864
    %v866 = vmul.f32 %v851, 1.442695
    %v867 = vpow.pop %v866
    %v868 = vsel %vm819, %v853, 0.0
    %869 = vadd.xlane.f32.xlu0 %v868
    %v870 = vpop.xlane.xlu0 %869
    %v871 = vsel %vm819, %v855, 0.0
    %872 = vadd.xlane.f32.xlu0 %v871
    %v873 = vpop.xlane.xlu0 %872
    %v874 = vsel %vm819, %v857, 0.0
    %875 = vadd.xlane.f32.xlu0 %v874
    %v876 = vpop.xlane.xlu0 %875
    %v877 = vsel %vm819, %v859, 0.0
    %878 = vadd.xlane.f32.xlu0 %v877
    %v879 = vpop.xlane.xlu0 %878
    %v880 = vsel %vm819, %v861, 0.0
    %881 = vadd.xlane.f32.xlu0 %v880
    %v882 = vpop.xlane.xlu0 %881
    %v883 = vsel %vm819, %v863, 0.0
    %884 = vadd.xlane.f32.xlu0 %v883
    %v885 = vpop.xlane.xlu0 %884
    %v886 = vsel %vm819, %v865, 0.0
    %887 = vadd.xlane.f32.xlu0 %v886
    %v888 = vpop.xlane.xlu0 %887
    %v889 = vsel %vm819, %v867, 0.0
    %890 = vadd.xlane.f32.xlu0 %v889
    %v891 = vpop.xlane.xlu0 %890
    %v892 = vrcp.pop %v870
    %v893 = vmul.f32 %v853, %v892
    %v894 = vrcp.pop %v873
    %v895 = vmul.f32 %v855, %v894
    %v896 = vrcp.pop %v876
    %v897 = vmul.f32 %v857, %v896
    %v898 = vrcp.pop %v879
    %v899 = vmul.f32 %v859, %v898
    %v900 = vrcp.pop %v882
    %v901 = vmul.f32 %v861, %v900
    %v902 = vrcp.pop %v885
    %v903 = vmul.f32 %v863, %v902
    %v904 = vrcp.pop %v888
    %v905 = vmul.f32 %v865, %v904
    %v906 = vrcp.pop %v891
    %v907 = vmul.f32 %v867, %v906
    %v908 = vrot.slane %v230, 4
    %vm909 = vcmask 31744
    %v911 = vsel %vm909, %v893, 0
    %vm913 = vcmask 1043456
    %v914 = vsel %vm913, %v908, 0
    %916 = vmatprep.subr.mxu0 0.0
    %917 = vmatpush1.msra.mxu0 0.0
    %918 = vmatprep.subr.mxu0 0.0
    %919 = vmatpush1.msra.mxu0 0.0
    %920 = vmatprep.subr.mxu0 0.0
    %921 = vmatpush1.msra.mxu0 0.0
    %922 = vmatprep.subr.mxu0 0.0
    %923 = vmatpush1.msra.mxu0 0.0
    %924 = vmatprep.subr.mxu0 0.0
    %925 = vmatpush1.msra.mxu0 0.0
    %926 = vmatprep.subr.mxu0 0.0
    %927 = vmatpush1.msra.mxu0 0.0
    %928 = vmatprep.subr.mxu0 0.0
    %929 = vmatpush1.msra.mxu0 0.0
    %930 = vmatprep.subr.mxu0 0.0
    %931 = vmatpush1.msra.mxu0 0.0
    %932 = vmatprep.subr.mxu0 0.0
    %933 = vmatpush1.msra.mxu0 0.0
    %934 = vmatprep.subr.mxu0 0.0
    %935 = vmatpush1.msra.mxu0 0.0
    %936 = vmatprep.subr.mxu0 0.0
    %937 = vmatpush1.msra.mxu0 0.0
    %938 = vmatprep.subr.mxu0 0.0
    %939 = vmatpush1.msra.mxu0 0.0
    %940 = vmatprep.subr.mxu0 0.0
    %941 = vmatpush1.msra.mxu0 0.0
    %942 = vmatprep.subr.mxu0 0.0
    %943 = vmatpush1.msra.mxu0 0.0
    %944 = vmatprep.subr.mxu0 0.0
    %945 = vmatpush1.msra.mxu0 0.0
    %946 = vmatprep.subr.mxu0 0.0
    %947 = vmatpush1.msra.mxu0 %v914
    %948 = vmatprep.subr.mxu0 0.0
    %949 = vmatpush2.msra.mxu0 0.0
    %950 = vmatprep.subr.mxu0 0.0
    %951 = vmatpush2.msra.mxu0 0.0
    %952 = vmatprep.subr.mxu0 0.0
    %953 = vmatpush2.msra.mxu0 0.0
    %954 = vmatprep.subr.mxu0 0.0
    %955 = vmatpush2.msra.mxu0 0.0
    %956 = vmatprep.subr.mxu0 0.0
    %957 = vmatpush2.msra.mxu0 0.0
    %958 = vmatprep.subr.mxu0 0.0
    %959 = vmatpush2.msra.mxu0 0.0
    %960 = vmatprep.subr.mxu0 0.0
    %961 = vmatpush2.msra.mxu0 0.0
    %962 = vmatprep.subr.mxu0 0.0
    %963 = vmatpush2.msra.mxu0 0.0
    %964 = vmatprep.subr.mxu0 0.0
    %965 = vmatpush2.msra.mxu0 0.0
    %966 = vmatprep.subr.mxu0 0.0
    %967 = vmatpush2.msra.mxu0 0.0
    %968 = vmatprep.subr.mxu0 0.0
    %969 = vmatpush2.msra.mxu0 0.0
    %970 = vmatprep.subr.mxu0 0.0
    %971 = vmatpush2.msra.mxu0 0.0
    %972 = vmatprep.subr.mxu0 0.0
    %973 = vmatpush2.msra.mxu0 0.0
    %974 = vmatprep.subr.mxu0 0.0
    %975 = vmatpush2.msra.mxu0 0.0
    %976 = vmatprep.subr.mxu0 0.0
    %977 = vmatpush2.msra.mxu0 0.0
    %978 = vmatprep.subr.mxu0 0.0
    %979 = vmatpush2.msra.mxu0 0.0
    %980 = vmatprep.mubr.f32.mxu0 0.0
    %981 = vmatmul.mubr.f32.gmra.mxu0 %v911
    %v982 = vpop.f32.mrf.mxu0
    %v983 = vadd.f32 0.0, %v982
    %v984 = vpop.f32.mrf.mxu0
    %985 = vdwg.mxu0
    %v986 = vrot.slane %v231, 4
    %v988 = vsel %vm909, %v895, 0
    %v990 = vsel %vm913, %v986, 0
    %992 = vmatprep.subr.mxu0 0.0
    %993 = vmatpush1.msra.mxu0 0.0
    %994 = vmatprep.subr.mxu0 0.0
    %995 = vmatpush1.msra.mxu0 0.0
    %996 = vmatprep.subr.mxu0 0.0
    %997 = vmatpush1.msra.mxu0 0.0
    %998 = vmatprep.subr.mxu0 0.0
    %999 = vmatpush1.msra.mxu0 0.0
    %1000 = vmatprep.subr.mxu0 0.0
    %1001 = vmatpush1.msra.mxu0 0.0
    %1002 = vmatprep.subr.mxu0 0.0
    %1003 = vmatpush1.msra.mxu0 0.0
    %1004 = vmatprep.subr.mxu0 0.0
    %1005 = vmatpush1.msra.mxu0 0.0
    %1006 = vmatprep.subr.mxu0 0.0
    %1007 = vmatpush1.msra.mxu0 0.0
    %1008 = vmatprep.subr.mxu0 0.0
    %1009 = vmatpush1.msra.mxu0 0.0
    %1010 = vmatprep.subr.mxu0 0.0
    %1011 = vmatpush1.msra.mxu0 0.0
    %1012 = vmatprep.subr.mxu0 0.0
    %1013 = vmatpush1.msra.mxu0 0.0
    %1014 = vmatprep.subr.mxu0 0.0
    %1015 = vmatpush1.msra.mxu0 0.0
    %1016 = vmatprep.subr.mxu0 0.0
    %1017 = vmatpush1.msra.mxu0 0.0
    %1018 = vmatprep.subr.mxu0 0.0
    %1019 = vmatpush1.msra.mxu0 0.0
    %1020 = vmatprep.subr.mxu0 0.0
    %1021 = vmatpush1.msra.mxu0 0.0
    %1022 = vmatprep.subr.mxu0 0.0
    %1023 = vmatpush1.msra.mxu0 %v990
    %1024 = vmatprep.subr.mxu0 0.0
    %1025 = vmatpush2.msra.mxu0 0.0
    %1026 = vmatprep.subr.mxu0 0.0
    %1027 = vmatpush2.msra.mxu0 0.0
    %1028 = vmatprep.subr.mxu0 0.0
    %1029 = vmatpush2.msra.mxu0 0.0
    %1030 = vmatprep.subr.mxu0 0.0
    %1031 = vmatpush2.msra.mxu0 0.0
    %1032 = vmatprep.subr.mxu0 0.0
    %1033 = vmatpush2.msra.mxu0 0.0
    %1034 = vmatprep.subr.mxu0 0.0
    %1035 = vmatpush2.msra.mxu0 0.0
    %1036 = vmatprep.subr.mxu0 0.0
    %1037 = vmatpush2.msra.mxu0 0.0
    %1038 = vmatprep.subr.mxu0 0.0
    %1039 = vmatpush2.msra.mxu0 0.0
    %1040 = vmatprep.subr.mxu0 0.0
    %1041 = vmatpush2.msra.mxu0 0.0
    %1042 = vmatprep.subr.mxu0 0.0
    %1043 = vmatpush2.msra.mxu0 0.0
    %1044 = vmatprep.subr.mxu0 0.0
    %1045 = vmatpush2.msra.mxu0 0.0
    %1046 = vmatprep.subr.mxu0 0.0
    %1047 = vmatpush2.msra.mxu0 0.0
    %1048 = vmatprep.subr.mxu0 0.0
    %1049 = vmatpush2.msra.mxu0 0.0
    %1050 = vmatprep.subr.mxu0 0.0
    %1051 = vmatpush2.msra.mxu0 0.0
    %1052 = vmatprep.subr.mxu0 0.0
    %1053 = vmatpush2.msra.mxu0 0.0
    %1054 = vmatprep.subr.mxu0 0.0
    %1055 = vmatpush2.msra.mxu0 0.0
    %1056 = vmatprep.mubr.f32.mxu0 0.0
    %1057 = vmatmul.mubr.f32.gmra.mxu0 %v988
    %v1058 = vpop.f32.mrf.mxu0
    %v1059 = vadd.f32 0.0, %v1058
    %v1060 = vpop.f32.mrf.mxu0
    %1061 = vdwg.mxu0
    %v1062 = vrot.slane %v232, 4
    %v1064 = vsel %vm909, %v897, 0
    %v1066 = vsel %vm913, %v1062, 0
    %1068 = vmatprep.subr.mxu0 0.0
    %1069 = vmatpush1.msra.mxu0 0.0
    %1070 = vmatprep.subr.mxu0 0.0
    %1071 = vmatpush1.msra.mxu0 0.0
    %1072 = vmatprep.subr.mxu0 0.0
    %1073 = vmatpush1.msra.mxu0 0.0
    %1074 = vmatprep.subr.mxu0 0.0
    %1075 = vmatpush1.msra.mxu0 0.0
    %1076 = vmatprep.subr.mxu0 0.0
    %1077 = vmatpush1.msra.mxu0 0.0
    %1078 = vmatprep.subr.mxu0 0.0
    %1079 = vmatpush1.msra.mxu0 0.0
    %1080 = vmatprep.subr.mxu0 0.0
    %1081 = vmatpush1.msra.mxu0 0.0
    %1082 = vmatprep.subr.mxu0 0.0
    %1083 = vmatpush1.msra.mxu0 0.0
    %1084 = vmatprep.subr.mxu0 0.0
    %1085 = vmatpush1.msra.mxu0 0.0
    %1086 = vmatprep.subr.mxu0 0.0
    %1087 = vmatpush1.msra.mxu0 0.0
    %1088 = vmatprep.subr.mxu0 0.0
    %1089 = vmatpush1.msra.mxu0 0.0
    %1090 = vmatprep.subr.mxu0 0.0
    %1091 = vmatpush1.msra.mxu0 0.0
    %1092 = vmatprep.subr.mxu0 0.0
    %1093 = vmatpush1.msra.mxu0 0.0
    %1094 = vmatprep.subr.mxu0 0.0
    %1095 = vmatpush1.msra.mxu0 0.0
    %1096 = vmatprep.subr.mxu0 0.0
    %1097 = vmatpush1.msra.mxu0 0.0
    %1098 = vmatprep.subr.mxu0 0.0
    %1099 = vmatpush1.msra.mxu0 %v1066
    %1100 = vmatprep.subr.mxu0 0.0
    %1101 = vmatpush2.msra.mxu0 0.0
    %1102 = vmatprep.subr.mxu0 0.0
    %1103 = vmatpush2.msra.mxu0 0.0
    %1104 = vmatprep.subr.mxu0 0.0
    %1105 = vmatpush2.msra.mxu0 0.0
    %1106 = vmatprep.subr.mxu0 0.0
    %1107 = vmatpush2.msra.mxu0 0.0
    %1108 = vmatprep.subr.mxu0 0.0
    %1109 = vmatpush2.msra.mxu0 0.0
    %1110 = vmatprep.subr.mxu0 0.0
    %1111 = vmatpush2.msra.mxu0 0.0
    %1112 = vmatprep.subr.mxu0 0.0
    %1113 = vmatpush2.msra.mxu0 0.0
    %1114 = vmatprep.subr.mxu0 0.0
    %1115 = vmatpush2.msra.mxu0 0.0
    %1116 = vmatprep.subr.mxu0 0.0
    %1117 = vmatpush2.msra.mxu0 0.0
    %1118 = vmatprep.subr.mxu0 0.0
    %1119 = vmatpush2.msra.mxu0 0.0
    %1120 = vmatprep.subr.mxu0 0.0
    %1121 = vmatpush2.msra.mxu0 0.0
    %1122 = vmatprep.subr.mxu0 0.0
    %1123 = vmatpush2.msra.mxu0 0.0
    %1124 = vmatprep.subr.mxu0 0.0
    %1125 = vmatpush2.msra.mxu0 0.0
    %1126 = vmatprep.subr.mxu0 0.0
    %1127 = vmatpush2.msra.mxu0 0.0
    %1128 = vmatprep.subr.mxu0 0.0
    %1129 = vmatpush2.msra.mxu0 0.0
    %1130 = vmatprep.subr.mxu0 0.0
    %1131 = vmatpush2.msra.mxu0 0.0
    %1132 = vmatprep.mubr.f32.mxu0 0.0
    %1133 = vmatmul.mubr.f32.gmra.mxu0 %v1064
    %v1134 = vpop.f32.mrf.mxu0
    %v1135 = vadd.f32 0.0, %v1134
    %v1136 = vpop.f32.mrf.mxu0
    %1137 = vdwg.mxu0
    %v1138 = vrot.slane %v233, 4
    %v1140 = vsel %vm909, %v899, 0
    %v1142 = vsel %vm913, %v1138, 0
    %1144 = vmatprep.subr.mxu0 0.0
    %1145 = vmatpush1.msra.mxu0 0.0
    %1146 = vmatprep.subr.mxu0 0.0
    %1147 = vmatpush1.msra.mxu0 0.0
    %1148 = vmatprep.subr.mxu0 0.0
    %1149 = vmatpush1.msra.mxu0 0.0
    %1150 = vmatprep.subr.mxu0 0.0
    %1151 = vmatpush1.msra.mxu0 0.0
    %1152 = vmatprep.subr.mxu0 0.0
    %1153 = vmatpush1.msra.mxu0 0.0
    %1154 = vmatprep.subr.mxu0 0.0
    %1155 = vmatpush1.msra.mxu0 0.0
    %1156 = vmatprep.subr.mxu0 0.0
    %1157 = vmatpush1.msra.mxu0 0.0
    %1158 = vmatprep.subr.mxu0 0.0
    %1159 = vmatpush1.msra.mxu0 0.0
    %1160 = vmatprep.subr.mxu0 0.0
    %1161 = vmatpush1.msra.mxu0 0.0
    %1162 = vmatprep.subr.mxu0 0.0
    %1163 = vmatpush1.msra.mxu0 0.0
    %1164 = vmatprep.subr.mxu0 0.0
    %1165 = vmatpush1.msra.mxu0 0.0
    %1166 = vmatprep.subr.mxu0 0.0
    %1167 = vmatpush1.msra.mxu0 0.0
    %1168 = vmatprep.subr.mxu0 0.0
    %1169 = vmatpush1.msra.mxu0 0.0
    %1170 = vmatprep.subr.mxu0 0.0
    %1171 = vmatpush1.msra.mxu0 0.0
    %1172 = vmatprep.subr.mxu0 0.0
    %1173 = vmatpush1.msra.mxu0 0.0
    %1174 = vmatprep.subr.mxu0 0.0
    %1175 = vmatpush1.msra.mxu0 %v1142
    %1176 = vmatprep.subr.mxu0 0.0
    %1177 = vmatpush2.msra.mxu0 0.0
    %1178 = vmatprep.subr.mxu0 0.0
    %1179 = vmatpush2.msra.mxu0 0.0
    %1180 = vmatprep.subr.mxu0 0.0
    %1181 = vmatpush2.msra.mxu0 0.0
    %1182 = vmatprep.subr.mxu0 0.0
    %1183 = vmatpush2.msra.mxu0 0.0
    %1184 = vmatprep.subr.mxu0 0.0
    %1185 = vmatpush2.msra.mxu0 0.0
    %1186 = vmatprep.subr.mxu0 0.0
    %1187 = vmatpush2.msra.mxu0 0.0
    %1188 = vmatprep.subr.mxu0 0.0
    %1189 = vmatpush2.msra.mxu0 0.0
    %1190 = vmatprep.subr.mxu0 0.0
    %1191 = vmatpush2.msra.mxu0 0.0
    %1192 = vmatprep.subr.mxu0 0.0
    %1193 = vmatpush2.msra.mxu0 0.0
    %1194 = vmatprep.subr.mxu0 0.0
    %1195 = vmatpush2.msra.mxu0 0.0
    %1196 = vmatprep.subr.mxu0 0.0
    %1197 = vmatpush2.msra.mxu0 0.0
    %1198 = vmatprep.subr.mxu0 0.0
    %1199 = vmatpush2.msra.mxu0 0.0
    %1200 = vmatprep.subr.mxu0 0.0
    %1201 = vmatpush2.msra.mxu0 0.0
    %1202 = vmatprep.subr.mxu0 0.0
    %1203 = vmatpush2.msra.mxu0 0.0
    %1204 = vmatprep.subr.mxu0 0.0
    %1205 = vmatpush2.msra.mxu0 0.0
    %1206 = vmatprep.subr.mxu0 0.0
    %1207 = vmatpush2.msra.mxu0 0.0
    %1208 = vmatprep.mubr.f32.mxu0 0.0
    %1209 = vmatmul.mubr.f32.gmra.mxu0 %v1140
    %v1210 = vpop.f32.mrf.mxu0
    %v1211 = vadd.f32 0.0, %v1210
    %v1212 = vpop.f32.mrf.mxu0
    %1213 = vdwg.mxu0
    %v1214 = vrot.slane %v234, 4
    %v1216 = vsel %vm909, %v901, 0
    %v1218 = vsel %vm913, %v1214, 0
    %1220 = vmatprep.subr.mxu0 0.0
    %1221 = vmatpush1.msra.mxu0 0.0
    %1222 = vmatprep.subr.mxu0 0.0
    %1223 = vmatpush1.msra.mxu0 0.0
    %1224 = vmatprep.subr.mxu0 0.0
    %1225 = vmatpush1.msra.mxu0 0.0
    %1226 = vmatprep.subr.mxu0 0.0
    %1227 = vmatpush1.msra.mxu0 0.0
    %1228 = vmatprep.subr.mxu0 0.0
    %1229 = vmatpush1.msra.mxu0 0.0
    %1230 = vmatprep.subr.mxu0 0.0
    %1231 = vmatpush1.msra.mxu0 0.0
    %1232 = vmatprep.subr.mxu0 0.0
    %1233 = vmatpush1.msra.mxu0 0.0
    %1234 = vmatprep.subr.mxu0 0.0
    %1235 = vmatpush1.msra.mxu0 0.0
    %1236 = vmatprep.subr.mxu0 0.0
    %1237 = vmatpush1.msra.mxu0 0.0
    %1238 = vmatprep.subr.mxu0 0.0
    %1239 = vmatpush1.msra.mxu0 0.0
    %1240 = vmatprep.subr.mxu0 0.0
    %1241 = vmatpush1.msra.mxu0 0.0
    %1242 = vmatprep.subr.mxu0 0.0
    %1243 = vmatpush1.msra.mxu0 0.0
    %1244 = vmatprep.subr.mxu0 0.0
    %1245 = vmatpush1.msra.mxu0 0.0
    %1246 = vmatprep.subr.mxu0 0.0
    %1247 = vmatpush1.msra.mxu0 0.0
    %1248 = vmatprep.subr.mxu0 0.0
    %1249 = vmatpush1.msra.mxu0 0.0
    %1250 = vmatprep.subr.mxu0 0.0
    %1251 = vmatpush1.msra.mxu0 %v1218
    %1252 = vmatprep.subr.mxu0 0.0
    %1253 = vmatpush2.msra.mxu0 0.0
    %1254 = vmatprep.subr.mxu0 0.0
    %1255 = vmatpush2.msra.mxu0 0.0
    %1256 = vmatprep.subr.mxu0 0.0
    %1257 = vmatpush2.msra.mxu0 0.0
    %1258 = vmatprep.subr.mxu0 0.0
    %1259 = vmatpush2.msra.mxu0 0.0
    %1260 = vmatprep.subr.mxu0 0.0
    %1261 = vmatpush2.msra.mxu0 0.0
    %1262 = vmatprep.subr.mxu0 0.0
    %1263 = vmatpush2.msra.mxu0 0.0
    %1264 = vmatprep.subr.mxu0 0.0
    %1265 = vmatpush2.msra.mxu0 0.0
    %1266 = vmatprep.subr.mxu0 0.0
    %1267 = vmatpush2.msra.mxu0 0.0
    %1268 = vmatprep.subr.mxu0 0.0
    %1269 = vmatpush2.msra.mxu0 0.0
    %1270 = vmatprep.subr.mxu0 0.0
    %1271 = vmatpush2.msra.mxu0 0.0
    %1272 = vmatprep.subr.mxu0 0.0
    %1273 = vmatpush2.msra.mxu0 0.0
    %1274 = vmatprep.subr.mxu0 0.0
    %1275 = vmatpush2.msra.mxu0 0.0
    %1276 = vmatprep.subr.mxu0 0.0
    %1277 = vmatpush2.msra.mxu0 0.0
    %1278 = vmatprep.subr.mxu0 0.0
    %1279 = vmatpush2.msra.mxu0 0.0
    %1280 = vmatprep.subr.mxu0 0.0
    %1281 = vmatpush2.msra.mxu0 0.0
    %1282 = vmatprep.subr.mxu0 0.0
    %1283 = vmatpush2.msra.mxu0 0.0
    %1284 = vmatprep.mubr.f32.mxu0 0.0
    %1285 = vmatmul.mubr.f32.gmra.mxu0 %v1216
    %v1286 = vpop.f32.mrf.mxu0
    %v1287 = vadd.f32 0.0, %v1286
    %v1288 = vpop.f32.mrf.mxu0
    %1289 = vdwg.mxu0
    %v1290 = vrot.slane %v235, 4
    %v1292 = vsel %vm909, %v903, 0
    %v1294 = vsel %vm913, %v1290, 0
    %1296 = vmatprep.subr.mxu0 0.0
    %1297 = vmatpush1.msra.mxu0 0.0
    %1298 = vmatprep.subr.mxu0 0.0
    %1299 = vmatpush1.msra.mxu0 0.0
    %1300 = vmatprep.subr.mxu0 0.0
    %1301 = vmatpush1.msra.mxu0 0.0
    %1302 = vmatprep.subr.mxu0 0.0
    %1303 = vmatpush1.msra.mxu0 0.0
    %1304 = vmatprep.subr.mxu0 0.0
    %1305 = vmatpush1.msra.mxu0 0.0
    %1306 = vmatprep.subr.mxu0 0.0
    %1307 = vmatpush1.msra.mxu0 0.0
    %1308 = vmatprep.subr.mxu0 0.0
    %1309 = vmatpush1.msra.mxu0 0.0
    %1310 = vmatprep.subr.mxu0 0.0
    %1311 = vmatpush1.msra.mxu0 0.0
    %1312 = vmatprep.subr.mxu0 0.0
    %1313 = vmatpush1.msra.mxu0 0.0
    %1314 = vmatprep.subr.mxu0 0.0
    %1315 = vmatpush1.msra.mxu0 0.0
    %1316 = vmatprep.subr.mxu0 0.0
    %1317 = vmatpush1.msra.mxu0 0.0
    %1318 = vmatprep.subr.mxu0 0.0
    %1319 = vmatpush1.msra.mxu0 0.0
    %1320 = vmatprep.subr.mxu0 0.0
    %1321 = vmatpush1.msra.mxu0 0.0
    %1322 = vmatprep.subr.mxu0 0.0
    %1323 = vmatpush1.msra.mxu0 0.0
    %1324 = vmatprep.subr.mxu0 0.0
    %1325 = vmatpush1.msra.mxu0 0.0
    %1326 = vmatprep.subr.mxu0 0.0
    %1327 = vmatpush1.msra.mxu0 %v1294
    %1328 = vmatprep.subr.mxu0 0.0
    %1329 = vmatpush2.msra.mxu0 0.0
    %1330 = vmatprep.subr.mxu0 0.0
    %1331 = vmatpush2.msra.mxu0 0.0
    %1332 = vmatprep.subr.mxu0 0.0
    %1333 = vmatpush2.msra.mxu0 0.0
    %1334 = vmatprep.subr.mxu0 0.0
    %1335 = vmatpush2.msra.mxu0 0.0
    %1336 = vmatprep.subr.mxu0 0.0
    %1337 = vmatpush2.msra.mxu0 0.0
    %1338 = vmatprep.subr.mxu0 0.0
    %1339 = vmatpush2.msra.mxu0 0.0
    %1340 = vmatprep.subr.mxu0 0.0
    %1341 = vmatpush2.msra.mxu0 0.0
    %1342 = vmatprep.subr.mxu0 0.0
    %1343 = vmatpush2.msra.mxu0 0.0
    %1344 = vmatprep.subr.mxu0 0.0
    %1345 = vmatpush2.msra.mxu0 0.0
    %1346 = vmatprep.subr.mxu0 0.0
    %1347 = vmatpush2.msra.mxu0 0.0
    %1348 = vmatprep.subr.mxu0 0.0
    %1349 = vmatpush2.msra.mxu0 0.0
    %1350 = vmatprep.subr.mxu0 0.0
    %1351 = vmatpush2.msra.mxu0 0.0
    %1352 = vmatprep.subr.mxu0 0.0
    %1353 = vmatpush2.msra.mxu0 0.0
    %1354 = vmatprep.subr.mxu0 0.0
    %1355 = vmatpush2.msra.mxu0 0.0
    %1356 = vmatprep.subr.mxu0 0.0
    %1357 = vmatpush2.msra.mxu0 0.0
    %1358 = vmatprep.subr.mxu0 0.0
    %1359 = vmatpush2.msra.mxu0 0.0
    %1360 = vmatprep.mubr.f32.mxu0 0.0
    %1361 = vmatmul.mubr.f32.gmra.mxu0 %v1292
    %v1362 = vpop.f32.mrf.mxu0
    %v1363 = vadd.f32 0.0, %v1362
    %v1364 = vpop.f32.mrf.mxu0
    %1365 = vdwg.mxu0
    %v1366 = vrot.slane %v236, 4
    %v1368 = vsel %vm909, %v905, 0
    %v1370 = vsel %vm913, %v1366, 0
    %1372 = vmatprep.subr.mxu0 0.0
    %1373 = vmatpush1.msra.mxu0 0.0
    %1374 = vmatprep.subr.mxu0 0.0
    %1375 = vmatpush1.msra.mxu0 0.0
    %1376 = vmatprep.subr.mxu0 0.0
    %1377 = vmatpush1.msra.mxu0 0.0
    %1378 = vmatprep.subr.mxu0 0.0
    %1379 = vmatpush1.msra.mxu0 0.0
    %1380 = vmatprep.subr.mxu0 0.0
    %1381 = vmatpush1.msra.mxu0 0.0
    %1382 = vmatprep.subr.mxu0 0.0
    %1383 = vmatpush1.msra.mxu0 0.0
    %1384 = vmatprep.subr.mxu0 0.0
    %1385 = vmatpush1.msra.mxu0 0.0
    %1386 = vmatprep.subr.mxu0 0.0
    %1387 = vmatpush1.msra.mxu0 0.0
    %1388 = vmatprep.subr.mxu0 0.0
    %1389 = vmatpush1.msra.mxu0 0.0
    %1390 = vmatprep.subr.mxu0 0.0
    %1391 = vmatpush1.msra.mxu0 0.0
    %1392 = vmatprep.subr.mxu0 0.0
    %1393 = vmatpush1.msra.mxu0 0.0
    %1394 = vmatprep.subr.mxu0 0.0
    %1395 = vmatpush1.msra.mxu0 0.0
    %1396 = vmatprep.subr.mxu0 0.0
    %1397 = vmatpush1.msra.mxu0 0.0
    %1398 = vmatprep.subr.mxu0 0.0
    %1399 = vmatpush1.msra.mxu0 0.0
    %1400 = vmatprep.subr.mxu0 0.0
    %1401 = vmatpush1.msra.mxu0 0.0
    %1402 = vmatprep.subr.mxu0 0.0
    %1403 = vmatpush1.msra.mxu0 %v1370
    %1404 = vmatprep.subr.mxu0 0.0
    %1405 = vmatpush2.msra.mxu0 0.0
    %1406 = vmatprep.subr.mxu0 0.0
    %1407 = vmatpush2.msra.mxu0 0.0
    %1408 = vmatprep.subr.mxu0 0.0
    %1409 = vmatpush2.msra.mxu0 0.0
    %1410 = vmatprep.subr.mxu0 0.0
    %1411 = vmatpush2.msra.mxu0 0.0
    %1412 = vmatprep.subr.mxu0 0.0
    %1413 = vmatpush2.msra.mxu0 0.0
    %1414 = vmatprep.subr.mxu0 0.0
    %1415 = vmatpush2.msra.mxu0 0.0
    %1416 = vmatprep.subr.mxu0 0.0
    %1417 = vmatpush2.msra.mxu0 0.0
    %1418 = vmatprep.subr.mxu0 0.0
    %1419 = vmatpush2.msra.mxu0 0.0
    %1420 = vmatprep.subr.mxu0 0.0
    %1421 = vmatpush2.msra.mxu0 0.0
    %1422 = vmatprep.subr.mxu0 0.0
    %1423 = vmatpush2.msra.mxu0 0.0
    %1424 = vmatprep.subr.mxu0 0.0
    %1425 = vmatpush2.msra.mxu0 0.0
    %1426 = vmatprep.subr.mxu0 0.0
    %1427 = vmatpush2.msra.mxu0 0.0
    %1428 = vmatprep.subr.mxu0 0.0
    %1429 = vmatpush2.msra.mxu0 0.0
    %1430 = vmatprep.subr.mxu0 0.0
    %1431 = vmatpush2.msra.mxu0 0.0
    %1432 = vmatprep.subr.mxu0 0.0
    %1433 = vmatpush2.msra.mxu0 0.0
    %1434 = vmatprep.subr.mxu0 0.0
    %1435 = vmatpush2.msra.mxu0 0.0
    %1436 = vmatprep.mubr.f32.mxu0 0.0
    %1437 = vmatmul.mubr.f32.gmra.mxu0 %v1368
    %v1438 = vpop.f32.mrf.mxu0
    %v1439 = vadd.f32 0.0, %v1438
    %v1440 = vpop.f32.mrf.mxu0
    %1441 = vdwg.mxu0
    %v1442 = vrot.slane %v237, 4
    %v1444 = vsel %vm909, %v907, 0
    %v1446 = vsel %vm913, %v1442, 0
    %1448 = vmatprep.subr.mxu0 0.0
    %1449 = vmatpush1.msra.mxu0 0.0
    %1450 = vmatprep.subr.mxu0 0.0
    %1451 = vmatpush1.msra.mxu0 0.0
    %1452 = vmatprep.subr.mxu0 0.0
    %1453 = vmatpush1.msra.mxu0 0.0
    %1454 = vmatprep.subr.mxu0 0.0
    %1455 = vmatpush1.msra.mxu0 0.0
    %1456 = vmatprep.subr.mxu0 0.0
    %1457 = vmatpush1.msra.mxu0 0.0
    %1458 = vmatprep.subr.mxu0 0.0
    %1459 = vmatpush1.msra.mxu0 0.0
    %1460 = vmatprep.subr.mxu0 0.0
    %1461 = vmatpush1.msra.mxu0 0.0
    %1462 = vmatprep.subr.mxu0 0.0
    %1463 = vmatpush1.msra.mxu0 0.0
    %1464 = vmatprep.subr.mxu0 0.0
    %1465 = vmatpush1.msra.mxu0 0.0
    %1466 = vmatprep.subr.mxu0 0.0
    %1467 = vmatpush1.msra.mxu0 0.0
    %1468 = vmatprep.subr.mxu0 0.0
    %1469 = vmatpush1.msra.mxu0 0.0
    %1470 = vmatprep.subr.mxu0 0.0
    %1471 = vmatpush1.msra.mxu0 0.0
    %1472 = vmatprep.subr.mxu0 0.0
    %1473 = vmatpush1.msra.mxu0 0.0
    %1474 = vmatprep.subr.mxu0 0.0
    %1475 = vmatpush1.msra.mxu0 0.0
    %1476 = vmatprep.subr.mxu0 0.0
    %1477 = vmatpush1.msra.mxu0 0.0
    %1478 = vmatprep.subr.mxu0 0.0
    %1479 = vmatpush1.msra.mxu0 %v1446
    %1480 = vmatprep.subr.mxu0 0.0
    %1481 = vmatpush2.msra.mxu0 0.0
    %1482 = vmatprep.subr.mxu0 0.0
    %1483 = vmatpush2.msra.mxu0 0.0
    %1484 = vmatprep.subr.mxu0 0.0
    %1485 = vmatpush2.msra.mxu0 0.0
    %1486 = vmatprep.subr.mxu0 0.0
    %1487 = vmatpush2.msra.mxu0 0.0
    %1488 = vmatprep.subr.mxu0 0.0
    %1489 = vmatpush2.msra.mxu0 0.0
    %1490 = vmatprep.subr.mxu0 0.0
    %1491 = vmatpush2.msra.mxu0 0.0
    %1492 = vmatprep.subr.mxu0 0.0
    %1493 = vmatpush2.msra.mxu0 0.0
    %1494 = vmatprep.subr.mxu0 0.0
    %1495 = vmatpush2.msra.mxu0 0.0
    %1496 = vmatprep.subr.mxu0 0.0
    %1497 = vmatpush2.msra.mxu0 0.0
    %1498 = vmatprep.subr.mxu0 0.0
    %1499 = vmatpush2.msra.mxu0 0.0
    %1500 = vmatprep.subr.mxu0 0.0
    %1501 = vmatpush2.msra.mxu0 0.0
    %1502 = vmatprep.subr.mxu0 0.0
    %1503 = vmatpush2.msra.mxu0 0.0
    %1504 = vmatprep.subr.mxu0 0.0
    %1505 = vmatpush2.msra.mxu0 0.0
    %1506 = vmatprep.subr.mxu0 0.0
    %1507 = vmatpush2.msra.mxu0 0.0
    %1508 = vmatprep.subr.mxu0 0.0
    %1509 = vmatpush2.msra.mxu0 0.0
    %1510 = vmatprep.subr.mxu0 0.0
    %1511 = vmatpush2.msra.mxu0 0.0
    %1512 = vmatprep.mubr.f32.mxu0 0.0
    %1513 = vmatmul.mubr.f32.gmra.mxu0 %v1444
    %v1514 = vpop.f32.mrf.mxu0
    %v1515 = vadd.f32 0.0, %v1514
    %v1516 = vpop.f32.mrf.mxu0
    %1517 = vdwg.mxu0
    %v1526 = vrot.slane %v1059, 7
    %vm1527 = vcmask 1041409
    %v1528 = vsel %vm1527, %v1526, %v983
    %v1529 = vrot.slane %v1135, 6
    %vm1530 = vcmask 1042434
    %v1531 = vsel %vm1530, %v1529, %v1528
    %v1532 = vrot.slane %v1211, 5
    %vm1533 = vcmask 1043459
    %v1534 = vsel %vm1533, %v1532, %v1531
    %v1535 = vrot.slane %v1287, 4
    %vm1536 = vcmask 1044484
    %v1537 = vsel %vm1536, %v1535, %v1534
    %v1538 = vrot.slane %v1363, 3
    %vm1539 = vcmask 1045509
    %v1540 = vsel %vm1539, %v1538, %v1537
    %v1541 = vrot.slane %v1439, 2
    %vm1542 = vcmask 1046534
    %v1543 = vsel %vm1542, %v1541, %v1540
    %v1544 = vrot.slane %v1515, 1
    %vm1545 = vcmask 1047559
    %v1546 = vsel %vm1545, %v1544, %v1543
    %1548 = vst.msk [vmem:[#allocation2] sm:$0xff] %vm239, %v1546
    %v1549 = vlaneseq
    %v1550 = vshrl.u32 %v1549, 7
    %v1551 = vsub.s32 0, %v1550
    %v1552 = vrot.slane %v238, %v1551
    %1553 = vrot.lane.b32.xlu0 %v1552, 96
    %v1554 = vpop.permute.xlu0 %1553
    %1555 = vrot.lane.b32.xlu0 %v230, 96
    %v1556 = vpop.permute.xlu0 %1555
    %v1557 = vsel %vm239, %v1554, 0
    %v1559 = vsel %vm239, %v1556, 0
    %1561 = vmatprep.subr.mxu0 0.0
    %1562 = vmatpush1.xpose.msra.mxu0 0.0
    %1563 = vmatprep.subr.mxu0 0.0
    %1564 = vmatpush1.xpose.msra.mxu0 0.0
    %1565 = vmatprep.subr.mxu0 0.0
    %1566 = vmatpush1.xpose.msra.mxu0 0.0
    %1567 = vmatprep.subr.mxu0 0.0
    %1568 = vmatpush1.xpose.msra.mxu0 0.0
    %1569 = vmatprep.subr.mxu0 0.0
    %1570 = vmatpush1.xpose.msra.mxu0 0.0
    %1571 = vmatprep.subr.mxu0 0.0
    %1572 = vmatpush1.xpose.msra.mxu0 0.0
    %1573 = vmatprep.subr.mxu0 0.0
    %1574 = vmatpush1.xpose.msra.mxu0 0.0
    %1575 = vmatprep.subr.mxu0 0.0
    %1576 = vmatpush1.xpose.msra.mxu0 0.0
    %1577 = vmatprep.subr.mxu0 0.0
    %1578 = vmatpush1.xpose.msra.mxu0 0.0
    %1579 = vmatprep.subr.mxu0 0.0
    %1580 = vmatpush1.xpose.msra.mxu0 0.0
    %1581 = vmatprep.subr.mxu0 0.0
    %1582 = vmatpush1.xpose.msra.mxu0 0.0
    %1583 = vmatprep.subr.mxu0 0.0
    %1584 = vmatpush1.xpose.msra.mxu0 0.0
    %1585 = vmatprep.subr.mxu0 0.0
    %1586 = vmatpush1.xpose.msra.mxu0 0.0
    %1587 = vmatprep.subr.mxu0 0.0
    %1588 = vmatpush1.xpose.msra.mxu0 0.0
    %1589 = vmatprep.subr.mxu0 0.0
    %1590 = vmatpush1.xpose.msra.mxu0 0.0
    %1591 = vmatprep.subr.mxu0 0.0
    %1592 = vmatpush1.xpose.msra.mxu0 %v1559
    %1593 = vmatprep.subr.mxu0 0.0
    %1594 = vmatpush2.xpose.msra.mxu0 0.0
    %1595 = vmatprep.subr.mxu0 0.0
    %1596 = vmatpush2.xpose.msra.mxu0 0.0
    %1597 = vmatprep.subr.mxu0 0.0
    %1598 = vmatpush2.xpose.msra.mxu0 0.0
    %1599 = vmatprep.subr.mxu0 0.0
    %1600 = vmatpush2.xpose.msra.mxu0 0.0
    %1601 = vmatprep.subr.mxu0 0.0
    %1602 = vmatpush2.xpose.msra.mxu0 0.0
    %1603 = vmatprep.subr.mxu0 0.0
    %1604 = vmatpush2.xpose.msra.mxu0 0.0
    %1605 = vmatprep.subr.mxu0 0.0
    %1606 = vmatpush2.xpose.msra.mxu0 0.0
    %1607 = vmatprep.subr.mxu0 0.0
    %1608 = vmatpush2.xpose.msra.mxu0 0.0
    %1609 = vmatprep.subr.mxu0 0.0
    %1610 = vmatpush2.xpose.msra.mxu0 0.0
    %1611 = vmatprep.subr.mxu0 0.0
    %1612 = vmatpush2.xpose.msra.mxu0 0.0
    %1613 = vmatprep.subr.mxu0 0.0
    %1614 = vmatpush2.xpose.msra.mxu0 0.0
    %1615 = vmatprep.subr.mxu0 0.0
    %1616 = vmatpush2.xpose.msra.mxu0 0.0
    %1617 = vmatprep.subr.mxu0 0.0
    %1618 = vmatpush2.xpose.msra.mxu0 0.0
    %1619 = vmatprep.subr.mxu0 0.0
    %1620 = vmatpush2.xpose.msra.mxu0 0.0
    %1621 = vmatprep.subr.mxu0 0.0
    %1622 = vmatpush2.xpose.msra.mxu0 0.0
    %1623 = vmatprep.subr.mxu0 0.0
    %1624 = vmatpush2.xpose.msra.mxu0 0.0
    %1625 = vmatprep.mubr.f32.mxu0 0.0
    %1626 = vmatmul.mubr.f32.gmra.mxu0 %v1557
    %v1627 = vpop.f32.mrf.mxu0
    %v1628 = vadd.f32 0.0, %v1627
    %v1629 = vpop.f32.mrf.mxu0
    %1630 = vdwg.mxu0
    %1631 = vrot.lane.b32.xlu0 %v231, 96
    %v1632 = vpop.permute.xlu0 %1631
    %v1633 = vsel %vm239, %v1632, 0
    %1635 = vmatprep.subr.mxu0 0.0
    %1636 = vmatpush1.xpose.msra.mxu0 0.0
    %1637 = vmatprep.subr.mxu0 0.0
    %1638 = vmatpush1.xpose.msra.mxu0 0.0
    %1639 = vmatprep.subr.mxu0 0.0
    %1640 = vmatpush1.xpose.msra.mxu0 0.0
    %1641 = vmatprep.subr.mxu0 0.0
    %1642 = vmatpush1.xpose.msra.mxu0 0.0
    %1643 = vmatprep.subr.mxu0 0.0
    %1644 = vmatpush1.xpose.msra.mxu0 0.0
    %1645 = vmatprep.subr.mxu0 0.0
    %1646 = vmatpush1.xpose.msra.mxu0 0.0
    %1647 = vmatprep.subr.mxu0 0.0
    %1648 = vmatpush1.xpose.msra.mxu0 0.0
    %1649 = vmatprep.subr.mxu0 0.0
    %1650 = vmatpush1.xpose.msra.mxu0 0.0
    %1651 = vmatprep.subr.mxu0 0.0
    %1652 = vmatpush1.xpose.msra.mxu0 0.0
    %1653 = vmatprep.subr.mxu0 0.0
    %1654 = vmatpush1.xpose.msra.mxu0 0.0
    %1655 = vmatprep.subr.mxu0 0.0
    %1656 = vmatpush1.xpose.msra.mxu0 0.0
    %1657 = vmatprep.subr.mxu0 0.0
    %1658 = vmatpush1.xpose.msra.mxu0 0.0
    %1659 = vmatprep.subr.mxu0 0.0
    %1660 = vmatpush1.xpose.msra.mxu0 0.0
    %1661 = vmatprep.subr.mxu0 0.0
    %1662 = vmatpush1.xpose.msra.mxu0 0.0
    %1663 = vmatprep.subr.mxu0 0.0
    %1664 = vmatpush1.xpose.msra.mxu0 0.0
    %1665 = vmatprep.subr.mxu0 0.0
    %1666 = vmatpush1.xpose.msra.mxu0 %v1633
    %1667 = vmatprep.subr.mxu0 0.0
    %1668 = vmatpush2.xpose.msra.mxu0 0.0
    %1669 = vmatprep.subr.mxu0 0.0
    %1670 = vmatpush2.xpose.msra.mxu0 0.0
    %1671 = vmatprep.subr.mxu0 0.0
    %1672 = vmatpush2.xpose.msra.mxu0 0.0
    %1673 = vmatprep.subr.mxu0 0.0
    %1674 = vmatpush2.xpose.msra.mxu0 0.0
    %1675 = vmatprep.subr.mxu0 0.0
    %1676 = vmatpush2.xpose.msra.mxu0 0.0
    %1677 = vmatprep.subr.mxu0 0.0
    %1678 = vmatpush2.xpose.msra.mxu0 0.0
    %1679 = vmatprep.subr.mxu0 0.0
    %1680 = vmatpush2.xpose.msra.mxu0 0.0
    %1681 = vmatprep.subr.mxu0 0.0
    %1682 = vmatpush2.xpose.msra.mxu0 0.0
    %1683 = vmatprep.subr.mxu0 0.0
    %1684 = vmatpush2.xpose.msra.mxu0 0.0
    %1685 = vmatprep.subr.mxu0 0.0
    %1686 = vmatpush2.xpose.msra.mxu0 0.0
    %1687 = vmatprep.subr.mxu0 0.0
    %1688 = vmatpush2.xpose.msra.mxu0 0.0
    %1689 = vmatprep.subr.mxu0 0.0
    %1690 = vmatpush2.xpose.msra.mxu0 0.0
    %1691 = vmatprep.subr.mxu0 0.0
    %1692 = vmatpush2.xpose.msra.mxu0 0.0
    %1693 = vmatprep.subr.mxu0 0.0
    %1694 = vmatpush2.xpose.msra.mxu0 0.0
    %1695 = vmatprep.subr.mxu0 0.0
    %1696 = vmatpush2.xpose.msra.mxu0 0.0
    %1697 = vmatprep.subr.mxu0 0.0
    %1698 = vmatpush2.xpose.msra.mxu0 0.0
    %1699 = vmatprep.mubr.f32.mxu0 0.0
    %1700 = vmatmul.mubr.f32.gmra.mxu0 %v1557
    %v1701 = vpop.f32.mrf.mxu0
    %v1702 = vadd.f32 0.0, %v1701
    %v1703 = vpop.f32.mrf.mxu0
    %1704 = vdwg.mxu0
    %1705 = vrot.lane.b32.xlu0 %v232, 96
    %v1706 = vpop.permute.xlu0 %1705
    %v1707 = vsel %vm239, %v1706, 0
    %1709 = vmatprep.subr.mxu0 0.0
    %1710 = vmatpush1.xpose.msra.mxu0 0.0
    %1711 = vmatprep.subr.mxu0 0.0
    %1712 = vmatpush1.xpose.msra.mxu0 0.0
    %1713 = vmatprep.subr.mxu0 0.0
    %1714 = vmatpush1.xpose.msra.mxu0 0.0
    %1715 = vmatprep.subr.mxu0 0.0
    %1716 = vmatpush1.xpose.msra.mxu0 0.0
    %1717 = vmatprep.subr.mxu0 0.0
    %1718 = vmatpush1.xpose.msra.mxu0 0.0
    %1719 = vmatprep.subr.mxu0 0.0
    %1720 = vmatpush1.xpose.msra.mxu0 0.0
    %1721 = vmatprep.subr.mxu0 0.0
    %1722 = vmatpush1.xpose.msra.mxu0 0.0
    %1723 = vmatprep.subr.mxu0 0.0
    %1724 = vmatpush1.xpose.msra.mxu0 0.0
    %1725 = vmatprep.subr.mxu0 0.0
    %1726 = vmatpush1.xpose.msra.mxu0 0.0
    %1727 = vmatprep.subr.mxu0 0.0
    %1728 = vmatpush1.xpose.msra.mxu0 0.0
    %1729 = vmatprep.subr.mxu0 0.0
    %1730 = vmatpush1.xpose.msra.mxu0 0.0
    %1731 = vmatprep.subr.mxu0 0.0
    %1732 = vmatpush1.xpose.msra.mxu0 0.0
    %1733 = vmatprep.subr.mxu0 0.0
    %1734 = vmatpush1.xpose.msra.mxu0 0.0
    %1735 = vmatprep.subr.mxu0 0.0
    %1736 = vmatpush1.xpose.msra.mxu0 0.0
    %1737 = vmatprep.subr.mxu0 0.0
    %1738 = vmatpush1.xpose.msra.mxu0 0.0
    %1739 = vmatprep.subr.mxu0 0.0
    %1740 = vmatpush1.xpose.msra.mxu0 %v1707
    %1741 = vmatprep.subr.mxu0 0.0
    %1742 = vmatpush2.xpose.msra.mxu0 0.0
    %1743 = vmatprep.subr.mxu0 0.0
    %1744 = vmatpush2.xpose.msra.mxu0 0.0
    %1745 = vmatprep.subr.mxu0 0.0
    %1746 = vmatpush2.xpose.msra.mxu0 0.0
    %1747 = vmatprep.subr.mxu0 0.0
    %1748 = vmatpush2.xpose.msra.mxu0 0.0
    %1749 = vmatprep.subr.mxu0 0.0
    %1750 = vmatpush2.xpose.msra.mxu0 0.0
    %1751 = vmatprep.subr.mxu0 0.0
    %1752 = vmatpush2.xpose.msra.mxu0 0.0
    %1753 = vmatprep.subr.mxu0 0.0
    %1754 = vmatpush2.xpose.msra.mxu0 0.0
    %1755 = vmatprep.subr.mxu0 0.0
    %1756 = vmatpush2.xpose.msra.mxu0 0.0
    %1757 = vmatprep.subr.mxu0 0.0
    %1758 = vmatpush2.xpose.msra.mxu0 0.0
    %1759 = vmatprep.subr.mxu0 0.0
    %1760 = vmatpush2.xpose.msra.mxu0 0.0
    %1761 = vmatprep.subr.mxu0 0.0
    %1762 = vmatpush2.xpose.msra.mxu0 0.0
    %1763 = vmatprep.subr.mxu0 0.0
    %1764 = vmatpush2.xpose.msra.mxu0 0.0
    %1765 = vmatprep.subr.mxu0 0.0
    %1766 = vmatpush2.xpose.msra.mxu0 0.0
    %1767 = vmatprep.subr.mxu0 0.0
    %1768 = vmatpush2.xpose.msra.mxu0 0.0
    %1769 = vmatprep.subr.mxu0 0.0
    %1770 = vmatpush2.xpose.msra.mxu0 0.0
    %1771 = vmatprep.subr.mxu0 0.0
    %1772 = vmatpush2.xpose.msra.mxu0 0.0
    %1773 = vmatprep.mubr.f32.mxu0 0.0
    %1774 = vmatmul.mubr.f32.gmra.mxu0 %v1557
    %v1775 = vpop.f32.mrf.mxu0
    %v1776 = vadd.f32 0.0, %v1775
    %v1777 = vpop.f32.mrf.mxu0
    %1778 = vdwg.mxu0
    %1779 = vrot.lane.b32.xlu0 %v233, 96
    %v1780 = vpop.permute.xlu0 %1779
    %v1781 = vsel %vm239, %v1780, 0
    %1783 = vmatprep.subr.mxu0 0.0
    %1784 = vmatpush1.xpose.msra.mxu0 0.0
    %1785 = vmatprep.subr.mxu0 0.0
    %1786 = vmatpush1.xpose.msra.mxu0 0.0
    %1787 = vmatprep.subr.mxu0 0.0
    %1788 = vmatpush1.xpose.msra.mxu0 0.0
    %1789 = vmatprep.subr.mxu0 0.0
    %1790 = vmatpush1.xpose.msra.mxu0 0.0
    %1791 = vmatprep.subr.mxu0 0.0
    %1792 = vmatpush1.xpose.msra.mxu0 0.0
    %1793 = vmatprep.subr.mxu0 0.0
    %1794 = vmatpush1.xpose.msra.mxu0 0.0
    %1795 = vmatprep.subr.mxu0 0.0
    %1796 = vmatpush1.xpose.msra.mxu0 0.0
    %1797 = vmatprep.subr.mxu0 0.0
    %1798 = vmatpush1.xpose.msra.mxu0 0.0
    %1799 = vmatprep.subr.mxu0 0.0
    %1800 = vmatpush1.xpose.msra.mxu0 0.0
    %1801 = vmatprep.subr.mxu0 0.0
    %1802 = vmatpush1.xpose.msra.mxu0 0.0
    %1803 = vmatprep.subr.mxu0 0.0
    %1804 = vmatpush1.xpose.msra.mxu0 0.0
    %1805 = vmatprep.subr.mxu0 0.0
    %1806 = vmatpush1.xpose.msra.mxu0 0.0
    %1807 = vmatprep.subr.mxu0 0.0
    %1808 = vmatpush1.xpose.msra.mxu0 0.0
    %1809 = vmatprep.subr.mxu0 0.0
    %1810 = vmatpush1.xpose.msra.mxu0 0.0
    %1811 = vmatprep.subr.mxu0 0.0
    %1812 = vmatpush1.xpose.msra.mxu0 0.0
    %1813 = vmatprep.subr.mxu0 0.0
    %1814 = vmatpush1.xpose.msra.mxu0 %v1781
    %1815 = vmatprep.subr.mxu0 0.0
    %1816 = vmatpush2.xpose.msra.mxu0 0.0
    %1817 = vmatprep.subr.mxu0 0.0
    %1818 = vmatpush2.xpose.msra.mxu0 0.0
    %1819 = vmatprep.subr.mxu0 0.0
    %1820 = vmatpush2.xpose.msra.mxu0 0.0
    %1821 = vmatprep.subr.mxu0 0.0
    %1822 = vmatpush2.xpose.msra.mxu0 0.0
    %1823 = vmatprep.subr.mxu0 0.0
    %1824 = vmatpush2.xpose.msra.mxu0 0.0
    %1825 = vmatprep.subr.mxu0 0.0
    %1826 = vmatpush2.xpose.msra.mxu0 0.0
    %1827 = vmatprep.subr.mxu0 0.0
    %1828 = vmatpush2.xpose.msra.mxu0 0.0
    %1829 = vmatprep.subr.mxu0 0.0
    %1830 = vmatpush2.xpose.msra.mxu0 0.0
    %1831 = vmatprep.subr.mxu0 0.0
    %1832 = vmatpush2.xpose.msra.mxu0 0.0
    %1833 = vmatprep.subr.mxu0 0.0
    %1834 = vmatpush2.xpose.msra.mxu0 0.0
    %1835 = vmatprep.subr.mxu0 0.0
    %1836 = vmatpush2.xpose.msra.mxu0 0.0
    %1837 = vmatprep.subr.mxu0 0.0
    %1838 = vmatpush2.xpose.msra.mxu0 0.0
    %1839 = vmatprep.subr.mxu0 0.0
    %1840 = vmatpush2.xpose.msra.mxu0 0.0
    %1841 = vmatprep.subr.mxu0 0.0
    %1842 = vmatpush2.xpose.msra.mxu0 0.0
    %1843 = vmatprep.subr.mxu0 0.0
    %1844 = vmatpush2.xpose.msra.mxu0 0.0
    %1845 = vmatprep.subr.mxu0 0.0
    %1846 = vmatpush2.xpose.msra.mxu0 0.0
    %1847 = vmatprep.mubr.f32.mxu0 0.0
    %1848 = vmatmul.mubr.f32.gmra.mxu0 %v1557
    %v1849 = vpop.f32.mrf.mxu0
    %v1850 = vadd.f32 0.0, %v1849
    %v1851 = vpop.f32.mrf.mxu0
    %1852 = vdwg.mxu0
    %1853 = vrot.lane.b32.xlu0 %v234, 96
    %v1854 = vpop.permute.xlu0 %1853
    %v1855 = vsel %vm239, %v1854, 0
    %1857 = vmatprep.subr.mxu0 0.0
    %1858 = vmatpush1.xpose.msra.mxu0 0.0
    %1859 = vmatprep.subr.mxu0 0.0
    %1860 = vmatpush1.xpose.msra.mxu0 0.0
    %1861 = vmatprep.subr.mxu0 0.0
    %1862 = vmatpush1.xpose.msra.mxu0 0.0
    %1863 = vmatprep.subr.mxu0 0.0
    %1864 = vmatpush1.xpose.msra.mxu0 0.0
    %1865 = vmatprep.subr.mxu0 0.0
    %1866 = vmatpush1.xpose.msra.mxu0 0.0
    %1867 = vmatprep.subr.mxu0 0.0
    %1868 = vmatpush1.xpose.msra.mxu0 0.0
    %1869 = vmatprep.subr.mxu0 0.0
    %1870 = vmatpush1.xpose.msra.mxu0 0.0
    %1871 = vmatprep.subr.mxu0 0.0
    %1872 = vmatpush1.xpose.msra.mxu0 0.0
    %1873 = vmatprep.subr.mxu0 0.0
    %1874 = vmatpush1.xpose.msra.mxu0 0.0
    %1875 = vmatprep.subr.mxu0 0.0
    %1876 = vmatpush1.xpose.msra.mxu0 0.0
    %1877 = vmatprep.subr.mxu0 0.0
    %1878 = vmatpush1.xpose.msra.mxu0 0.0
    %1879 = vmatprep.subr.mxu0 0.0
    %1880 = vmatpush1.xpose.msra.mxu0 0.0
    %1881 = vmatprep.subr.mxu0 0.0
    %1882 = vmatpush1.xpose.msra.mxu0 0.0
    %1883 = vmatprep.subr.mxu0 0.0
    %1884 = vmatpush1.xpose.msra.mxu0 0.0
    %1885 = vmatprep.subr.mxu0 0.0
    %1886 = vmatpush1.xpose.msra.mxu0 0.0
    %1887 = vmatprep.subr.mxu0 0.0
    %1888 = vmatpush1.xpose.msra.mxu0 %v1855
    %1889 = vmatprep.subr.mxu0 0.0
    %1890 = vmatpush2.xpose.msra.mxu0 0.0
    %1891 = vmatprep.subr.mxu0 0.0
    %1892 = vmatpush2.xpose.msra.mxu0 0.0
    %1893 = vmatprep.subr.mxu0 0.0
    %1894 = vmatpush2.xpose.msra.mxu0 0.0
    %1895 = vmatprep.subr.mxu0 0.0
    %1896 = vmatpush2.xpose.msra.mxu0 0.0
    %1897 = vmatprep.subr.mxu0 0.0
    %1898 = vmatpush2.xpose.msra.mxu0 0.0
    %1899 = vmatprep.subr.mxu0 0.0
    %1900 = vmatpush2.xpose.msra.mxu0 0.0
    %1901 = vmatprep.subr.mxu0 0.0
    %1902 = vmatpush2.xpose.msra.mxu0 0.0
    %1903 = vmatprep.subr.mxu0 0.0
    %1904 = vmatpush2.xpose.msra.mxu0 0.0
    %1905 = vmatprep.subr.mxu0 0.0
    %1906 = vmatpush2.xpose.msra.mxu0 0.0
    %1907 = vmatprep.subr.mxu0 0.0
    %1908 = vmatpush2.xpose.msra.mxu0 0.0
    %1909 = vmatprep.subr.mxu0 0.0
    %1910 = vmatpush2.xpose.msra.mxu0 0.0
    %1911 = vmatprep.subr.mxu0 0.0
    %1912 = vmatpush2.xpose.msra.mxu0 0.0
    %1913 = vmatprep.subr.mxu0 0.0
    %1914 = vmatpush2.xpose.msra.mxu0 0.0
    %1915 = vmatprep.subr.mxu0 0.0
    %1916 = vmatpush2.xpose.msra.mxu0 0.0
    %1917 = vmatprep.subr.mxu0 0.0
    %1918 = vmatpush2.xpose.msra.mxu0 0.0
    %1919 = vmatprep.subr.mxu0 0.0
    %1920 = vmatpush2.xpose.msra.mxu0 0.0
    %1921 = vmatprep.mubr.f32.mxu0 0.0
    %1922 = vmatmul.mubr.f32.gmra.mxu0 %v1557
    %v1923 = vpop.f32.mrf.mxu0
    %v1924 = vadd.f32 0.0, %v1923
    %v1925 = vpop.f32.mrf.mxu0
    %1926 = vdwg.mxu0
    %1927 = vrot.lane.b32.xlu0 %v235, 96
    %v1928 = vpop.permute.xlu0 %1927
    %v1929 = vsel %vm239, %v1928, 0
    %1931 = vmatprep.subr.mxu0 0.0
    %1932 = vmatpush1.xpose.msra.mxu0 0.0
    %1933 = vmatprep.subr.mxu0 0.0
    %1934 = vmatpush1.xpose.msra.mxu0 0.0
    %1935 = vmatprep.subr.mxu0 0.0
    %1936 = vmatpush1.xpose.msra.mxu0 0.0
    %1937 = vmatprep.subr.mxu0 0.0
    %1938 = vmatpush1.xpose.msra.mxu0 0.0
    %1939 = vmatprep.subr.mxu0 0.0
    %1940 = vmatpush1.xpose.msra.mxu0 0.0
    %1941 = vmatprep.subr.mxu0 0.0
    %1942 = vmatpush1.xpose.msra.mxu0 0.0
    %1943 = vmatprep.subr.mxu0 0.0
    %1944 = vmatpush1.xpose.msra.mxu0 0.0
    %1945 = vmatprep.subr.mxu0 0.0
    %1946 = vmatpush1.xpose.msra.mxu0 0.0
    %1947 = vmatprep.subr.mxu0 0.0
    %1948 = vmatpush1.xpose.msra.mxu0 0.0
    %1949 = vmatprep.subr.mxu0 0.0
    %1950 = vmatpush1.xpose.msra.mxu0 0.0
    %1951 = vmatprep.subr.mxu0 0.0
    %1952 = vmatpush1.xpose.msra.mxu0 0.0
    %1953 = vmatprep.subr.mxu0 0.0
    %1954 = vmatpush1.xpose.msra.mxu0 0.0
    %1955 = vmatprep.subr.mxu0 0.0
    %1956 = vmatpush1.xpose.msra.mxu0 0.0
    %1957 = vmatprep.subr.mxu0 0.0
    %1958 = vmatpush1.xpose.msra.mxu0 0.0
    %1959 = vmatprep.subr.mxu0 0.0
    %1960 = vmatpush1.xpose.msra.mxu0 0.0
    %1961 = vmatprep.subr.mxu0 0.0
    %1962 = vmatpush1.xpose.msra.mxu0 %v1929
    %1963 = vmatprep.subr.mxu0 0.0
    %1964 = vmatpush2.xpose.msra.mxu0 0.0
    %1965 = vmatprep.subr.mxu0 0.0
    %1966 = vmatpush2.xpose.msra.mxu0 0.0
    %1967 = vmatprep.subr.mxu0 0.0
    %1968 = vmatpush2.xpose.msra.mxu0 0.0
    %1969 = vmatprep.subr.mxu0 0.0
    %1970 = vmatpush2.xpose.msra.mxu0 0.0
    %1971 = vmatprep.subr.mxu0 0.0
    %1972 = vmatpush2.xpose.msra.mxu0 0.0
    %1973 = vmatprep.subr.mxu0 0.0
    %1974 = vmatpush2.xpose.msra.mxu0 0.0
    %1975 = vmatprep.subr.mxu0 0.0
    %1976 = vmatpush2.xpose.msra.mxu0 0.0
    %1977 = vmatprep.subr.mxu0 0.0
    %1978 = vmatpush2.xpose.msra.mxu0 0.0
    %1979 = vmatprep.subr.mxu0 0.0
    %1980 = vmatpush2.xpose.msra.mxu0 0.0
    %1981 = vmatprep.subr.mxu0 0.0
    %1982 = vmatpush2.xpose.msra.mxu0 0.0
    %1983 = vmatprep.subr.mxu0 0.0
    %1984 = vmatpush2.xpose.msra.mxu0 0.0
    %1985 = vmatprep.subr.mxu0 0.0
    %1986 = vmatpush2.xpose.msra.mxu0 0.0
    %1987 = vmatprep.subr.mxu0 0.0
    %1988 = vmatpush2.xpose.msra.mxu0 0.0
    %1989 = vmatprep.subr.mxu0 0.0
    %1990 = vmatpush2.xpose.msra.mxu0 0.0
    %1991 = vmatprep.subr.mxu0 0.0
    %1992 = vmatpush2.xpose.msra.mxu0 0.0
    %1993 = vmatprep.subr.mxu0 0.0
    %1994 = vmatpush2.xpose.msra.mxu0 0.0
    %1995 = vmatprep.mubr.f32.mxu0 0.0
    %1996 = vmatmul.mubr.f32.gmra.mxu0 %v1557
    %v1997 = vpop.f32.mrf.mxu0
    %v1998 = vadd.f32 0.0, %v1997
    %v1999 = vpop.f32.mrf.mxu0
    %2000 = vdwg.mxu0
    %2001 = vrot.lane.b32.xlu0 %v236, 96
    %v2002 = vpop.permute.xlu0 %2001
    %v2003 = vsel %vm239, %v2002, 0
    %2005 = vmatprep.subr.mxu0 0.0
    %2006 = vmatpush1.xpose.msra.mxu0 0.0
    %2007 = vmatprep.subr.mxu0 0.0
    %2008 = vmatpush1.xpose.msra.mxu0 0.0
    %2009 = vmatprep.subr.mxu0 0.0
    %2010 = vmatpush1.xpose.msra.mxu0 0.0
    %2011 = vmatprep.subr.mxu0 0.0
    %2012 = vmatpush1.xpose.msra.mxu0 0.0
    %2013 = vmatprep.subr.mxu0 0.0
    %2014 = vmatpush1.xpose.msra.mxu0 0.0
    %2015 = vmatprep.subr.mxu0 0.0
    %2016 = vmatpush1.xpose.msra.mxu0 0.0
    %2017 = vmatprep.subr.mxu0 0.0
    %2018 = vmatpush1.xpose.msra.mxu0 0.0
    %2019 = vmatprep.subr.mxu0 0.0
    %2020 = vmatpush1.xpose.msra.mxu0 0.0
    %2021 = vmatprep.subr.mxu0 0.0
    %2022 = vmatpush1.xpose.msra.mxu0 0.0
    %2023 = vmatprep.subr.mxu0 0.0
    %2024 = vmatpush1.xpose.msra.mxu0 0.0
    %2025 = vmatprep.subr.mxu0 0.0
    %2026 = vmatpush1.xpose.msra.mxu0 0.0
    %2027 = vmatprep.subr.mxu0 0.0
    %2028 = vmatpush1.xpose.msra.mxu0 0.0
    %2029 = vmatprep.subr.mxu0 0.0
    %2030 = vmatpush1.xpose.msra.mxu0 0.0
    %2031 = vmatprep.subr.mxu0 0.0
    %2032 = vmatpush1.xpose.msra.mxu0 0.0
    %2033 = vmatprep.subr.mxu0 0.0
    %2034 = vmatpush1.xpose.msra.mxu0 0.0
    %2035 = vmatprep.subr.mxu0 0.0
    %2036 = vmatpush1.xpose.msra.mxu0 %v2003
    %2037 = vmatprep.subr.mxu0 0.0
    %2038 = vmatpush2.xpose.msra.mxu0 0.0
    %2039 = vmatprep.subr.mxu0 0.0
    %2040 = vmatpush2.xpose.msra.mxu0 0.0
    %2041 = vmatprep.subr.mxu0 0.0
    %2042 = vmatpush2.xpose.msra.mxu0 0.0
    %2043 = vmatprep.subr.mxu0 0.0
    %2044 = vmatpush2.xpose.msra.mxu0 0.0
    %2045 = vmatprep.subr.mxu0 0.0
    %2046 = vmatpush2.xpose.msra.mxu0 0.0
    %2047 = vmatprep.subr.mxu0 0.0
    %2048 = vmatpush2.xpose.msra.mxu0 0.0
    %2049 = vmatprep.subr.mxu0 0.0
    %2050 = vmatpush2.xpose.msra.mxu0 0.0
    %2051 = vmatprep.subr.mxu0 0.0
    %2052 = vmatpush2.xpose.msra.mxu0 0.0
    %2053 = vmatprep.subr.mxu0 0.0
    %2054 = vmatpush2.xpose.msra.mxu0 0.0
    %2055 = vmatprep.subr.mxu0 0.0
    %2056 = vmatpush2.xpose.msra.mxu0 0.0
    %2057 = vmatprep.subr.mxu0 0.0
    %2058 = vmatpush2.xpose.msra.mxu0 0.0
    %2059 = vmatprep.subr.mxu0 0.0
    %2060 = vmatpush2.xpose.msra.mxu0 0.0
    %2061 = vmatprep.subr.mxu0 0.0
    %2062 = vmatpush2.xpose.msra.mxu0 0.0
    %2063 = vmatprep.subr.mxu0 0.0
    %2064 = vmatpush2.xpose.msra.mxu0 0.0
    %2065 = vmatprep.subr.mxu0 0.0
    %2066 = vmatpush2.xpose.msra.mxu0 0.0
    %2067 = vmatprep.subr.mxu0 0.0
    %2068 = vmatpush2.xpose.msra.mxu0 0.0
    %2069 = vmatprep.mubr.f32.mxu0 0.0
    %2070 = vmatmul.mubr.f32.gmra.mxu0 %v1557
    %v2071 = vpop.f32.mrf.mxu0
    %v2072 = vadd.f32 0.0, %v2071
    %v2073 = vpop.f32.mrf.mxu0
    %2074 = vdwg.mxu0
    %2075 = vrot.lane.b32.xlu0 %v237, 96
    %v2076 = vpop.permute.xlu0 %2075
    %v2077 = vsel %vm239, %v2076, 0
    %2079 = vmatprep.subr.mxu0 0.0
    %2080 = vmatpush1.xpose.msra.mxu0 0.0
    %2081 = vmatprep.subr.mxu0 0.0
    %2082 = vmatpush1.xpose.msra.mxu0 0.0
    %2083 = vmatprep.subr.mxu0 0.0
    %2084 = vmatpush1.xpose.msra.mxu0 0.0
    %2085 = vmatprep.subr.mxu0 0.0
    %2086 = vmatpush1.xpose.msra.mxu0 0.0
    %2087 = vmatprep.subr.mxu0 0.0
    %2088 = vmatpush1.xpose.msra.mxu0 0.0
    %2089 = vmatprep.subr.mxu0 0.0
    %2090 = vmatpush1.xpose.msra.mxu0 0.0
    %2091 = vmatprep.subr.mxu0 0.0
    %2092 = vmatpush1.xpose.msra.mxu0 0.0
    %2093 = vmatprep.subr.mxu0 0.0
    %2094 = vmatpush1.xpose.msra.mxu0 0.0
    %2095 = vmatprep.subr.mxu0 0.0
    %2096 = vmatpush1.xpose.msra.mxu0 0.0
    %2097 = vmatprep.subr.mxu0 0.0
    %2098 = vmatpush1.xpose.msra.mxu0 0.0
    %2099 = vmatprep.subr.mxu0 0.0
    %2100 = vmatpush1.xpose.msra.mxu0 0.0
    %2101 = vmatprep.subr.mxu0 0.0
    %2102 = vmatpush1.xpose.msra.mxu0 0.0
    %2103 = vmatprep.subr.mxu0 0.0
    %2104 = vmatpush1.xpose.msra.mxu0 0.0
    %2105 = vmatprep.subr.mxu0 0.0
    %2106 = vmatpush1.xpose.msra.mxu0 0.0
    %2107 = vmatprep.subr.mxu0 0.0
    %2108 = vmatpush1.xpose.msra.mxu0 0.0
    %2109 = vmatprep.subr.mxu0 0.0
    %2110 = vmatpush1.xpose.msra.mxu0 %v2077
    %2111 = vmatprep.subr.mxu0 0.0
    %2112 = vmatpush2.xpose.msra.mxu0 0.0
    %2113 = vmatprep.subr.mxu0 0.0
    %2114 = vmatpush2.xpose.msra.mxu0 0.0
    %2115 = vmatprep.subr.mxu0 0.0
    %2116 = vmatpush2.xpose.msra.mxu0 0.0
    %2117 = vmatprep.subr.mxu0 0.0
    %2118 = vmatpush2.xpose.msra.mxu0 0.0
    %2119 = vmatprep.subr.mxu0 0.0
    %2120 = vmatpush2.xpose.msra.mxu0 0.0
    %2121 = vmatprep.subr.mxu0 0.0
    %2122 = vmatpush2.xpose.msra.mxu0 0.0
    %2123 = vmatprep.subr.mxu0 0.0
    %2124 = vmatpush2.xpose.msra.mxu0 0.0
    %2125 = vmatprep.subr.mxu0 0.0
    %2126 = vmatpush2.xpose.msra.mxu0 0.0
    %2127 = vmatprep.subr.mxu0 0.0
    %2128 = vmatpush2.xpose.msra.mxu0 0.0
    %2129 = vmatprep.subr.mxu0 0.0
    %2130 = vmatpush2.xpose.msra.mxu0 0.0
    %2131 = vmatprep.subr.mxu0 0.0
    %2132 = vmatpush2.xpose.msra.mxu0 0.0
    %2133 = vmatprep.subr.mxu0 0.0
    %2134 = vmatpush2.xpose.msra.mxu0 0.0
    %2135 = vmatprep.subr.mxu0 0.0
    %2136 = vmatpush2.xpose.msra.mxu0 0.0
    %2137 = vmatprep.subr.mxu0 0.0
    %2138 = vmatpush2.xpose.msra.mxu0 0.0
    %2139 = vmatprep.subr.mxu0 0.0
    %2140 = vmatpush2.xpose.msra.mxu0 0.0
    %2141 = vmatprep.subr.mxu0 0.0
    %2142 = vmatpush2.xpose.msra.mxu0 0.0
    %2143 = vmatprep.mubr.f32.mxu0 0.0
    %2144 = vmatmul.mubr.f32.gmra.mxu0 %v1557
    %v2145 = vpop.f32.mrf.mxu0
    %v2146 = vadd.f32 0.0, %v2145
    %v2147 = vpop.f32.mrf.mxu0
    %2148 = vdwg.mxu0
    %v2149 = vsel %vm819, %v1628, -inf
    %2150 = vmax.xlane.f32.xlu0 %v2149
    %v2151 = vpop.xlane.xlu0 %2150
    %v2152 = vsel %vm819, %v1702, -inf
    %2153 = vmax.xlane.f32.xlu0 %v2152
    %v2154 = vpop.xlane.xlu0 %2153
    %v2155 = vsel %vm819, %v1776, -inf
    %2156 = vmax.xlane.f32.xlu0 %v2155
    %v2157 = vpop.xlane.xlu0 %2156
    %v2158 = vsel %vm819, %v1850, -inf
    %2159 = vmax.xlane.f32.xlu0 %v2158
    %v2160 = vpop.xlane.xlu0 %2159
    %v2161 = vsel %vm819, %v1924, -inf
    %2162 = vmax.xlane.f32.xlu0 %v2161
    %v2163 = vpop.xlane.xlu0 %2162
    %v2164 = vsel %vm819, %v1998, -inf
    %2165 = vmax.xlane.f32.xlu0 %v2164
    %v2166 = vpop.xlane.xlu0 %2165
    %v2167 = vsel %vm819, %v2072, -inf
    %2168 = vmax.xlane.f32.xlu0 %v2167
    %v2169 = vpop.xlane.xlu0 %2168
    %v2170 = vsel %vm819, %v2146, -inf
    %2171 = vmax.xlane.f32.xlu0 %v2170
    %v2172 = vpop.xlane.xlu0 %2171
    %v2173 = vsub.f32 %v1628, %v2151
    %v2174 = vsub.f32 %v1702, %v2154
    %v2175 = vsub.f32 %v1776, %v2157
    %v2176 = vsub.f32 %v1850, %v2160
    %v2177 = vsub.f32 %v1924, %v2163
    %v2178 = vsub.f32 %v1998, %v2166
    %v2179 = vsub.f32 %v2072, %v2169
    %v2180 = vsub.f32 %v2146, %v2172
    %v2181 = vmul.f32 %v2173, 1.442695
    %v2182 = vpow.pop %v2181
    %v2183 = vmul.f32 %v2174, 1.442695
    %v2184 = vpow.pop %v2183
    %v2185 = vmul.f32 %v2175, 1.442695
    %v2186 = vpow.pop %v2185
    %v2187 = vmul.f32 %v2176, 1.442695
    %v2188 = vpow.pop %v2187
    %v2189 = vmul.f32 %v2177, 1.442695
    %v2190 = vpow.pop %v2189
    %v2191 = vmul.f32 %v2178, 1.442695
    %v2192 = vpow.pop %v2191
    %v2193 = vmul.f32 %v2179, 1.442695
    %v2194 = vpow.pop %v2193
    %v2195 = vmul.f32 %v2180, 1.442695
    %v2196 = vpow.pop %v2195
    %v2197 = vsel %vm819, %v2182, 0.0
    %2198 = vadd.xlane.f32.xlu0 %v2197
    %v2199 = vpop.xlane.xlu0 %2198
    %v2200 = vsel %vm819, %v2184, 0.0
    %2201 = vadd.xlane.f32.xlu0 %v2200
    %v2202 = vpop.xlane.xlu0 %2201
    %v2203 = vsel %vm819, %v2186, 0.0
    %2204 = vadd.xlane.f32.xlu0 %v2203
    %v2205 = vpop.xlane.xlu0 %2204
    %v2206 = vsel %vm819, %v2188, 0.0
    %2207 = vadd.xlane.f32.xlu0 %v2206
    %v2208 = vpop.xlane.xlu0 %2207
    %v2209 = vsel %vm819, %v2190, 0.0
    %2210 = vadd.xlane.f32.xlu0 %v2209
    %v2211 = vpop.xlane.xlu0 %2210
    %v2212 = vsel %vm819, %v2192, 0.0
    %2213 = vadd.xlane.f32.xlu0 %v2212
    %v2214 = vpop.xlane.xlu0 %2213
    %v2215 = vsel %vm819, %v2194, 0.0
    %2216 = vadd.xlane.f32.xlu0 %v2215
    %v2217 = vpop.xlane.xlu0 %2216
    %v2218 = vsel %vm819, %v2196, 0.0
    %2219 = vadd.xlane.f32.xlu0 %v2218
    %v2220 = vpop.xlane.xlu0 %2219
    %v2221 = vrcp.pop %v2199
    %v2222 = vmul.f32 %v2182, %v2221
    %v2223 = vrcp.pop %v2202
    %v2224 = vmul.f32 %v2184, %v2223
    %v2225 = vrcp.pop %v2205
    %v2226 = vmul.f32 %v2186, %v2225
    %v2227 = vrcp.pop %v2208
    %v2228 = vmul.f32 %v2188, %v2227
    %v2229 = vrcp.pop %v2211
    %v2230 = vmul.f32 %v2190, %v2229
    %v2231 = vrcp.pop %v2214
    %v2232 = vmul.f32 %v2192, %v2231
    %v2233 = vrcp.pop %v2217
    %v2234 = vmul.f32 %v2194, %v2233
    %v2235 = vrcp.pop %v2220
    %v2236 = vmul.f32 %v2196, %v2235
    %v2237 = vrot.slane %v1556, 4
    %v2239 = vsel %vm909, %v2222, 0
    %v2241 = vsel %vm913, %v2237, 0
    %2243 = vmatprep.subr.mxu0 0.0
    %2244 = vmatpush1.msra.mxu0 0.0
    %2245 = vmatprep.subr.mxu0 0.0
    %2246 = vmatpush1.msra.mxu0 0.0
    %2247 = vmatprep.subr.mxu0 0.0
    %2248 = vmatpush1.msra.mxu0 0.0
    %2249 = vmatprep.subr.mxu0 0.0
    %2250 = vmatpush1.msra.mxu0 0.0
    %2251 = vmatprep.subr.mxu0 0.0
    %2252 = vmatpush1.msra.mxu0 0.0
    %2253 = vmatprep.subr.mxu0 0.0
    %2254 = vmatpush1.msra.mxu0 0.0
    %2255 = vmatprep.subr.mxu0 0.0
    %2256 = vmatpush1.msra.mxu0 0.0
    %2257 = vmatprep.subr.mxu0 0.0
    %2258 = vmatpush1.msra.mxu0 0.0
    %2259 = vmatprep.subr.mxu0 0.0
    %2260 = vmatpush1.msra.mxu0 0.0
    %2261 = vmatprep.subr.mxu0 0.0
    %2262 = vmatpush1.msra.mxu0 0.0
    %2263 = vmatprep.subr.mxu0 0.0
    %2264 = vmatpush1.msra.mxu0 0.0
    %2265 = vmatprep.subr.mxu0 0.0
    %2266 = vmatpush1.msra.mxu0 0.0
    %2267 = vmatprep.subr.mxu0 0.0
    %2268 = vmatpush1.msra.mxu0 0.0
    %2269 = vmatprep.subr.mxu0 0.0
    %2270 = vmatpush1.msra.mxu0 0.0
    %2271 = vmatprep.subr.mxu0 0.0
    %2272 = vmatpush1.msra.mxu0 0.0
    %2273 = vmatprep.subr.mxu0 0.0
    %2274 = vmatpush1.msra.mxu0 %v2241
    %2275 = vmatprep.subr.mxu0 0.0
    %2276 = vmatpush2.msra.mxu0 0.0
    %2277 = vmatprep.subr.mxu0 0.0
    %2278 = vmatpush2.msra.mxu0 0.0
    %2279 = vmatprep.subr.mxu0 0.0
    %2280 = vmatpush2.msra.mxu0 0.0
    %2281 = vmatprep.subr.mxu0 0.0
    %2282 = vmatpush2.msra.mxu0 0.0
    %2283 = vmatprep.subr.mxu0 0.0
    %2284 = vmatpush2.msra.mxu0 0.0
    %2285 = vmatprep.subr.mxu0 0.0
    %2286 = vmatpush2.msra.mxu0 0.0
    %2287 = vmatprep.subr.mxu0 0.0
    %2288 = vmatpush2.msra.mxu0 0.0
    %2289 = vmatprep.subr.mxu0 0.0
    %2290 = vmatpush2.msra.mxu0 0.0
    %2291 = vmatprep.subr.mxu0 0.0
    %2292 = vmatpush2.msra.mxu0 0.0
    %2293 = vmatprep.subr.mxu0 0.0
    %2294 = vmatpush2.msra.mxu0 0.0
    %2295 = vmatprep.subr.mxu0 0.0
    %2296 = vmatpush2.msra.mxu0 0.0
    %2297 = vmatprep.subr.mxu0 0.0
    %2298 = vmatpush2.msra.mxu0 0.0
    %2299 = vmatprep.subr.mxu0 0.0
    %2300 = vmatpush2.msra.mxu0 0.0
    %2301 = vmatprep.subr.mxu0 0.0
    %2302 = vmatpush2.msra.mxu0 0.0
    %2303 = vmatprep.subr.mxu0 0.0
    %2304 = vmatpush2.msra.mxu0 0.0
    %2305 = vmatprep.subr.mxu0 0.0
    %2306 = vmatpush2.msra.mxu0 0.0
    %2307 = vmatprep.mubr.f32.mxu0 0.0
    %2308 = vmatmul.mubr.f32.gmra.mxu0 %v2239
    %v2309 = vpop.f32.mrf.mxu0
    %v2310 = vadd.f32 0.0, %v2309
    %v2311 = vpop.f32.mrf.mxu0
    %2312 = vdwg.mxu0
    %v2313 = vrot.slane %v1632, 4
    %v2315 = vsel %vm909, %v2224, 0
    %v2317 = vsel %vm913, %v2313, 0
    %2319 = vmatprep.subr.mxu0 0.0
    %2320 = vmatpush1.msra.mxu0 0.0
    %2321 = vmatprep.subr.mxu0 0.0
    %2322 = vmatpush1.msra.mxu0 0.0
    %2323 = vmatprep.subr.mxu0 0.0
    %2324 = vmatpush1.msra.mxu0 0.0
    %2325 = vmatprep.subr.mxu0 0.0
    %2326 = vmatpush1.msra.mxu0 0.0
    %2327 = vmatprep.subr.mxu0 0.0
    %2328 = vmatpush1.msra.mxu0 0.0
    %2329 = vmatprep.subr.mxu0 0.0
    %2330 = vmatpush1.msra.mxu0 0.0
    %2331 = vmatprep.subr.mxu0 0.0
    %2332 = vmatpush1.msra.mxu0 0.0
    %2333 = vmatprep.subr.mxu0 0.0
    %2334 = vmatpush1.msra.mxu0 0.0
    %2335 = vmatprep.subr.mxu0 0.0
    %2336 = vmatpush1.msra.mxu0 0.0
    %2337 = vmatprep.subr.mxu0 0.0
    %2338 = vmatpush1.msra.mxu0 0.0
    %2339 = vmatprep.subr.mxu0 0.0
    %2340 = vmatpush1.msra.mxu0 0.0
    %2341 = vmatprep.subr.mxu0 0.0
    %2342 = vmatpush1.msra.mxu0 0.0
    %2343 = vmatprep.subr.mxu0 0.0
    %2344 = vmatpush1.msra.mxu0 0.0
    %2345 = vmatprep.subr.mxu0 0.0
    %2346 = vmatpush1.msra.mxu0 0.0
    %2347 = vmatprep.subr.mxu0 0.0
    %2348 = vmatpush1.msra.mxu0 0.0
    %2349 = vmatprep.subr.mxu0 0.0
    %2350 = vmatpush1.msra.mxu0 %v2317
    %2351 = vmatprep.subr.mxu0 0.0
    %2352 = vmatpush2.msra.mxu0 0.0
    %2353 = vmatprep.subr.mxu0 0.0
    %2354 = vmatpush2.msra.mxu0 0.0
    %2355 = vmatprep.subr.mxu0 0.0
    %2356 = vmatpush2.msra.mxu0 0.0
    %2357 = vmatprep.subr.mxu0 0.0
    %2358 = vmatpush2.msra.mxu0 0.0
    %2359 = vmatprep.subr.mxu0 0.0
    %2360 = vmatpush2.msra.mxu0 0.0
    %2361 = vmatprep.subr.mxu0 0.0
    %2362 = vmatpush2.msra.mxu0 0.0
    %2363 = vmatprep.subr.mxu0 0.0
    %2364 = vmatpush2.msra.mxu0 0.0
    %2365 = vmatprep.subr.mxu0 0.0
    %2366 = vmatpush2.msra.mxu0 0.0
    %2367 = vmatprep.subr.mxu0 0.0
    %2368 = vmatpush2.msra.mxu0 0.0
    %2369 = vmatprep.subr.mxu0 0.0
    %2370 = vmatpush2.msra.mxu0 0.0
    %2371 = vmatprep.subr.mxu0 0.0
    %2372 = vmatpush2.msra.mxu0 0.0
    %2373 = vmatprep.subr.mxu0 0.0
    %2374 = vmatpush2.msra.mxu0 0.0
    %2375 = vmatprep.subr.mxu0 0.0
    %2376 = vmatpush2.msra.mxu0 0.0
    %2377 = vmatprep.subr.mxu0 0.0
    %2378 = vmatpush2.msra.mxu0 0.0
    %2379 = vmatprep.subr.mxu0 0.0
    %2380 = vmatpush2.msra.mxu0 0.0
    %2381 = vmatprep.subr.mxu0 0.0
    %2382 = vmatpush2.msra.mxu0 0.0
    %2383 = vmatprep.mubr.f32.mxu0 0.0
    %2384 = vmatmul.mubr.f32.gmra.mxu0 %v2315
    %v2385 = vpop.f32.mrf.mxu0
    %v2386 = vadd.f32 0.0, %v2385
    %v2387 = vpop.f32.mrf.mxu0
    %2388 = vdwg.mxu0
    %v2389 = vrot.slane %v1706, 4
    %v2391 = vsel %vm909, %v2226, 0
    %v2393 = vsel %vm913, %v2389, 0
    %2395 = vmatprep.subr.mxu0 0.0
    %2396 = vmatpush1.msra.mxu0 0.0
    %2397 = vmatprep.subr.mxu0 0.0
    %2398 = vmatpush1.msra.mxu0 0.0
    %2399 = vmatprep.subr.mxu0 0.0
    %2400 = vmatpush1.msra.mxu0 0.0
    %2401 = vmatprep.subr.mxu0 0.0
    %2402 = vmatpush1.msra.mxu0 0.0
    %2403 = vmatprep.subr.mxu0 0.0
    %2404 = vmatpush1.msra.mxu0 0.0
    %2405 = vmatprep.subr.mxu0 0.0
    %2406 = vmatpush1.msra.mxu0 0.0
    %2407 = vmatprep.subr.mxu0 0.0
    %2408 = vmatpush1.msra.mxu0 0.0
    %2409 = vmatprep.subr.mxu0 0.0
    %2410 = vmatpush1.msra.mxu0 0.0
    %2411 = vmatprep.subr.mxu0 0.0
    %2412 = vmatpush1.msra.mxu0 0.0
    %2413 = vmatprep.subr.mxu0 0.0
    %2414 = vmatpush1.msra.mxu0 0.0
    %2415 = vmatprep.subr.mxu0 0.0
    %2416 = vmatpush1.msra.mxu0 0.0
    %2417 = vmatprep.subr.mxu0 0.0
    %2418 = vmatpush1.msra.mxu0 0.0
    %2419 = vmatprep.subr.mxu0 0.0
    %2420 = vmatpush1.msra.mxu0 0.0
    %2421 = vmatprep.subr.mxu0 0.0
    %2422 = vmatpush1.msra.mxu0 0.0
    %2423 = vmatprep.subr.mxu0 0.0
    %2424 = vmatpush1.msra.mxu0 0.0
    %2425 = vmatprep.subr.mxu0 0.0
    %2426 = vmatpush1.msra.mxu0 %v2393
    %2427 = vmatprep.subr.mxu0 0.0
    %2428 = vmatpush2.msra.mxu0 0.0
    %2429 = vmatprep.subr.mxu0 0.0
    %2430 = vmatpush2.msra.mxu0 0.0
    %2431 = vmatprep.subr.mxu0 0.0
    %2432 = vmatpush2.msra.mxu0 0.0
    %2433 = vmatprep.subr.mxu0 0.0
    %2434 = vmatpush2.msra.mxu0 0.0
    %2435 = vmatprep.subr.mxu0 0.0
    %2436 = vmatpush2.msra.mxu0 0.0
    %2437 = vmatprep.subr.mxu0 0.0
    %2438 = vmatpush2.msra.mxu0 0.0
    %2439 = vmatprep.subr.mxu0 0.0
    %2440 = vmatpush2.msra.mxu0 0.0
    %2441 = vmatprep.subr.mxu0 0.0
    %2442 = vmatpush2.msra.mxu0 0.0
    %2443 = vmatprep.subr.mxu0 0.0
    %2444 = vmatpush2.msra.mxu0 0.0
    %2445 = vmatprep.subr.mxu0 0.0
    %2446 = vmatpush2.msra.mxu0 0.0
    %2447 = vmatprep.subr.mxu0 0.0
    %2448 = vmatpush2.msra.mxu0 0.0
    %2449 = vmatprep.subr.mxu0 0.0
    %2450 = vmatpush2.msra.mxu0 0.0
    %2451 = vmatprep.subr.mxu0 0.0
    %2452 = vmatpush2.msra.mxu0 0.0
    %2453 = vmatprep.subr.mxu0 0.0
    %2454 = vmatpush2.msra.mxu0 0.0
    %2455 = vmatprep.subr.mxu0 0.0
    %2456 = vmatpush2.msra.mxu0 0.0
    %2457 = vmatprep.subr.mxu0 0.0
    %2458 = vmatpush2.msra.mxu0 0.0
    %2459 = vmatprep.mubr.f32.mxu0 0.0
    %2460 = vmatmul.mubr.f32.gmra.mxu0 %v2391
    %v2461 = vpop.f32.mrf.mxu0
    %v2462 = vadd.f32 0.0, %v2461
    %v2463 = vpop.f32.mrf.mxu0
    %2464 = vdwg.mxu0
    %v2465 = vrot.slane %v1780, 4
    %v2467 = vsel %vm909, %v2228, 0
    %v2469 = vsel %vm913, %v2465, 0
    %2471 = vmatprep.subr.mxu0 0.0
    %2472 = vmatpush1.msra.mxu0 0.0
    %2473 = vmatprep.subr.mxu0 0.0
    %2474 = vmatpush1.msra.mxu0 0.0
    %2475 = vmatprep.subr.mxu0 0.0
    %2476 = vmatpush1.msra.mxu0 0.0
    %2477 = vmatprep.subr.mxu0 0.0
    %2478 = vmatpush1.msra.mxu0 0.0
    %2479 = vmatprep.subr.mxu0 0.0
    %2480 = vmatpush1.msra.mxu0 0.0
    %2481 = vmatprep.subr.mxu0 0.0
    %2482 = vmatpush1.msra.mxu0 0.0
    %2483 = vmatprep.subr.mxu0 0.0
    %2484 = vmatpush1.msra.mxu0 0.0
    %2485 = vmatprep.subr.mxu0 0.0
    %2486 = vmatpush1.msra.mxu0 0.0
    %2487 = vmatprep.subr.mxu0 0.0
    %2488 = vmatpush1.msra.mxu0 0.0
    %2489 = vmatprep.subr.mxu0 0.0
    %2490 = vmatpush1.msra.mxu0 0.0
    %2491 = vmatprep.subr.mxu0 0.0
    %2492 = vmatpush1.msra.mxu0 0.0
    %2493 = vmatprep.subr.mxu0 0.0
    %2494 = vmatpush1.msra.mxu0 0.0
    %2495 = vmatprep.subr.mxu0 0.0
    %2496 = vmatpush1.msra.mxu0 0.0
    %2497 = vmatprep.subr.mxu0 0.0
    %2498 = vmatpush1.msra.mxu0 0.0
    %2499 = vmatprep.subr.mxu0 0.0
    %2500 = vmatpush1.msra.mxu0 0.0
    %2501 = vmatprep.subr.mxu0 0.0
    %2502 = vmatpush1.msra.mxu0 %v2469
    %2503 = vmatprep.subr.mxu0 0.0
    %2504 = vmatpush2.msra.mxu0 0.0
    %2505 = vmatprep.subr.mxu0 0.0
    %2506 = vmatpush2.msra.mxu0 0.0
    %2507 = vmatprep.subr.mxu0 0.0
    %2508 = vmatpush2.msra.mxu0 0.0
    %2509 = vmatprep.subr.mxu0 0.0
    %2510 = vmatpush2.msra.mxu0 0.0
    %2511 = vmatprep.subr.mxu0 0.0
    %2512 = vmatpush2.msra.mxu0 0.0
    %2513 = vmatprep.subr.mxu0 0.0
    %2514 = vmatpush2.msra.mxu0 0.0
    %2515 = vmatprep.subr.mxu0 0.0
    %2516 = vmatpush2.msra.mxu0 0.0
    %2517 = vmatprep.subr.mxu0 0.0
    %2518 = vmatpush2.msra.mxu0 0.0
    %2519 = vmatprep.subr.mxu0 0.0
    %2520 = vmatpush2.msra.mxu0 0.0
    %2521 = vmatprep.subr.mxu0 0.0
    %2522 = vmatpush2.msra.mxu0 0.0
    %2523 = vmatprep.subr.mxu0 0.0
    %2524 = vmatpush2.msra.mxu0 0.0
    %2525 = vmatprep.subr.mxu0 0.0
    %2526 = vmatpush2.msra.mxu0 0.0
    %2527 = vmatprep.subr.mxu0 0.0
    %2528 = vmatpush2.msra.mxu0 0.0
    %2529 = vmatprep.subr.mxu0 0.0
    %2530 = vmatpush2.msra.mxu0 0.0
    %2531 = vmatprep.subr.mxu0 0.0
    %2532 = vmatpush2.msra.mxu0 0.0
    %2533 = vmatprep.subr.mxu0 0.0
    %2534 = vmatpush2.msra.mxu0 0.0
    %2535 = vmatprep.mubr.f32.mxu0 0.0
    %2536 = vmatmul.mubr.f32.gmra.mxu0 %v2467
    %v2537 = vpop.f32.mrf.mxu0
    %v2538 = vadd.f32 0.0, %v2537
    %v2539 = vpop.f32.mrf.mxu0
    %2540 = vdwg.mxu0
    %v2541 = vrot.slane %v1854, 4
    %v2543 = vsel %vm909, %v2230, 0
    %v2545 = vsel %vm913, %v2541, 0
    %2547 = vmatprep.subr.mxu0 0.0
    %2548 = vmatpush1.msra.mxu0 0.0
    %2549 = vmatprep.subr.mxu0 0.0
    %2550 = vmatpush1.msra.mxu0 0.0
    %2551 = vmatprep.subr.mxu0 0.0
    %2552 = vmatpush1.msra.mxu0 0.0
    %2553 = vmatprep.subr.mxu0 0.0
    %2554 = vmatpush1.msra.mxu0 0.0
    %2555 = vmatprep.subr.mxu0 0.0
    %2556 = vmatpush1.msra.mxu0 0.0
    %2557 = vmatprep.subr.mxu0 0.0
    %2558 = vmatpush1.msra.mxu0 0.0
    %2559 = vmatprep.subr.mxu0 0.0
    %2560 = vmatpush1.msra.mxu0 0.0
    %2561 = vmatprep.subr.mxu0 0.0
    %2562 = vmatpush1.msra.mxu0 0.0
    %2563 = vmatprep.subr.mxu0 0.0
    %2564 = vmatpush1.msra.mxu0 0.0
    %2565 = vmatprep.subr.mxu0 0.0
    %2566 = vmatpush1.msra.mxu0 0.0
    %2567 = vmatprep.subr.mxu0 0.0
    %2568 = vmatpush1.msra.mxu0 0.0
    %2569 = vmatprep.subr.mxu0 0.0
    %2570 = vmatpush1.msra.mxu0 0.0
    %2571 = vmatprep.subr.mxu0 0.0
    %2572 = vmatpush1.msra.mxu0 0.0
    %2573 = vmatprep.subr.mxu0 0.0
    %2574 = vmatpush1.msra.mxu0 0.0
    %2575 = vmatprep.subr.mxu0 0.0
    %2576 = vmatpush1.msra.mxu0 0.0
    %2577 = vmatprep.subr.mxu0 0.0
    %2578 = vmatpush1.msra.mxu0 %v2545
    %2579 = vmatprep.subr.mxu0 0.0
    %2580 = vmatpush2.msra.mxu0 0.0
    %2581 = vmatprep.subr.mxu0 0.0
    %2582 = vmatpush2.msra.mxu0 0.0
    %2583 = vmatprep.subr.mxu0 0.0
    %2584 = vmatpush2.msra.mxu0 0.0
    %2585 = vmatprep.subr.mxu0 0.0
    %2586 = vmatpush2.msra.mxu0 0.0
    %2587 = vmatprep.subr.mxu0 0.0
    %2588 = vmatpush2.msra.mxu0 0.0
    %2589 = vmatprep.subr.mxu0 0.0
    %2590 = vmatpush2.msra.mxu0 0.0
    %2591 = vmatprep.subr.mxu0 0.0
    %2592 = vmatpush2.msra.mxu0 0.0
    %2593 = vmatprep.subr.mxu0 0.0
    %2594 = vmatpush2.msra.mxu0 0.0
    %2595 = vmatprep.subr.mxu0 0.0
    %2596 = vmatpush2.msra.mxu0 0.0
    %2597 = vmatprep.subr.mxu0 0.0
    %2598 = vmatpush2.msra.mxu0 0.0
    %2599 = vmatprep.subr.mxu0 0.0
    %2600 = vmatpush2.msra.mxu0 0.0
    %2601 = vmatprep.subr.mxu0 0.0
    %2602 = vmatpush2.msra.mxu0 0.0
    %2603 = vmatprep.subr.mxu0 0.0
    %2604 = vmatpush2.msra.mxu0 0.0
    %2605 = vmatprep.subr.mxu0 0.0
    %2606 = vmatpush2.msra.mxu0 0.0
    %2607 = vmatprep.subr.mxu0 0.0
    %2608 = vmatpush2.msra.mxu0 0.0
    %2609 = vmatprep.subr.mxu0 0.0
    %2610 = vmatpush2.msra.mxu0 0.0
    %2611 = vmatprep.mubr.f32.mxu0 0.0
    %2612 = vmatmul.mubr.f32.gmra.mxu0 %v2543
    %v2613 = vpop.f32.mrf.mxu0
    %v2614 = vadd.f32 0.0, %v2613
    %v2615 = vpop.f32.mrf.mxu0
    %2616 = vdwg.mxu0
    %v2617 = vrot.slane %v1928, 4
    %v2619 = vsel %vm909, %v2232, 0
    %v2621 = vsel %vm913, %v2617, 0
    %2623 = vmatprep.subr.mxu0 0.0
    %2624 = vmatpush1.msra.mxu0 0.0
    %2625 = vmatprep.subr.mxu0 0.0
    %2626 = vmatpush1.msra.mxu0 0.0
    %2627 = vmatprep.subr.mxu0 0.0
    %2628 = vmatpush1.msra.mxu0 0.0
    %2629 = vmatprep.subr.mxu0 0.0
    %2630 = vmatpush1.msra.mxu0 0.0
    %2631 = vmatprep.subr.mxu0 0.0
    %2632 = vmatpush1.msra.mxu0 0.0
    %2633 = vmatprep.subr.mxu0 0.0
    %2634 = vmatpush1.msra.mxu0 0.0
    %2635 = vmatprep.subr.mxu0 0.0
    %2636 = vmatpush1.msra.mxu0 0.0
    %2637 = vmatprep.subr.mxu0 0.0
    %2638 = vmatpush1.msra.mxu0 0.0
    %2639 = vmatprep.subr.mxu0 0.0
    %2640 = vmatpush1.msra.mxu0 0.0
    %2641 = vmatprep.subr.mxu0 0.0
    %2642 = vmatpush1.msra.mxu0 0.0
    %2643 = vmatprep.subr.mxu0 0.0
    %2644 = vmatpush1.msra.mxu0 0.0
    %2645 = vmatprep.subr.mxu0 0.0
    %2646 = vmatpush1.msra.mxu0 0.0
    %2647 = vmatprep.subr.mxu0 0.0
    %2648 = vmatpush1.msra.mxu0 0.0
    %2649 = vmatprep.subr.mxu0 0.0
    %2650 = vmatpush1.msra.mxu0 0.0
    %2651 = vmatprep.subr.mxu0 0.0
    %2652 = vmatpush1.msra.mxu0 0.0
    %2653 = vmatprep.subr.mxu0 0.0
    %2654 = vmatpush1.msra.mxu0 %v2621
    %2655 = vmatprep.subr.mxu0 0.0
    %2656 = vmatpush2.msra.mxu0 0.0
    %2657 = vmatprep.subr.mxu0 0.0
    %2658 = vmatpush2.msra.mxu0 0.0
    %2659 = vmatprep.subr.mxu0 0.0
    %2660 = vmatpush2.msra.mxu0 0.0
    %2661 = vmatprep.subr.mxu0 0.0
    %2662 = vmatpush2.msra.mxu0 0.0
    %2663 = vmatprep.subr.mxu0 0.0
    %2664 = vmatpush2.msra.mxu0 0.0
    %2665 = vmatprep.subr.mxu0 0.0
    %2666 = vmatpush2.msra.mxu0 0.0
    %2667 = vmatprep.subr.mxu0 0.0
    %2668 = vmatpush2.msra.mxu0 0.0
    %2669 = vmatprep.subr.mxu0 0.0
    %2670 = vmatpush2.msra.mxu0 0.0
    %2671 = vmatprep.subr.mxu0 0.0
    %2672 = vmatpush2.msra.mxu0 0.0
    %2673 = vmatprep.subr.mxu0 0.0
    %2674 = vmatpush2.msra.mxu0 0.0
    %2675 = vmatprep.subr.mxu0 0.0
    %2676 = vmatpush2.msra.mxu0 0.0
    %2677 = vmatprep.subr.mxu0 0.0
    %2678 = vmatpush2.msra.mxu0 0.0
    %2679 = vmatprep.subr.mxu0 0.0
    %2680 = vmatpush2.msra.mxu0 0.0
    %2681 = vmatprep.subr.mxu0 0.0
    %2682 = vmatpush2.msra.mxu0 0.0
    %2683 = vmatprep.subr.mxu0 0.0
    %2684 = vmatpush2.msra.mxu0 0.0
    %2685 = vmatprep.subr.mxu0 0.0
    %2686 = vmatpush2.msra.mxu0 0.0
    %2687 = vmatprep.mubr.f32.mxu0 0.0
    %2688 = vmatmul.mubr.f32.gmra.mxu0 %v2619
    %v2689 = vpop.f32.mrf.mxu0
    %v2690 = vadd.f32 0.0, %v2689
    %v2691 = vpop.f32.mrf.mxu0
    %2692 = vdwg.mxu0
    %v2693 = vrot.slane %v2002, 4
    %v2695 = vsel %vm909, %v2234, 0
    %v2697 = vsel %vm913, %v2693, 0
    %2699 = vmatprep.subr.mxu0 0.0
    %2700 = vmatpush1.msra.mxu0 0.0
    %2701 = vmatprep.subr.mxu0 0.0
    %2702 = vmatpush1.msra.mxu0 0.0
    %2703 = vmatprep.subr.mxu0 0.0
    %2704 = vmatpush1.msra.mxu0 0.0
    %2705 = vmatprep.subr.mxu0 0.0
    %2706 = vmatpush1.msra.mxu0 0.0
    %2707 = vmatprep.subr.mxu0 0.0
    %2708 = vmatpush1.msra.mxu0 0.0
    %2709 = vmatprep.subr.mxu0 0.0
    %2710 = vmatpush1.msra.mxu0 0.0
    %2711 = vmatprep.subr.mxu0 0.0
    %2712 = vmatpush1.msra.mxu0 0.0
    %2713 = vmatprep.subr.mxu0 0.0
    %2714 = vmatpush1.msra.mxu0 0.0
    %2715 = vmatprep.subr.mxu0 0.0
    %2716 = vmatpush1.msra.mxu0 0.0
    %2717 = vmatprep.subr.mxu0 0.0
    %2718 = vmatpush1.msra.mxu0 0.0
    %2719 = vmatprep.subr.mxu0 0.0
    %2720 = vmatpush1.msra.mxu0 0.0
    %2721 = vmatprep.subr.mxu0 0.0
    %2722 = vmatpush1.msra.mxu0 0.0
    %2723 = vmatprep.subr.mxu0 0.0
    %2724 = vmatpush1.msra.mxu0 0.0
    %2725 = vmatprep.subr.mxu0 0.0
    %2726 = vmatpush1.msra.mxu0 0.0
    %2727 = vmatprep.subr.mxu0 0.0
    %2728 = vmatpush1.msra.mxu0 0.0
    %2729 = vmatprep.subr.mxu0 0.0
    %2730 = vmatpush1.msra.mxu0 %v2697
    %2731 = vmatprep.subr.mxu0 0.0
    %2732 = vmatpush2.msra.mxu0 0.0
    %2733 = vmatprep.subr.mxu0 0.0
    %2734 = vmatpush2.msra.mxu0 0.0
    %2735 = vmatprep.subr.mxu0 0.0
    %2736 = vmatpush2.msra.mxu0 0.0
    %2737 = vmatprep.subr.mxu0 0.0
    %2738 = vmatpush2.msra.mxu0 0.0
    %2739 = vmatprep.subr.mxu0 0.0
    %2740 = vmatpush2.msra.mxu0 0.0
    %2741 = vmatprep.subr.mxu0 0.0
    %2742 = vmatpush2.msra.mxu0 0.0
    %2743 = vmatprep.subr.mxu0 0.0
    %2744 = vmatpush2.msra.mxu0 0.0
    %2745 = vmatprep.subr.mxu0 0.0
    %2746 = vmatpush2.msra.mxu0 0.0
    %2747 = vmatprep.subr.mxu0 0.0
    %2748 = vmatpush2.msra.mxu0 0.0
    %2749 = vmatprep.subr.mxu0 0.0
    %2750 = vmatpush2.msra.mxu0 0.0
    %2751 = vmatprep.subr.mxu0 0.0
    %2752 = vmatpush2.msra.mxu0 0.0
    %2753 = vmatprep.subr.mxu0 0.0
    %2754 = vmatpush2.msra.mxu0 0.0
    %2755 = vmatprep.subr.mxu0 0.0
    %2756 = vmatpush2.msra.mxu0 0.0
    %2757 = vmatprep.subr.mxu0 0.0
    %2758 = vmatpush2.msra.mxu0 0.0
    %2759 = vmatprep.subr.mxu0 0.0
    %2760 = vmatpush2.msra.mxu0 0.0
    %2761 = vmatprep.subr.mxu0 0.0
    %2762 = vmatpush2.msra.mxu0 0.0
    %2763 = vmatprep.mubr.f32.mxu0 0.0
    %2764 = vmatmul.mubr.f32.gmra.mxu0 %v2695
    %v2765 = vpop.f32.mrf.mxu0
    %v2766 = vadd.f32 0.0, %v2765
    %v2767 = vpop.f32.mrf.mxu0
    %2768 = vdwg.mxu0
    %v2769 = vrot.slane %v2076, 4
    %v2771 = vsel %vm909, %v2236, 0
    %v2773 = vsel %vm913, %v2769, 0
    %2775 = vmatprep.subr.mxu0 0.0
    %2776 = vmatpush1.msra.mxu0 0.0
    %2777 = vmatprep.subr.mxu0 0.0
    %2778 = vmatpush1.msra.mxu0 0.0
    %2779 = vmatprep.subr.mxu0 0.0
    %2780 = vmatpush1.msra.mxu0 0.0
    %2781 = vmatprep.subr.mxu0 0.0
    %2782 = vmatpush1.msra.mxu0 0.0
    %2783 = vmatprep.subr.mxu0 0.0
    %2784 = vmatpush1.msra.mxu0 0.0
    %2785 = vmatprep.subr.mxu0 0.0
    %2786 = vmatpush1.msra.mxu0 0.0
    %2787 = vmatprep.subr.mxu0 0.0
    %2788 = vmatpush1.msra.mxu0 0.0
    %2789 = vmatprep.subr.mxu0 0.0
    %2790 = vmatpush1.msra.mxu0 0.0
    %2791 = vmatprep.subr.mxu0 0.0
    %2792 = vmatpush1.msra.mxu0 0.0
    %2793 = vmatprep.subr.mxu0 0.0
    %2794 = vmatpush1.msra.mxu0 0.0
    %2795 = vmatprep.subr.mxu0 0.0
    %2796 = vmatpush1.msra.mxu0 0.0
    %2797 = vmatprep.subr.mxu0 0.0
    %2798 = vmatpush1.msra.mxu0 0.0
    %2799 = vmatprep.subr.mxu0 0.0
    %2800 = vmatpush1.msra.mxu0 0.0
    %2801 = vmatprep.subr.mxu0 0.0
    %2802 = vmatpush1.msra.mxu0 0.0
    %2803 = vmatprep.subr.mxu0 0.0
    %2804 = vmatpush1.msra.mxu0 0.0
    %2805 = vmatprep.subr.mxu0 0.0
    %2806 = vmatpush1.msra.mxu0 %v2773
    %2807 = vmatprep.subr.mxu0 0.0
    %2808 = vmatpush2.msra.mxu0 0.0
    %2809 = vmatprep.subr.mxu0 0.0
    %2810 = vmatpush2.msra.mxu0 0.0
    %2811 = vmatprep.subr.mxu0 0.0
    %2812 = vmatpush2.msra.mxu0 0.0
    %2813 = vmatprep.subr.mxu0 0.0
    %2814 = vmatpush2.msra.mxu0 0.0
    %2815 = vmatprep.subr.mxu0 0.0
    %2816 = vmatpush2.msra.mxu0 0.0
    %2817 = vmatprep.subr.mxu0 0.0
    %2818 = vmatpush2.msra.mxu0 0.0
    %2819 = vmatprep.subr.mxu0 0.0
    %2820 = vmatpush2.msra.mxu0 0.0
    %2821 = vmatprep.subr.mxu0 0.0
    %2822 = vmatpush2.msra.mxu0 0.0
    %2823 = vmatprep.subr.mxu0 0.0
    %2824 = vmatpush2.msra.mxu0 0.0
    %2825 = vmatprep.subr.mxu0 0.0
    %2826 = vmatpush2.msra.mxu0 0.0
    %2827 = vmatprep.subr.mxu0 0.0
    %2828 = vmatpush2.msra.mxu0 0.0
    %2829 = vmatprep.subr.mxu0 0.0
    %2830 = vmatpush2.msra.mxu0 0.0
    %2831 = vmatprep.subr.mxu0 0.0
    %2832 = vmatpush2.msra.mxu0 0.0
    %2833 = vmatprep.subr.mxu0 0.0
    %2834 = vmatpush2.msra.mxu0 0.0
    %2835 = vmatprep.subr.mxu0 0.0
    %2836 = vmatpush2.msra.mxu0 0.0
    %2837 = vmatprep.subr.mxu0 0.0
    %2838 = vmatpush2.msra.mxu0 0.0
    %2839 = vmatprep.mubr.f32.mxu0 0.0
    %2840 = vmatmul.mubr.f32.gmra.mxu0 %v2771
    %v2841 = vpop.f32.mrf.mxu0
    %v2842 = vadd.f32 0.0, %v2841
    %v2843 = vpop.f32.mrf.mxu0
    %2844 = vdwg.mxu0
    %v2853 = vrot.slane %v2386, 7
    %v2854 = vsel %vm1527, %v2853, %v2310
    %v2855 = vrot.slane %v2462, 6
    %v2856 = vsel %vm1530, %v2855, %v2854
    %v2857 = vrot.slane %v2538, 5
    %v2858 = vsel %vm1533, %v2857, %v2856
    %v2859 = vrot.slane %v2614, 4
    %v2860 = vsel %vm1536, %v2859, %v2858
    %v2861 = vrot.slane %v2690, 3
    %v2862 = vsel %vm1539, %v2861, %v2860
    %v2863 = vrot.slane %v2766, 2
    %v2864 = vsel %vm1542, %v2863, %v2862
    %v2865 = vrot.slane %v2842, 1
    %v2866 = vsel %vm1545, %v2865, %v2864
    %2867 = vrot.lane.b32.xlu0 %v2866, 32
    %v2868 = vpop.permute.xlu0 %2867
    %vm2870 = vcmask 523520
    %2871 = vst.msk [vmem:[#allocation2] sm:$0xff] %vm2870, %v2868
    %2872 = vrot.lane.b32.xlu0 %v1552, 64
    %v2873 = vpop.permute.xlu0 %2872
    %2874 = vrot.lane.b32.xlu0 %v230, 64
    %v2875 = vpop.permute.xlu0 %2874
    %v2876 = vsel %vm239, %v2873, 0
    %v2878 = vsel %vm239, %v2875, 0
    %2880 = vmatprep.subr.mxu0 0.0
    %2881 = vmatpush1.xpose.msra.mxu0 0.0
    %2882 = vmatprep.subr.mxu0 0.0
    %2883 = vmatpush1.xpose.msra.mxu0 0.0
    %2884 = vmatprep.subr.mxu0 0.0
    %2885 = vmatpush1.xpose.msra.mxu0 0.0
    %2886 = vmatprep.subr.mxu0 0.0
    %2887 = vmatpush1.xpose.msra.mxu0 0.0
    %2888 = vmatprep.subr.mxu0 0.0
    %2889 = vmatpush1.xpose.msra.mxu0 0.0
    %2890 = vmatprep.subr.mxu0 0.0
    %2891 = vmatpush1.xpose.msra.mxu0 0.0
    %2892 = vmatprep.subr.mxu0 0.0
    %2893 = vmatpush1.xpose.msra.mxu0 0.0
    %2894 = vmatprep.subr.mxu0 0.0
    %2895 = vmatpush1.xpose.msra.mxu0 0.0
    %2896 = vmatprep.subr.mxu0 0.0
    %2897 = vmatpush1.xpose.msra.mxu0 0.0
    %2898 = vmatprep.subr.mxu0 0.0
    %2899 = vmatpush1.xpose.msra.mxu0 0.0
    %2900 = vmatprep.subr.mxu0 0.0
    %2901 = vmatpush1.xpose.msra.mxu0 0.0
    %2902 = vmatprep.subr.mxu0 0.0
    %2903 = vmatpush1.xpose.msra.mxu0 0.0
    %2904 = vmatprep.subr.mxu0 0.0
    %2905 = vmatpush1.xpose.msra.mxu0 0.0
    %2906 = vmatprep.subr.mxu0 0.0
    %2907 = vmatpush1.xpose.msra.mxu0 0.0
    %2908 = vmatprep.subr.mxu0 0.0
    %2909 = vmatpush1.xpose.msra.mxu0 0.0
    %2910 = vmatprep.subr.mxu0 0.0
    %2911 = vmatpush1.xpose.msra.mxu0 %v2878
    %2912 = vmatprep.subr.mxu0 0.0
    %2913 = vmatpush2.xpose.msra.mxu0 0.0
    %2914 = vmatprep.subr.mxu0 0.0
    %2915 = vmatpush2.xpose.msra.mxu0 0.0
    %2916 = vmatprep.subr.mxu0 0.0
    %2917 = vmatpush2.xpose.msra.mxu0 0.0
    %2918 = vmatprep.subr.mxu0 0.0
    %2919 = vmatpush2.xpose.msra.mxu0 0.0
    %2920 = vmatprep.subr.mxu0 0.0
    %2921 = vmatpush2.xpose.msra.mxu0 0.0
    %2922 = vmatprep.subr.mxu0 0.0
    %2923 = vmatpush2.xpose.msra.mxu0 0.0
    %2924 = vmatprep.subr.mxu0 0.0
    %2925 = vmatpush2.xpose.msra.mxu0 0.0
    %2926 = vmatprep.subr.mxu0 0.0
    %2927 = vmatpush2.xpose.msra.mxu0 0.0
    %2928 = vmatprep.subr.mxu0 0.0
    %2929 = vmatpush2.xpose.msra.mxu0 0.0
    %2930 = vmatprep.subr.mxu0 0.0
    %2931 = vmatpush2.xpose.msra.mxu0 0.0
    %2932 = vmatprep.subr.mxu0 0.0
    %2933 = vmatpush2.xpose.msra.mxu0 0.0
    %2934 = vmatprep.subr.mxu0 0.0
    %2935 = vmatpush2.xpose.msra.mxu0 0.0
    %2936 = vmatprep.subr.mxu0 0.0
    %2937 = vmatpush2.xpose.msra.mxu0 0.0
    %2938 = vmatprep.subr.mxu0 0.0
    %2939 = vmatpush2.xpose.msra.mxu0 0.0
    %2940 = vmatprep.subr.mxu0 0.0
    %2941 = vmatpush2.xpose.msra.mxu0 0.0
    %2942 = vmatprep.subr.mxu0 0.0
    %2943 = vmatpush2.xpose.msra.mxu0 0.0
    %2944 = vmatprep.mubr.f32.mxu0 0.0
    %2945 = vmatmul.mubr.f32.gmra.mxu0 %v2876
    %v2946 = vpop.f32.mrf.mxu0
    %v2947 = vadd.f32 0.0, %v2946
    %v2948 = vpop.f32.mrf.mxu0
    %2949 = vdwg.mxu0
    %2950 = vrot.lane.b32.xlu0 %v231, 64
    %v2951 = vpop.permute.xlu0 %2950
    %v2952 = vsel %vm239, %v2951, 0
    %2954 = vmatprep.subr.mxu0 0.0
    %2955 = vmatpush1.xpose.msra.mxu0 0.0
    %2956 = vmatprep.subr.mxu0 0.0
    %2957 = vmatpush1.xpose.msra.mxu0 0.0
    %2958 = vmatprep.subr.mxu0 0.0
    %2959 = vmatpush1.xpose.msra.mxu0 0.0
    %2960 = vmatprep.subr.mxu0 0.0
    %2961 = vmatpush1.xpose.msra.mxu0 0.0
    %2962 = vmatprep.subr.mxu0 0.0
    %2963 = vmatpush1.xpose.msra.mxu0 0.0
    %2964 = vmatprep.subr.mxu0 0.0
    %2965 = vmatpush1.xpose.msra.mxu0 0.0
    %2966 = vmatprep.subr.mxu0 0.0
    %2967 = vmatpush1.xpose.msra.mxu0 0.0
    %2968 = vmatprep.subr.mxu0 0.0
    %2969 = vmatpush1.xpose.msra.mxu0 0.0
    %2970 = vmatprep.subr.mxu0 0.0
    %2971 = vmatpush1.xpose.msra.mxu0 0.0
    %2972 = vmatprep.subr.mxu0 0.0
    %2973 = vmatpush1.xpose.msra.mxu0 0.0
    %2974 = vmatprep.subr.mxu0 0.0
    %2975 = vmatpush1.xpose.msra.mxu0 0.0
    %2976 = vmatprep.subr.mxu0 0.0
    %2977 = vmatpush1.xpose.msra.mxu0 0.0
    %2978 = vmatprep.subr.mxu0 0.0
    %2979 = vmatpush1.xpose.msra.mxu0 0.0
    %2980 = vmatprep.subr.mxu0 0.0
    %2981 = vmatpush1.xpose.msra.mxu0 0.0
    %2982 = vmatprep.subr.mxu0 0.0
    %2983 = vmatpush1.xpose.msra.mxu0 0.0
    %2984 = vmatprep.subr.mxu0 0.0
    %2985 = vmatpush1.xpose.msra.mxu0 %v2952
    %2986 = vmatprep.subr.mxu0 0.0
    %2987 = vmatpush2.xpose.msra.mxu0 0.0
    %2988 = vmatprep.subr.mxu0 0.0
    %2989 = vmatpush2.xpose.msra.mxu0 0.0
    %2990 = vmatprep.subr.mxu0 0.0
    %2991 = vmatpush2.xpose.msra.mxu0 0.0
    %2992 = vmatprep.subr.mxu0 0.0
    %2993 = vmatpush2.xpose.msra.mxu0 0.0
    %2994 = vmatprep.subr.mxu0 0.0
    %2995 = vmatpush2.xpose.msra.mxu0 0.0
    %2996 = vmatprep.subr.mxu0 0.0
    %2997 = vmatpush2.xpose.msra.mxu0 0.0
    %2998 = vmatprep.subr.mxu0 0.0
    %2999 = vmatpush2.xpose.msra.mxu0 0.0
    %3000 = vmatprep.subr.mxu0 0.0
    %3001 = vmatpush2.xpose.msra.mxu0 0.0
    %3002 = vmatprep.subr.mxu0 0.0
    %3003 = vmatpush2.xpose.msra.mxu0 0.0
    %3004 = vmatprep.subr.mxu0 0.0
    %3005 = vmatpush2.xpose.msra.mxu0 0.0
    %3006 = vmatprep.subr.mxu0 0.0
    %3007 = vmatpush2.xpose.msra.mxu0 0.0
    %3008 = vmatprep.subr.mxu0 0.0
    %3009 = vmatpush2.xpose.msra.mxu0 0.0
    %3010 = vmatprep.subr.mxu0 0.0
    %3011 = vmatpush2.xpose.msra.mxu0 0.0
    %3012 = vmatprep.subr.mxu0 0.0
    %3013 = vmatpush2.xpose.msra.mxu0 0.0
    %3014 = vmatprep.subr.mxu0 0.0
    %3015 = vmatpush2.xpose.msra.mxu0 0.0
    %3016 = vmatprep.subr.mxu0 0.0
    %3017 = vmatpush2.xpose.msra.mxu0 0.0
    %3018 = vmatprep.mubr.f32.mxu0 0.0
    %3019 = vmatmul.mubr.f32.gmra.mxu0 %v2876
    %v3020 = vpop.f32.mrf.mxu0
    %v3021 = vadd.f32 0.0, %v3020
    %v3022 = vpop.f32.mrf.mxu0
    %3023 = vdwg.mxu0
    %3024 = vrot.lane.b32.xlu0 %v232, 64
    %v3025 = vpop.permute.xlu0 %3024
    %v3026 = vsel %vm239, %v3025, 0
    %3028 = vmatprep.subr.mxu0 0.0
    %3029 = vmatpush1.xpose.msra.mxu0 0.0
    %3030 = vmatprep.subr.mxu0 0.0
    %3031 = vmatpush1.xpose.msra.mxu0 0.0
    %3032 = vmatprep.subr.mxu0 0.0
    %3033 = vmatpush1.xpose.msra.mxu0 0.0
    %3034 = vmatprep.subr.mxu0 0.0
    %3035 = vmatpush1.xpose.msra.mxu0 0.0
    %3036 = vmatprep.subr.mxu0 0.0
    %3037 = vmatpush1.xpose.msra.mxu0 0.0
    %3038 = vmatprep.subr.mxu0 0.0
    %3039 = vmatpush1.xpose.msra.mxu0 0.0
    %3040 = vmatprep.subr.mxu0 0.0
    %3041 = vmatpush1.xpose.msra.mxu0 0.0
    %3042 = vmatprep.subr.mxu0 0.0
    %3043 = vmatpush1.xpose.msra.mxu0 0.0
    %3044 = vmatprep.subr.mxu0 0.0
    %3045 = vmatpush1.xpose.msra.mxu0 0.0
    %3046 = vmatprep.subr.mxu0 0.0
    %3047 = vmatpush1.xpose.msra.mxu0 0.0
    %3048 = vmatprep.subr.mxu0 0.0
    %3049 = vmatpush1.xpose.msra.mxu0 0.0
    %3050 = vmatprep.subr.mxu0 0.0
    %3051 = vmatpush1.xpose.msra.mxu0 0.0
    %3052 = vmatprep.subr.mxu0 0.0
    %3053 = vmatpush1.xpose.msra.mxu0 0.0
    %3054 = vmatprep.subr.mxu0 0.0
    %3055 = vmatpush1.xpose.msra.mxu0 0.0
    %3056 = vmatprep.subr.mxu0 0.0
    %3057 = vmatpush1.xpose.msra.mxu0 0.0
    %3058 = vmatprep.subr.mxu0 0.0
    %3059 = vmatpush1.xpose.msra.mxu0 %v3026
    %3060 = vmatprep.subr.mxu0 0.0
    %3061 = vmatpush2.xpose.msra.mxu0 0.0
    %3062 = vmatprep.subr.mxu0 0.0
    %3063 = vmatpush2.xpose.msra.mxu0 0.0
    %3064 = vmatprep.subr.mxu0 0.0
    %3065 = vmatpush2.xpose.msra.mxu0 0.0
    %3066 = vmatprep.subr.mxu0 0.0
    %3067 = vmatpush2.xpose.msra.mxu0 0.0
    %3068 = vmatprep.subr.mxu0 0.0
    %3069 = vmatpush2.xpose.msra.mxu0 0.0
    %3070 = vmatprep.subr.mxu0 0.0
    %3071 = vmatpush2.xpose.msra.mxu0 0.0
    %3072 = vmatprep.subr.mxu0 0.0
    %3073 = vmatpush2.xpose.msra.mxu0 0.0
    %3074 = vmatprep.subr.mxu0 0.0
    %3075 = vmatpush2.xpose.msra.mxu0 0.0
    %3076 = vmatprep.subr.mxu0 0.0
    %3077 = vmatpush2.xpose.msra.mxu0 0.0
    %3078 = vmatprep.subr.mxu0 0.0
    %3079 = vmatpush2.xpose.msra.mxu0 0.0
    %3080 = vmatprep.subr.mxu0 0.0
    %3081 = vmatpush2.xpose.msra.mxu0 0.0
    %3082 = vmatprep.subr.mxu0 0.0
    %3083 = vmatpush2.xpose.msra.mxu0 0.0
    %3084 = vmatprep.subr.mxu0 0.0
    %3085 = vmatpush2.xpose.msra.mxu0 0.0
    %3086 = vmatprep.subr.mxu0 0.0
    %3087 = vmatpush2.xpose.msra.mxu0 0.0
    %3088 = vmatprep.subr.mxu0 0.0
    %3089 = vmatpush2.xpose.msra.mxu0 0.0
    %3090 = vmatprep.subr.mxu0 0.0
    %3091 = vmatpush2.xpose.msra.mxu0 0.0
    %3092 = vmatprep.mubr.f32.mxu0 0.0
    %3093 = vmatmul.mubr.f32.gmra.mxu0 %v2876
    %v3094 = vpop.f32.mrf.mxu0
    %v3095 = vadd.f32 0.0, %v3094
    %v3096 = vpop.f32.mrf.mxu0
    %3097 = vdwg.mxu0
    %3098 = vrot.lane.b32.xlu0 %v233, 64
    %v3099 = vpop.permute.xlu0 %3098
    %v3100 = vsel %vm239, %v3099, 0
    %3102 = vmatprep.subr.mxu0 0.0
    %3103 = vmatpush1.xpose.msra.mxu0 0.0
    %3104 = vmatprep.subr.mxu0 0.0
    %3105 = vmatpush1.xpose.msra.mxu0 0.0
    %3106 = vmatprep.subr.mxu0 0.0
    %3107 = vmatpush1.xpose.msra.mxu0 0.0
    %3108 = vmatprep.subr.mxu0 0.0
    %3109 = vmatpush1.xpose.msra.mxu0 0.0
    %3110 = vmatprep.subr.mxu0 0.0
    %3111 = vmatpush1.xpose.msra.mxu0 0.0
    %3112 = vmatprep.subr.mxu0 0.0
    %3113 = vmatpush1.xpose.msra.mxu0 0.0
    %3114 = vmatprep.subr.mxu0 0.0
    %3115 = vmatpush1.xpose.msra.mxu0 0.0
    %3116 = vmatprep.subr.mxu0 0.0
    %3117 = vmatpush1.xpose.msra.mxu0 0.0
    %3118 = vmatprep.subr.mxu0 0.0
    %3119 = vmatpush1.xpose.msra.mxu0 0.0
    %3120 = vmatprep.subr.mxu0 0.0
    %3121 = vmatpush1.xpose.msra.mxu0 0.0
    %3122 = vmatprep.subr.mxu0 0.0
    %3123 = vmatpush1.xpose.msra.mxu0 0.0
    %3124 = vmatprep.subr.mxu0 0.0
    %3125 = vmatpush1.xpose.msra.mxu0 0.0
    %3126 = vmatprep.subr.mxu0 0.0
    %3127 = vmatpush1.xpose.msra.mxu0 0.0
    %3128 = vmatprep.subr.mxu0 0.0
    %3129 = vmatpush1.xpose.msra.mxu0 0.0
    %3130 = vmatprep.subr.mxu0 0.0
    %3131 = vmatpush1.xpose.msra.mxu0 0.0
    %3132 = vmatprep.subr.mxu0 0.0
    %3133 = vmatpush1.xpose.msra.mxu0 %v3100
    %3134 = vmatprep.subr.mxu0 0.0
    %3135 = vmatpush2.xpose.msra.mxu0 0.0
    %3136 = vmatprep.subr.mxu0 0.0
    %3137 = vmatpush2.xpose.msra.mxu0 0.0
    %3138 = vmatprep.subr.mxu0 0.0
    %3139 = vmatpush2.xpose.msra.mxu0 0.0
    %3140 = vmatprep.subr.mxu0 0.0
    %3141 = vmatpush2.xpose.msra.mxu0 0.0
    %3142 = vmatprep.subr.mxu0 0.0
    %3143 = vmatpush2.xpose.msra.mxu0 0.0
    %3144 = vmatprep.subr.mxu0 0.0
    %3145 = vmatpush2.xpose.msra.mxu0 0.0
    %3146 = vmatprep.subr.mxu0 0.0
    %3147 = vmatpush2.xpose.msra.mxu0 0.0
    %3148 = vmatprep.subr.mxu0 0.0
    %3149 = vmatpush2.xpose.msra.mxu0 0.0
    %3150 = vmatprep.subr.mxu0 0.0
    %3151 = vmatpush2.xpose.msra.mxu0 0.0
    %3152 = vmatprep.subr.mxu0 0.0
    %3153 = vmatpush2.xpose.msra.mxu0 0.0
    %3154 = vmatprep.subr.mxu0 0.0
    %3155 = vmatpush2.xpose.msra.mxu0 0.0
    %3156 = vmatprep.subr.mxu0 0.0
    %3157 = vmatpush2.xpose.msra.mxu0 0.0
    %3158 = vmatprep.subr.mxu0 0.0
    %3159 = vmatpush2.xpose.msra.mxu0 0.0
    %3160 = vmatprep.subr.mxu0 0.0
    %3161 = vmatpush2.xpose.msra.mxu0 0.0
    %3162 = vmatprep.subr.mxu0 0.0
    %3163 = vmatpush2.xpose.msra.mxu0 0.0
    %3164 = vmatprep.subr.mxu0 0.0
    %3165 = vmatpush2.xpose.msra.mxu0 0.0
    %3166 = vmatprep.mubr.f32.mxu0 0.0
    %3167 = vmatmul.mubr.f32.gmra.mxu0 %v2876
    %v3168 = vpop.f32.mrf.mxu0
    %v3169 = vadd.f32 0.0, %v3168
    %v3170 = vpop.f32.mrf.mxu0
    %3171 = vdwg.mxu0
    %3172 = vrot.lane.b32.xlu0 %v234, 64
    %v3173 = vpop.permute.xlu0 %3172
    %v3174 = vsel %vm239, %v3173, 0
    %3176 = vmatprep.subr.mxu0 0.0
    %3177 = vmatpush1.xpose.msra.mxu0 0.0
    %3178 = vmatprep.subr.mxu0 0.0
    %3179 = vmatpush1.xpose.msra.mxu0 0.0
    %3180 = vmatprep.subr.mxu0 0.0
    %3181 = vmatpush1.xpose.msra.mxu0 0.0
    %3182 = vmatprep.subr.mxu0 0.0
    %3183 = vmatpush1.xpose.msra.mxu0 0.0
    %3184 = vmatprep.subr.mxu0 0.0
    %3185 = vmatpush1.xpose.msra.mxu0 0.0
    %3186 = vmatprep.subr.mxu0 0.0
    %3187 = vmatpush1.xpose.msra.mxu0 0.0
    %3188 = vmatprep.subr.mxu0 0.0
    %3189 = vmatpush1.xpose.msra.mxu0 0.0
    %3190 = vmatprep.subr.mxu0 0.0
    %3191 = vmatpush1.xpose.msra.mxu0 0.0
    %3192 = vmatprep.subr.mxu0 0.0
    %3193 = vmatpush1.xpose.msra.mxu0 0.0
    %3194 = vmatprep.subr.mxu0 0.0
    %3195 = vmatpush1.xpose.msra.mxu0 0.0
    %3196 = vmatprep.subr.mxu0 0.0
    %3197 = vmatpush1.xpose.msra.mxu0 0.0
    %3198 = vmatprep.subr.mxu0 0.0
    %3199 = vmatpush1.xpose.msra.mxu0 0.0
    %3200 = vmatprep.subr.mxu0 0.0
    %3201 = vmatpush1.xpose.msra.mxu0 0.0
    %3202 = vmatprep.subr.mxu0 0.0
    %3203 = vmatpush1.xpose.msra.mxu0 0.0
    %3204 = vmatprep.subr.mxu0 0.0
    %3205 = vmatpush1.xpose.msra.mxu0 0.0
    %3206 = vmatprep.subr.mxu0 0.0
    %3207 = vmatpush1.xpose.msra.mxu0 %v3174
    %3208 = vmatprep.subr.mxu0 0.0
    %3209 = vmatpush2.xpose.msra.mxu0 0.0
    %3210 = vmatprep.subr.mxu0 0.0
    %3211 = vmatpush2.xpose.msra.mxu0 0.0
    %3212 = vmatprep.subr.mxu0 0.0
    %3213 = vmatpush2.xpose.msra.mxu0 0.0
    %3214 = vmatprep.subr.mxu0 0.0
    %3215 = vmatpush2.xpose.msra.mxu0 0.0
    %3216 = vmatprep.subr.mxu0 0.0
    %3217 = vmatpush2.xpose.msra.mxu0 0.0
    %3218 = vmatprep.subr.mxu0 0.0
    %3219 = vmatpush2.xpose.msra.mxu0 0.0
    %3220 = vmatprep.subr.mxu0 0.0
    %3221 = vmatpush2.xpose.msra.mxu0 0.0
    %3222 = vmatprep.subr.mxu0 0.0
    %3223 = vmatpush2.xpose.msra.mxu0 0.0
    %3224 = vmatprep.subr.mxu0 0.0
    %3225 = vmatpush2.xpose.msra.mxu0 0.0
    %3226 = vmatprep.subr.mxu0 0.0
    %3227 = vmatpush2.xpose.msra.mxu0 0.0
    %3228 = vmatprep.subr.mxu0 0.0
    %3229 = vmatpush2.xpose.msra.mxu0 0.0
    %3230 = vmatprep.subr.mxu0 0.0
    %3231 = vmatpush2.xpose.msra.mxu0 0.0
    %3232 = vmatprep.subr.mxu0 0.0
    %3233 = vmatpush2.xpose.msra.mxu0 0.0
    %3234 = vmatprep.subr.mxu0 0.0
    %3235 = vmatpush2.xpose.msra.mxu0 0.0
    %3236 = vmatprep.subr.mxu0 0.0
    %3237 = vmatpush2.xpose.msra.mxu0 0.0
    %3238 = vmatprep.subr.mxu0 0.0
    %3239 = vmatpush2.xpose.msra.mxu0 0.0
    %3240 = vmatprep.mubr.f32.mxu0 0.0
    %3241 = vmatmul.mubr.f32.gmra.mxu0 %v2876
    %v3242 = vpop.f32.mrf.mxu0
    %v3243 = vadd.f32 0.0, %v3242
    %v3244 = vpop.f32.mrf.mxu0
    %3245 = vdwg.mxu0
    %3246 = vrot.lane.b32.xlu0 %v235, 64
    %v3247 = vpop.permute.xlu0 %3246
    %v3248 = vsel %vm239, %v3247, 0
    %3250 = vmatprep.subr.mxu0 0.0
    %3251 = vmatpush1.xpose.msra.mxu0 0.0
    %3252 = vmatprep.subr.mxu0 0.0
    %3253 = vmatpush1.xpose.msra.mxu0 0.0
    %3254 = vmatprep.subr.mxu0 0.0
    %3255 = vmatpush1.xpose.msra.mxu0 0.0
    %3256 = vmatprep.subr.mxu0 0.0
    %3257 = vmatpush1.xpose.msra.mxu0 0.0
    %3258 = vmatprep.subr.mxu0 0.0
    %3259 = vmatpush1.xpose.msra.mxu0 0.0
    %3260 = vmatprep.subr.mxu0 0.0
    %3261 = vmatpush1.xpose.msra.mxu0 0.0
    %3262 = vmatprep.subr.mxu0 0.0
    %3263 = vmatpush1.xpose.msra.mxu0 0.0
    %3264 = vmatprep.subr.mxu0 0.0
    %3265 = vmatpush1.xpose.msra.mxu0 0.0
    %3266 = vmatprep.subr.mxu0 0.0
    %3267 = vmatpush1.xpose.msra.mxu0 0.0
    %3268 = vmatprep.subr.mxu0 0.0
    %3269 = vmatpush1.xpose.msra.mxu0 0.0
    %3270 = vmatprep.subr.mxu0 0.0
    %3271 = vmatpush1.xpose.msra.mxu0 0.0
    %3272 = vmatprep.subr.mxu0 0.0
    %3273 = vmatpush1.xpose.msra.mxu0 0.0
    %3274 = vmatprep.subr.mxu0 0.0
    %3275 = vmatpush1.xpose.msra.mxu0 0.0
    %3276 = vmatprep.subr.mxu0 0.0
    %3277 = vmatpush1.xpose.msra.mxu0 0.0
    %3278 = vmatprep.subr.mxu0 0.0
    %3279 = vmatpush1.xpose.msra.mxu0 0.0
    %3280 = vmatprep.subr.mxu0 0.0
    %3281 = vmatpush1.xpose.msra.mxu0 %v3248
    %3282 = vmatprep.subr.mxu0 0.0
    %3283 = vmatpush2.xpose.msra.mxu0 0.0
    %3284 = vmatprep.subr.mxu0 0.0
    %3285 = vmatpush2.xpose.msra.mxu0 0.0
    %3286 = vmatprep.subr.mxu0 0.0
    %3287 = vmatpush2.xpose.msra.mxu0 0.0
    %3288 = vmatprep.subr.mxu0 0.0
    %3289 = vmatpush2.xpose.msra.mxu0 0.0
    %3290 = vmatprep.subr.mxu0 0.0
    %3291 = vmatpush2.xpose.msra.mxu0 0.0
    %3292 = vmatprep.subr.mxu0 0.0
    %3293 = vmatpush2.xpose.msra.mxu0 0.0
    %3294 = vmatprep.subr.mxu0 0.0
    %3295 = vmatpush2.xpose.msra.mxu0 0.0
    %3296 = vmatprep.subr.mxu0 0.0
    %3297 = vmatpush2.xpose.msra.mxu0 0.0
    %3298 = vmatprep.subr.mxu0 0.0
    %3299 = vmatpush2.xpose.msra.mxu0 0.0
    %3300 = vmatprep.subr.mxu0 0.0
    %3301 = vmatpush2.xpose.msra.mxu0 0.0
    %3302 = vmatprep.subr.mxu0 0.0
    %3303 = vmatpush2.xpose.msra.mxu0 0.0
    %3304 = vmatprep.subr.mxu0 0.0
    %3305 = vmatpush2.xpose.msra.mxu0 0.0
    %3306 = vmatprep.subr.mxu0 0.0
    %3307 = vmatpush2.xpose.msra.mxu0 0.0
    %3308 = vmatprep.subr.mxu0 0.0
    %3309 = vmatpush2.xpose.msra.mxu0 0.0
    %3310 = vmatprep.subr.mxu0 0.0
    %3311 = vmatpush2.xpose.msra.mxu0 0.0
    %3312 = vmatprep.subr.mxu0 0.0
    %3313 = vmatpush2.xpose.msra.mxu0 0.0
    %3314 = vmatprep.mubr.f32.mxu0 0.0
    %3315 = vmatmul.mubr.f32.gmra.mxu0 %v2876
    %v3316 = vpop.f32.mrf.mxu0
    %v3317 = vadd.f32 0.0, %v3316
    %v3318 = vpop.f32.mrf.mxu0
    %3319 = vdwg.mxu0
    %3320 = vrot.lane.b32.xlu0 %v236, 64
    %v3321 = vpop.permute.xlu0 %3320
    %v3322 = vsel %vm239, %v3321, 0
    %3324 = vmatprep.subr.mxu0 0.0
    %3325 = vmatpush1.xpose.msra.mxu0 0.0
    %3326 = vmatprep.subr.mxu0 0.0
    %3327 = vmatpush1.xpose.msra.mxu0 0.0
    %3328 = vmatprep.subr.mxu0 0.0
    %3329 = vmatpush1.xpose.msra.mxu0 0.0
    %3330 = vmatprep.subr.mxu0 0.0
    %3331 = vmatpush1.xpose.msra.mxu0 0.0
    %3332 = vmatprep.subr.mxu0 0.0
    %3333 = vmatpush1.xpose.msra.mxu0 0.0
    %3334 = vmatprep.subr.mxu0 0.0
    %3335 = vmatpush1.xpose.msra.mxu0 0.0
    %3336 = vmatprep.subr.mxu0 0.0
    %3337 = vmatpush1.xpose.msra.mxu0 0.0
    %3338 = vmatprep.subr.mxu0 0.0
    %3339 = vmatpush1.xpose.msra.mxu0 0.0
    %3340 = vmatprep.subr.mxu0 0.0
    %3341 = vmatpush1.xpose.msra.mxu0 0.0
    %3342 = vmatprep.subr.mxu0 0.0
    %3343 = vmatpush1.xpose.msra.mxu0 0.0
    %3344 = vmatprep.subr.mxu0 0.0
    %3345 = vmatpush1.xpose.msra.mxu0 0.0
    %3346 = vmatprep.subr.mxu0 0.0
    %3347 = vmatpush1.xpose.msra.mxu0 0.0
    %3348 = vmatprep.subr.mxu0 0.0
    %3349 = vmatpush1.xpose.msra.mxu0 0.0
    %3350 = vmatprep.subr.mxu0 0.0
    %3351 = vmatpush1.xpose.msra.mxu0 0.0
    %3352 = vmatprep.subr.mxu0 0.0
    %3353 = vmatpush1.xpose.msra.mxu0 0.0
    %3354 = vmatprep.subr.mxu0 0.0
    %3355 = vmatpush1.xpose.msra.mxu0 %v3322
    %3356 = vmatprep.subr.mxu0 0.0
    %3357 = vmatpush2.xpose.msra.mxu0 0.0
    %3358 = vmatprep.subr.mxu0 0.0
    %3359 = vmatpush2.xpose.msra.mxu0 0.0
    %3360 = vmatprep.subr.mxu0 0.0
    %3361 = vmatpush2.xpose.msra.mxu0 0.0
    %3362 = vmatprep.subr.mxu0 0.0
    %3363 = vmatpush2.xpose.msra.mxu0 0.0
    %3364 = vmatprep.subr.mxu0 0.0
    %3365 = vmatpush2.xpose.msra.mxu0 0.0
    %3366 = vmatprep.subr.mxu0 0.0
    %3367 = vmatpush2.xpose.msra.mxu0 0.0
    %3368 = vmatprep.subr.mxu0 0.0
    %3369 = vmatpush2.xpose.msra.mxu0 0.0
    %3370 = vmatprep.subr.mxu0 0.0
    %3371 = vmatpush2.xpose.msra.mxu0 0.0
    %3372 = vmatprep.subr.mxu0 0.0
    %3373 = vmatpush2.xpose.msra.mxu0 0.0
    %3374 = vmatprep.subr.mxu0 0.0
    %3375 = vmatpush2.xpose.msra.mxu0 0.0
    %3376 = vmatprep.subr.mxu0 0.0
    %3377 = vmatpush2.xpose.msra.mxu0 0.0
    %3378 = vmatprep.subr.mxu0 0.0
    %3379 = vmatpush2.xpose.msra.mxu0 0.0
    %3380 = vmatprep.subr.mxu0 0.0
    %3381 = vmatpush2.xpose.msra.mxu0 0.0
    %3382 = vmatprep.subr.mxu0 0.0
    %3383 = vmatpush2.xpose.msra.mxu0 0.0
    %3384 = vmatprep.subr.mxu0 0.0
    %3385 = vmatpush2.xpose.msra.mxu0 0.0
    %3386 = vmatprep.subr.mxu0 0.0
    %3387 = vmatpush2.xpose.msra.mxu0 0.0
    %3388 = vmatprep.mubr.f32.mxu0 0.0
    %3389 = vmatmul.mubr.f32.gmra.mxu0 %v2876
    %v3390 = vpop.f32.mrf.mxu0
    %v3391 = vadd.f32 0.0, %v3390
    %v3392 = vpop.f32.mrf.mxu0
    %3393 = vdwg.mxu0
    %3394 = vrot.lane.b32.xlu0 %v237, 64
    %v3395 = vpop.permute.xlu0 %3394
    %v3396 = vsel %vm239, %v3395, 0
    %3398 = vmatprep.subr.mxu0 0.0
    %3399 = vmatpush1.xpose.msra.mxu0 0.0
    %3400 = vmatprep.subr.mxu0 0.0
    %3401 = vmatpush1.xpose.msra.mxu0 0.0
    %3402 = vmatprep.subr.mxu0 0.0
    %3403 = vmatpush1.xpose.msra.mxu0 0.0
    %3404 = vmatprep.subr.mxu0 0.0
    %3405 = vmatpush1.xpose.msra.mxu0 0.0
    %3406 = vmatprep.subr.mxu0 0.0
    %3407 = vmatpush1.xpose.msra.mxu0 0.0
    %3408 = vmatprep.subr.mxu0 0.0
    %3409 = vmatpush1.xpose.msra.mxu0 0.0
    %3410 = vmatprep.subr.mxu0 0.0
    %3411 = vmatpush1.xpose.msra.mxu0 0.0
    %3412 = vmatprep.subr.mxu0 0.0
    %3413 = vmatpush1.xpose.msra.mxu0 0.0
    %3414 = vmatprep.subr.mxu0 0.0
    %3415 = vmatpush1.xpose.msra.mxu0 0.0
    %3416 = vmatprep.subr.mxu0 0.0
    %3417 = vmatpush1.xpose.msra.mxu0 0.0
    %3418 = vmatprep.subr.mxu0 0.0
    %3419 = vmatpush1.xpose.msra.mxu0 0.0
    %3420 = vmatprep.subr.mxu0 0.0
    %3421 = vmatpush1.xpose.msra.mxu0 0.0
    %3422 = vmatprep.subr.mxu0 0.0
    %3423 = vmatpush1.xpose.msra.mxu0 0.0
    %3424 = vmatprep.subr.mxu0 0.0
    %3425 = vmatpush1.xpose.msra.mxu0 0.0
    %3426 = vmatprep.subr.mxu0 0.0
    %3427 = vmatpush1.xpose.msra.mxu0 0.0
    %3428 = vmatprep.subr.mxu0 0.0
    %3429 = vmatpush1.xpose.msra.mxu0 %v3396
    %3430 = vmatprep.subr.mxu0 0.0
    %3431 = vmatpush2.xpose.msra.mxu0 0.0
    %3432 = vmatprep.subr.mxu0 0.0
    %3433 = vmatpush2.xpose.msra.mxu0 0.0
    %3434 = vmatprep.subr.mxu0 0.0
    %3435 = vmatpush2.xpose.msra.mxu0 0.0
    %3436 = vmatprep.subr.mxu0 0.0
    %3437 = vmatpush2.xpose.msra.mxu0 0.0
    %3438 = vmatprep.subr.mxu0 0.0
    %3439 = vmatpush2.xpose.msra.mxu0 0.0
    %3440 = vmatprep.subr.mxu0 0.0
    %3441 = vmatpush2.xpose.msra.mxu0 0.0
    %3442 = vmatprep.subr.mxu0 0.0
    %3443 = vmatpush2.xpose.msra.mxu0 0.0
    %3444 = vmatprep.subr.mxu0 0.0
    %3445 = vmatpush2.xpose.msra.mxu0 0.0
    %3446 = vmatprep.subr.mxu0 0.0
    %3447 = vmatpush2.xpose.msra.mxu0 0.0
    %3448 = vmatprep.subr.mxu0 0.0
    %3449 = vmatpush2.xpose.msra.mxu0 0.0
    %3450 = vmatprep.subr.mxu0 0.0
    %3451 = vmatpush2.xpose.msra.mxu0 0.0
    %3452 = vmatprep.subr.mxu0 0.0
    %3453 = vmatpush2.xpose.msra.mxu0 0.0
    %3454 = vmatprep.subr.mxu0 0.0
    %3455 = vmatpush2.xpose.msra.mxu0 0.0
    %3456 = vmatprep.subr.mxu0 0.0
    %3457 = vmatpush2.xpose.msra.mxu0 0.0
    %3458 = vmatprep.subr.mxu0 0.0
    %3459 = vmatpush2.xpose.msra.mxu0 0.0
    %3460 = vmatprep.subr.mxu0 0.0
    %3461 = vmatpush2.xpose.msra.mxu0 0.0
    %3462 = vmatprep.mubr.f32.mxu0 0.0
    %3463 = vmatmul.mubr.f32.gmra.mxu0 %v2876
    %v3464 = vpop.f32.mrf.mxu0
    %v3465 = vadd.f32 0.0, %v3464
    %v3466 = vpop.f32.mrf.mxu0
    %3467 = vdwg.mxu0
    %v3468 = vsel %vm819, %v2947, -inf
    %3469 = vmax.xlane.f32.xlu0 %v3468
    %v3470 = vpop.xlane.xlu0 %3469
    %v3471 = vsel %vm819, %v3021, -inf
    %3472 = vmax.xlane.f32.xlu0 %v3471
    %v3473 = vpop.xlane.xlu0 %3472
    %v3474 = vsel %vm819, %v3095, -inf
    %3475 = vmax.xlane.f32.xlu0 %v3474
    %v3476 = vpop.xlane.xlu0 %3475
    %v3477 = vsel %vm819, %v3169, -inf
    %3478 = vmax.xlane.f32.xlu0 %v3477
    %v3479 = vpop.xlane.xlu0 %3478
    %v3480 = vsel %vm819, %v3243, -inf
    %3481 = vmax.xlane.f32.xlu0 %v3480
    %v3482 = vpop.xlane.xlu0 %3481
    %v3483 = vsel %vm819, %v3317, -inf
    %3484 = vmax.xlane.f32.xlu0 %v3483
    %v3485 = vpop.xlane.xlu0 %3484
    %v3486 = vsel %vm819, %v3391, -inf
    %3487 = vmax.xlane.f32.xlu0 %v3486
    %v3488 = vpop.xlane.xlu0 %3487
    %v3489 = vsel %vm819, %v3465, -inf
    %3490 = vmax.xlane.f32.xlu0 %v3489
    %v3491 = vpop.xlane.xlu0 %3490
    %v3492 = vsub.f32 %v2947, %v3470
    %v3493 = vsub.f32 %v3021, %v3473
    %v3494 = vsub.f32 %v3095, %v3476
    %v3495 = vsub.f32 %v3169, %v3479
    %v3496 = vsub.f32 %v3243, %v3482
    %v3497 = vsub.f32 %v3317, %v3485
    %v3498 = vsub.f32 %v3391, %v3488
    %v3499 = vsub.f32 %v3465, %v3491
    %v3500 = vmul.f32 %v3492, 1.442695
    %v3501 = vpow.pop %v3500
    %v3502 = vmul.f32 %v3493, 1.442695
    %v3503 = vpow.pop %v3502
    %v3504 = vmul.f32 %v3494, 1.442695
    %v3505 = vpow.pop %v3504
    %v3506 = vmul.f32 %v3495, 1.442695
    %v3507 = vpow.pop %v3506
    %v3508 = vmul.f32 %v3496, 1.442695
    %v3509 = vpow.pop %v3508
    %v3510 = vmul.f32 %v3497, 1.442695
    %v3511 = vpow.pop %v3510
    %v3512 = vmul.f32 %v3498, 1.442695
    %v3513 = vpow.pop %v3512
    %v3514 = vmul.f32 %v3499, 1.442695
    %v3515 = vpow.pop %v3514
    %v3516 = vsel %vm819, %v3501, 0.0
    %3517 = vadd.xlane.f32.xlu0 %v3516
    %v3518 = vpop.xlane.xlu0 %3517
    %v3519 = vsel %vm819, %v3503, 0.0
    %3520 = vadd.xlane.f32.xlu0 %v3519
    %v3521 = vpop.xlane.xlu0 %3520
    %v3522 = vsel %vm819, %v3505, 0.0
    %3523 = vadd.xlane.f32.xlu0 %v3522
    %v3524 = vpop.xlane.xlu0 %3523
    %v3525 = vsel %vm819, %v3507, 0.0
    %3526 = vadd.xlane.f32.xlu0 %v3525
    %v3527 = vpop.xlane.xlu0 %3526
    %v3528 = vsel %vm819, %v3509, 0.0
    %3529 = vadd.xlane.f32.xlu0 %v3528
    %v3530 = vpop.xlane.xlu0 %3529
    %v3531 = vsel %vm819, %v3511, 0.0
    %3532 = vadd.xlane.f32.xlu0 %v3531
    %v3533 = vpop.xlane.xlu0 %3532
    %v3534 = vsel %vm819, %v3513, 0.0
    %3535 = vadd.xlane.f32.xlu0 %v3534
    %v3536 = vpop.xlane.xlu0 %3535
    %v3537 = vsel %vm819, %v3515, 0.0
    %3538 = vadd.xlane.f32.xlu0 %v3537
    %v3539 = vpop.xlane.xlu0 %3538
    %v3540 = vrcp.pop %v3518
    %v3541 = vmul.f32 %v3501, %v3540
    %v3542 = vrcp.pop %v3521
    %v3543 = vmul.f32 %v3503, %v3542
    %v3544 = vrcp.pop %v3524
    %v3545 = vmul.f32 %v3505, %v3544
    %v3546 = vrcp.pop %v3527
    %v3547 = vmul.f32 %v3507, %v3546
    %v3548 = vrcp.pop %v3530
    %v3549 = vmul.f32 %v3509, %v3548
    %v3550 = vrcp.pop %v3533
    %v3551 = vmul.f32 %v3511, %v3550
    %v3552 = vrcp.pop %v3536
    %v3553 = vmul.f32 %v3513, %v3552
    %v3554 = vrcp.pop %v3539
    %v3555 = vmul.f32 %v3515, %v3554
    %v3556 = vrot.slane %v2875, 4
    %v3558 = vsel %vm909, %v3541, 0
    %v3560 = vsel %vm913, %v3556, 0
    %3562 = vmatprep.subr.mxu0 0.0
    %3563 = vmatpush1.msra.mxu0 0.0
    %3564 = vmatprep.subr.mxu0 0.0
    %3565 = vmatpush1.msra.mxu0 0.0
    %3566 = vmatprep.subr.mxu0 0.0
    %3567 = vmatpush1.msra.mxu0 0.0
    %3568 = vmatprep.subr.mxu0 0.0
    %3569 = vmatpush1.msra.mxu0 0.0
    %3570 = vmatprep.subr.mxu0 0.0
    %3571 = vmatpush1.msra.mxu0 0.0
    %3572 = vmatprep.subr.mxu0 0.0
    %3573 = vmatpush1.msra.mxu0 0.0
    %3574 = vmatprep.subr.mxu0 0.0
    %3575 = vmatpush1.msra.mxu0 0.0
    %3576 = vmatprep.subr.mxu0 0.0
    %3577 = vmatpush1.msra.mxu0 0.0
    %3578 = vmatprep.subr.mxu0 0.0
    %3579 = vmatpush1.msra.mxu0 0.0
    %3580 = vmatprep.subr.mxu0 0.0
    %3581 = vmatpush1.msra.mxu0 0.0
    %3582 = vmatprep.subr.mxu0 0.0
    %3583 = vmatpush1.msra.mxu0 0.0
    %3584 = vmatprep.subr.mxu0 0.0
    %3585 = vmatpush1.msra.mxu0 0.0
    %3586 = vmatprep.subr.mxu0 0.0
    %3587 = vmatpush1.msra.mxu0 0.0
    %3588 = vmatprep.subr.mxu0 0.0
    %3589 = vmatpush1.msra.mxu0 0.0
    %3590 = vmatprep.subr.mxu0 0.0
    %3591 = vmatpush1.msra.mxu0 0.0
    %3592 = vmatprep.subr.mxu0 0.0
    %3593 = vmatpush1.msra.mxu0 %v3560
    %3594 = vmatprep.subr.mxu0 0.0
    %3595 = vmatpush2.msra.mxu0 0.0
    %3596 = vmatprep.subr.mxu0 0.0
    %3597 = vmatpush2.msra.mxu0 0.0
    %3598 = vmatprep.subr.mxu0 0.0
    %3599 = vmatpush2.msra.mxu0 0.0
    %3600 = vmatprep.subr.mxu0 0.0
    %3601 = vmatpush2.msra.mxu0 0.0
    %3602 = vmatprep.subr.mxu0 0.0
    %3603 = vmatpush2.msra.mxu0 0.0
    %3604 = vmatprep.subr.mxu0 0.0
    %3605 = vmatpush2.msra.mxu0 0.0
    %3606 = vmatprep.subr.mxu0 0.0
    %3607 = vmatpush2.msra.mxu0 0.0
    %3608 = vmatprep.subr.mxu0 0.0
    %3609 = vmatpush2.msra.mxu0 0.0
    %3610 = vmatprep.subr.mxu0 0.0
    %3611 = vmatpush2.msra.mxu0 0.0
    %3612 = vmatprep.subr.mxu0 0.0
    %3613 = vmatpush2.msra.mxu0 0.0
    %3614 = vmatprep.subr.mxu0 0.0
    %3615 = vmatpush2.msra.mxu0 0.0
    %3616 = vmatprep.subr.mxu0 0.0
    %3617 = vmatpush2.msra.mxu0 0.0
    %3618 = vmatprep.subr.mxu0 0.0
    %3619 = vmatpush2.msra.mxu0 0.0
    %3620 = vmatprep.subr.mxu0 0.0
    %3621 = vmatpush2.msra.mxu0 0.0
    %3622 = vmatprep.subr.mxu0 0.0
    %3623 = vmatpush2.msra.mxu0 0.0
    %3624 = vmatprep.subr.mxu0 0.0
    %3625 = vmatpush2.msra.mxu0 0.0
    %3626 = vmatprep.mubr.f32.mxu0 0.0
    %3627 = vmatmul.mubr.f32.gmra.mxu0 %v3558
    %v3628 = vpop.f32.mrf.mxu0
    %v3629 = vadd.f32 0.0, %v3628
    %v3630 = vpop.f32.mrf.mxu0
    %3631 = vdwg.mxu0
    %v3632 = vrot.slane %v2951, 4
    %v3634 = vsel %vm909, %v3543, 0
    %v3636 = vsel %vm913, %v3632, 0
    %3638 = vmatprep.subr.mxu0 0.0
    %3639 = vmatpush1.msra.mxu0 0.0
    %3640 = vmatprep.subr.mxu0 0.0
    %3641 = vmatpush1.msra.mxu0 0.0
    %3642 = vmatprep.subr.mxu0 0.0
    %3643 = vmatpush1.msra.mxu0 0.0
    %3644 = vmatprep.subr.mxu0 0.0
    %3645 = vmatpush1.msra.mxu0 0.0
    %3646 = vmatprep.subr.mxu0 0.0
    %3647 = vmatpush1.msra.mxu0 0.0
    %3648 = vmatprep.subr.mxu0 0.0
    %3649 = vmatpush1.msra.mxu0 0.0
    %3650 = vmatprep.subr.mxu0 0.0
    %3651 = vmatpush1.msra.mxu0 0.0
    %3652 = vmatprep.subr.mxu0 0.0
    %3653 = vmatpush1.msra.mxu0 0.0
    %3654 = vmatprep.subr.mxu0 0.0
    %3655 = vmatpush1.msra.mxu0 0.0
    %3656 = vmatprep.subr.mxu0 0.0
    %3657 = vmatpush1.msra.mxu0 0.0
    %3658 = vmatprep.subr.mxu0 0.0
    %3659 = vmatpush1.msra.mxu0 0.0
    %3660 = vmatprep.subr.mxu0 0.0
    %3661 = vmatpush1.msra.mxu0 0.0
    %3662 = vmatprep.subr.mxu0 0.0
    %3663 = vmatpush1.msra.mxu0 0.0
    %3664 = vmatprep.subr.mxu0 0.0
    %3665 = vmatpush1.msra.mxu0 0.0
    %3666 = vmatprep.subr.mxu0 0.0
    %3667 = vmatpush1.msra.mxu0 0.0
    %3668 = vmatprep.subr.mxu0 0.0
    %3669 = vmatpush1.msra.mxu0 %v3636
    %3670 = vmatprep.subr.mxu0 0.0
    %3671 = vmatpush2.msra.mxu0 0.0
    %3672 = vmatprep.subr.mxu0 0.0
    %3673 = vmatpush2.msra.mxu0 0.0
    %3674 = vmatprep.subr.mxu0 0.0
    %3675 = vmatpush2.msra.mxu0 0.0
    %3676 = vmatprep.subr.mxu0 0.0
    %3677 = vmatpush2.msra.mxu0 0.0
    %3678 = vmatprep.subr.mxu0 0.0
    %3679 = vmatpush2.msra.mxu0 0.0
    %3680 = vmatprep.subr.mxu0 0.0
    %3681 = vmatpush2.msra.mxu0 0.0
    %3682 = vmatprep.subr.mxu0 0.0
    %3683 = vmatpush2.msra.mxu0 0.0
    %3684 = vmatprep.subr.mxu0 0.0
    %3685 = vmatpush2.msra.mxu0 0.0
    %3686 = vmatprep.subr.mxu0 0.0
    %3687 = vmatpush2.msra.mxu0 0.0
    %3688 = vmatprep.subr.mxu0 0.0
    %3689 = vmatpush2.msra.mxu0 0.0
    %3690 = vmatprep.subr.mxu0 0.0
    %3691 = vmatpush2.msra.mxu0 0.0
    %3692 = vmatprep.subr.mxu0 0.0
    %3693 = vmatpush2.msra.mxu0 0.0
    %3694 = vmatprep.subr.mxu0 0.0
    %3695 = vmatpush2.msra.mxu0 0.0
    %3696 = vmatprep.subr.mxu0 0.0
    %3697 = vmatpush2.msra.mxu0 0.0
    %3698 = vmatprep.subr.mxu0 0.0
    %3699 = vmatpush2.msra.mxu0 0.0
    %3700 = vmatprep.subr.mxu0 0.0
    %3701 = vmatpush2.msra.mxu0 0.0
    %3702 = vmatprep.mubr.f32.mxu0 0.0
    %3703 = vmatmul.mubr.f32.gmra.mxu0 %v3634
    %v3704 = vpop.f32.mrf.mxu0
    %v3705 = vadd.f32 0.0, %v3704
    %v3706 = vpop.f32.mrf.mxu0
    %3707 = vdwg.mxu0
    %v3708 = vrot.slane %v3025, 4
    %v3710 = vsel %vm909, %v3545, 0
    %v3712 = vsel %vm913, %v3708, 0
    %3714 = vmatprep.subr.mxu0 0.0
    %3715 = vmatpush1.msra.mxu0 0.0
    %3716 = vmatprep.subr.mxu0 0.0
    %3717 = vmatpush1.msra.mxu0 0.0
    %3718 = vmatprep.subr.mxu0 0.0
    %3719 = vmatpush1.msra.mxu0 0.0
    %3720 = vmatprep.subr.mxu0 0.0
    %3721 = vmatpush1.msra.mxu0 0.0
    %3722 = vmatprep.subr.mxu0 0.0
    %3723 = vmatpush1.msra.mxu0 0.0
    %3724 = vmatprep.subr.mxu0 0.0
    %3725 = vmatpush1.msra.mxu0 0.0
    %3726 = vmatprep.subr.mxu0 0.0
    %3727 = vmatpush1.msra.mxu0 0.0
    %3728 = vmatprep.subr.mxu0 0.0
    %3729 = vmatpush1.msra.mxu0 0.0
    %3730 = vmatprep.subr.mxu0 0.0
    %3731 = vmatpush1.msra.mxu0 0.0
    %3732 = vmatprep.subr.mxu0 0.0
    %3733 = vmatpush1.msra.mxu0 0.0
    %3734 = vmatprep.subr.mxu0 0.0
    %3735 = vmatpush1.msra.mxu0 0.0
    %3736 = vmatprep.subr.mxu0 0.0
    %3737 = vmatpush1.msra.mxu0 0.0
    %3738 = vmatprep.subr.mxu0 0.0
    %3739 = vmatpush1.msra.mxu0 0.0
    %3740 = vmatprep.subr.mxu0 0.0
    %3741 = vmatpush1.msra.mxu0 0.0
    %3742 = vmatprep.subr.mxu0 0.0
    %3743 = vmatpush1.msra.mxu0 0.0
    %3744 = vmatprep.subr.mxu0 0.0
    %3745 = vmatpush1.msra.mxu0 %v3712
    %3746 = vmatprep.subr.mxu0 0.0
    %3747 = vmatpush2.msra.mxu0 0.0
    %3748 = vmatprep.subr.mxu0 0.0
    %3749 = vmatpush2.msra.mxu0 0.0
    %3750 = vmatprep.subr.mxu0 0.0
    %3751 = vmatpush2.msra.mxu0 0.0
    %3752 = vmatprep.subr.mxu0 0.0
    %3753 = vmatpush2.msra.mxu0 0.0
    %3754 = vmatprep.subr.mxu0 0.0
    %3755 = vmatpush2.msra.mxu0 0.0
    %3756 = vmatprep.subr.mxu0 0.0
    %3757 = vmatpush2.msra.mxu0 0.0
    %3758 = vmatprep.subr.mxu0 0.0
    %3759 = vmatpush2.msra.mxu0 0.0
    %3760 = vmatprep.subr.mxu0 0.0
    %3761 = vmatpush2.msra.mxu0 0.0
    %3762 = vmatprep.subr.mxu0 0.0
    %3763 = vmatpush2.msra.mxu0 0.0
    %3764 = vmatprep.subr.mxu0 0.0
    %3765 = vmatpush2.msra.mxu0 0.0
    %3766 = vmatprep.subr.mxu0 0.0
    %3767 = vmatpush2.msra.mxu0 0.0
    %3768 = vmatprep.subr.mxu0 0.0
    %3769 = vmatpush2.msra.mxu0 0.0
    %3770 = vmatprep.subr.mxu0 0.0
    %3771 = vmatpush2.msra.mxu0 0.0
    %3772 = vmatprep.subr.mxu0 0.0
    %3773 = vmatpush2.msra.mxu0 0.0
    %3774 = vmatprep.subr.mxu0 0.0
    %3775 = vmatpush2.msra.mxu0 0.0
    %3776 = vmatprep.subr.mxu0 0.0
    %3777 = vmatpush2.msra.mxu0 0.0
    %3778 = vmatprep.mubr.f32.mxu0 0.0
    %3779 = vmatmul.mubr.f32.gmra.mxu0 %v3710
    %v3780 = vpop.f32.mrf.mxu0
    %v3781 = vadd.f32 0.0, %v3780
    %v3782 = vpop.f32.mrf.mxu0
    %3783 = vdwg.mxu0
    %v3784 = vrot.slane %v3099, 4
    %v3786 = vsel %vm909, %v3547, 0
    %v3788 = vsel %vm913, %v3784, 0
    %3790 = vmatprep.subr.mxu0 0.0
    %3791 = vmatpush1.msra.mxu0 0.0
    %3792 = vmatprep.subr.mxu0 0.0
    %3793 = vmatpush1.msra.mxu0 0.0
    %3794 = vmatprep.subr.mxu0 0.0
    %3795 = vmatpush1.msra.mxu0 0.0
    %3796 = vmatprep.subr.mxu0 0.0
    %3797 = vmatpush1.msra.mxu0 0.0
    %3798 = vmatprep.subr.mxu0 0.0
    %3799 = vmatpush1.msra.mxu0 0.0
    %3800 = vmatprep.subr.mxu0 0.0
    %3801 = vmatpush1.msra.mxu0 0.0
    %3802 = vmatprep.subr.mxu0 0.0
    %3803 = vmatpush1.msra.mxu0 0.0
    %3804 = vmatprep.subr.mxu0 0.0
    %3805 = vmatpush1.msra.mxu0 0.0
    %3806 = vmatprep.subr.mxu0 0.0
    %3807 = vmatpush1.msra.mxu0 0.0
    %3808 = vmatprep.subr.mxu0 0.0
    %3809 = vmatpush1.msra.mxu0 0.0
    %3810 = vmatprep.subr.mxu0 0.0
    %3811 = vmatpush1.msra.mxu0 0.0
    %3812 = vmatprep.subr.mxu0 0.0
    %3813 = vmatpush1.msra.mxu0 0.0
    %3814 = vmatprep.subr.mxu0 0.0
    %3815 = vmatpush1.msra.mxu0 0.0
    %3816 = vmatprep.subr.mxu0 0.0
    %3817 = vmatpush1.msra.mxu0 0.0
    %3818 = vmatprep.subr.mxu0 0.0
    %3819 = vmatpush1.msra.mxu0 0.0
    %3820 = vmatprep.subr.mxu0 0.0
    %3821 = vmatpush1.msra.mxu0 %v3788
    %3822 = vmatprep.subr.mxu0 0.0
    %3823 = vmatpush2.msra.mxu0 0.0
    %3824 = vmatprep.subr.mxu0 0.0
    %3825 = vmatpush2.msra.mxu0 0.0
    %3826 = vmatprep.subr.mxu0 0.0
    %3827 = vmatpush2.msra.mxu0 0.0
    %3828 = vmatprep.subr.mxu0 0.0
    %3829 = vmatpush2.msra.mxu0 0.0
    %3830 = vmatprep.subr.mxu0 0.0
    %3831 = vmatpush2.msra.mxu0 0.0
    %3832 = vmatprep.subr.mxu0 0.0
    %3833 = vmatpush2.msra.mxu0 0.0
    %3834 = vmatprep.subr.mxu0 0.0
    %3835 = vmatpush2.msra.mxu0 0.0
    %3836 = vmatprep.subr.mxu0 0.0
    %3837 = vmatpush2.msra.mxu0 0.0
    %3838 = vmatprep.subr.mxu0 0.0
    %3839 = vmatpush2.msra.mxu0 0.0
    %3840 = vmatprep.subr.mxu0 0.0
    %3841 = vmatpush2.msra.mxu0 0.0
    %3842 = vmatprep.subr.mxu0 0.0
    %3843 = vmatpush2.msra.mxu0 0.0
    %3844 = vmatprep.subr.mxu0 0.0
    %3845 = vmatpush2.msra.mxu0 0.0
    %3846 = vmatprep.subr.mxu0 0.0
    %3847 = vmatpush2.msra.mxu0 0.0
    %3848 = vmatprep.subr.mxu0 0.0
    %3849 = vmatpush2.msra.mxu0 0.0
    %3850 = vmatprep.subr.mxu0 0.0
    %3851 = vmatpush2.msra.mxu0 0.0
    %3852 = vmatprep.subr.mxu0 0.0
    %3853 = vmatpush2.msra.mxu0 0.0
    %3854 = vmatprep.mubr.f32.mxu0 0.0
    %3855 = vmatmul.mubr.f32.gmra.mxu0 %v3786
    %v3856 = vpop.f32.mrf.mxu0
    %v3857 = vadd.f32 0.0, %v3856
    %v3858 = vpop.f32.mrf.mxu0
    %3859 = vdwg.mxu0
    %v3860 = vrot.slane %v3173, 4
    %v3862 = vsel %vm909, %v3549, 0
    %v3864 = vsel %vm913, %v3860, 0
    %3866 = vmatprep.subr.mxu0 0.0
    %3867 = vmatpush1.msra.mxu0 0.0
    %3868 = vmatprep.subr.mxu0 0.0
    %3869 = vmatpush1.msra.mxu0 0.0
    %3870 = vmatprep.subr.mxu0 0.0
    %3871 = vmatpush1.msra.mxu0 0.0
    %3872 = vmatprep.subr.mxu0 0.0
    %3873 = vmatpush1.msra.mxu0 0.0
    %3874 = vmatprep.subr.mxu0 0.0
    %3875 = vmatpush1.msra.mxu0 0.0
    %3876 = vmatprep.subr.mxu0 0.0
    %3877 = vmatpush1.msra.mxu0 0.0
    %3878 = vmatprep.subr.mxu0 0.0
    %3879 = vmatpush1.msra.mxu0 0.0
    %3880 = vmatprep.subr.mxu0 0.0
    %3881 = vmatpush1.msra.mxu0 0.0
    %3882 = vmatprep.subr.mxu0 0.0
    %3883 = vmatpush1.msra.mxu0 0.0
    %3884 = vmatprep.subr.mxu0 0.0
    %3885 = vmatpush1.msra.mxu0 0.0
    %3886 = vmatprep.subr.mxu0 0.0
    %3887 = vmatpush1.msra.mxu0 0.0
    %3888 = vmatprep.subr.mxu0 0.0
    %3889 = vmatpush1.msra.mxu0 0.0
    %3890 = vmatprep.subr.mxu0 0.0
    %3891 = vmatpush1.msra.mxu0 0.0
    %3892 = vmatprep.subr.mxu0 0.0
    %3893 = vmatpush1.msra.mxu0 0.0
    %3894 = vmatprep.subr.mxu0 0.0
    %3895 = vmatpush1.msra.mxu0 0.0
    %3896 = vmatprep.subr.mxu0 0.0
    %3897 = vmatpush1.msra.mxu0 %v3864
    %3898 = vmatprep.subr.mxu0 0.0
    %3899 = vmatpush2.msra.mxu0 0.0
    %3900 = vmatprep.subr.mxu0 0.0
    %3901 = vmatpush2.msra.mxu0 0.0
    %3902 = vmatprep.subr.mxu0 0.0
    %3903 = vmatpush2.msra.mxu0 0.0
    %3904 = vmatprep.subr.mxu0 0.0
    %3905 = vmatpush2.msra.mxu0 0.0
    %3906 = vmatprep.subr.mxu0 0.0
    %3907 = vmatpush2.msra.mxu0 0.0
    %3908 = vmatprep.subr.mxu0 0.0
    %3909 = vmatpush2.msra.mxu0 0.0
    %3910 = vmatprep.subr.mxu0 0.0
    %3911 = vmatpush2.msra.mxu0 0.0
    %3912 = vmatprep.subr.mxu0 0.0
    %3913 = vmatpush2.msra.mxu0 0.0
    %3914 = vmatprep.subr.mxu0 0.0
    %3915 = vmatpush2.msra.mxu0 0.0
    %3916 = vmatprep.subr.mxu0 0.0
    %3917 = vmatpush2.msra.mxu0 0.0
    %3918 = vmatprep.subr.mxu0 0.0
    %3919 = vmatpush2.msra.mxu0 0.0
    %3920 = vmatprep.subr.mxu0 0.0
    %3921 = vmatpush2.msra.mxu0 0.0
    %3922 = vmatprep.subr.mxu0 0.0
    %3923 = vmatpush2.msra.mxu0 0.0
    %3924 = vmatprep.subr.mxu0 0.0
    %3925 = vmatpush2.msra.mxu0 0.0
    %3926 = vmatprep.subr.mxu0 0.0
    %3927 = vmatpush2.msra.mxu0 0.0
    %3928 = vmatprep.subr.mxu0 0.0
    %3929 = vmatpush2.msra.mxu0 0.0
    %3930 = vmatprep.mubr.f32.mxu0 0.0
    %3931 = vmatmul.mubr.f32.gmra.mxu0 %v3862
    %v3932 = vpop.f32.mrf.mxu0
    %v3933 = vadd.f32 0.0, %v3932
    %v3934 = vpop.f32.mrf.mxu0
    %3935 = vdwg.mxu0
    %v3936 = vrot.slane %v3247, 4
    %v3938 = vsel %vm909, %v3551, 0
    %v3940 = vsel %vm913, %v3936, 0
    %3942 = vmatprep.subr.mxu0 0.0
    %3943 = vmatpush1.msra.mxu0 0.0
    %3944 = vmatprep.subr.mxu0 0.0
    %3945 = vmatpush1.msra.mxu0 0.0
    %3946 = vmatprep.subr.mxu0 0.0
    %3947 = vmatpush1.msra.mxu0 0.0
    %3948 = vmatprep.subr.mxu0 0.0
    %3949 = vmatpush1.msra.mxu0 0.0
    %3950 = vmatprep.subr.mxu0 0.0
    %3951 = vmatpush1.msra.mxu0 0.0
    %3952 = vmatprep.subr.mxu0 0.0
    %3953 = vmatpush1.msra.mxu0 0.0
    %3954 = vmatprep.subr.mxu0 0.0
    %3955 = vmatpush1.msra.mxu0 0.0
    %3956 = vmatprep.subr.mxu0 0.0
    %3957 = vmatpush1.msra.mxu0 0.0
    %3958 = vmatprep.subr.mxu0 0.0
    %3959 = vmatpush1.msra.mxu0 0.0
    %3960 = vmatprep.subr.mxu0 0.0
    %3961 = vmatpush1.msra.mxu0 0.0
    %3962 = vmatprep.subr.mxu0 0.0
    %3963 = vmatpush1.msra.mxu0 0.0
    %3964 = vmatprep.subr.mxu0 0.0
    %3965 = vmatpush1.msra.mxu0 0.0
    %3966 = vmatprep.subr.mxu0 0.0
    %3967 = vmatpush1.msra.mxu0 0.0
    %3968 = vmatprep.subr.mxu0 0.0
    %3969 = vmatpush1.msra.mxu0 0.0
    %3970 = vmatprep.subr.mxu0 0.0
    %3971 = vmatpush1.msra.mxu0 0.0
    %3972 = vmatprep.subr.mxu0 0.0
    %3973 = vmatpush1.msra.mxu0 %v3940
    %3974 = vmatprep.subr.mxu0 0.0
    %3975 = vmatpush2.msra.mxu0 0.0
    %3976 = vmatprep.subr.mxu0 0.0
    %3977 = vmatpush2.msra.mxu0 0.0
    %3978 = vmatprep.subr.mxu0 0.0
    %3979 = vmatpush2.msra.mxu0 0.0
    %3980 = vmatprep.subr.mxu0 0.0
    %3981 = vmatpush2.msra.mxu0 0.0
    %3982 = vmatprep.subr.mxu0 0.0
    %3983 = vmatpush2.msra.mxu0 0.0
    %3984 = vmatprep.subr.mxu0 0.0
    %3985 = vmatpush2.msra.mxu0 0.0
    %3986 = vmatprep.subr.mxu0 0.0
    %3987 = vmatpush2.msra.mxu0 0.0
    %3988 = vmatprep.subr.mxu0 0.0
    %3989 = vmatpush2.msra.mxu0 0.0
    %3990 = vmatprep.subr.mxu0 0.0
    %3991 = vmatpush2.msra.mxu0 0.0
    %3992 = vmatprep.subr.mxu0 0.0
    %3993 = vmatpush2.msra.mxu0 0.0
    %3994 = vmatprep.subr.mxu0 0.0
    %3995 = vmatpush2.msra.mxu0 0.0
    %3996 = vmatprep.subr.mxu0 0.0
    %3997 = vmatpush2.msra.mxu0 0.0
    %3998 = vmatprep.subr.mxu0 0.0
    %3999 = vmatpush2.msra.mxu0 0.0
    %4000 = vmatprep.subr.mxu0 0.0
    %4001 = vmatpush2.msra.mxu0 0.0
    %4002 = vmatprep.subr.mxu0 0.0
    %4003 = vmatpush2.msra.mxu0 0.0
    %4004 = vmatprep.subr.mxu0 0.0
    %4005 = vmatpush2.msra.mxu0 0.0
    %4006 = vmatprep.mubr.f32.mxu0 0.0
    %4007 = vmatmul.mubr.f32.gmra.mxu0 %v3938
    %v4008 = vpop.f32.mrf.mxu0
    %v4009 = vadd.f32 0.0, %v4008
    %v4010 = vpop.f32.mrf.mxu0
    %4011 = vdwg.mxu0
    %v4012 = vrot.slane %v3321, 4
    %v4014 = vsel %vm909, %v3553, 0
    %v4016 = vsel %vm913, %v4012, 0
    %4018 = vmatprep.subr.mxu0 0.0
    %4019 = vmatpush1.msra.mxu0 0.0
    %4020 = vmatprep.subr.mxu0 0.0
    %4021 = vmatpush1.msra.mxu0 0.0
    %4022 = vmatprep.subr.mxu0 0.0
    %4023 = vmatpush1.msra.mxu0 0.0
    %4024 = vmatprep.subr.mxu0 0.0
    %4025 = vmatpush1.msra.mxu0 0.0
    %4026 = vmatprep.subr.mxu0 0.0
    %4027 = vmatpush1.msra.mxu0 0.0
    %4028 = vmatprep.subr.mxu0 0.0
    %4029 = vmatpush1.msra.mxu0 0.0
    %4030 = vmatprep.subr.mxu0 0.0
    %4031 = vmatpush1.msra.mxu0 0.0
    %4032 = vmatprep.subr.mxu0 0.0
    %4033 = vmatpush1.msra.mxu0 0.0
    %4034 = vmatprep.subr.mxu0 0.0
    %4035 = vmatpush1.msra.mxu0 0.0
    %4036 = vmatprep.subr.mxu0 0.0
    %4037 = vmatpush1.msra.mxu0 0.0
    %4038 = vmatprep.subr.mxu0 0.0
    %4039 = vmatpush1.msra.mxu0 0.0
    %4040 = vmatprep.subr.mxu0 0.0
    %4041 = vmatpush1.msra.mxu0 0.0
    %4042 = vmatprep.subr.mxu0 0.0
    %4043 = vmatpush1.msra.mxu0 0.0
    %4044 = vmatprep.subr.mxu0 0.0
    %4045 = vmatpush1.msra.mxu0 0.0
    %4046 = vmatprep.subr.mxu0 0.0
    %4047 = vmatpush1.msra.mxu0 0.0
    %4048 = vmatprep.subr.mxu0 0.0
    %4049 = vmatpush1.msra.mxu0 %v4016
    %4050 = vmatprep.subr.mxu0 0.0
    %4051 = vmatpush2.msra.mxu0 0.0
    %4052 = vmatprep.subr.mxu0 0.0
    %4053 = vmatpush2.msra.mxu0 0.0
    %4054 = vmatprep.subr.mxu0 0.0
    %4055 = vmatpush2.msra.mxu0 0.0
    %4056 = vmatprep.subr.mxu0 0.0
    %4057 = vmatpush2.msra.mxu0 0.0
    %4058 = vmatprep.subr.mxu0 0.0
    %4059 = vmatpush2.msra.mxu0 0.0
    %4060 = vmatprep.subr.mxu0 0.0
    %4061 = vmatpush2.msra.mxu0 0.0
    %4062 = vmatprep.subr.mxu0 0.0
    %4063 = vmatpush2.msra.mxu0 0.0
    %4064 = vmatprep.subr.mxu0 0.0
    %4065 = vmatpush2.msra.mxu0 0.0
    %4066 = vmatprep.subr.mxu0 0.0
    %4067 = vmatpush2.msra.mxu0 0.0
    %4068 = vmatprep.subr.mxu0 0.0
    %4069 = vmatpush2.msra.mxu0 0.0
    %4070 = vmatprep.subr.mxu0 0.0
    %4071 = vmatpush2.msra.mxu0 0.0
    %4072 = vmatprep.subr.mxu0 0.0
    %4073 = vmatpush2.msra.mxu0 0.0
    %4074 = vmatprep.subr.mxu0 0.0
    %4075 = vmatpush2.msra.mxu0 0.0
    %4076 = vmatprep.subr.mxu0 0.0
    %4077 = vmatpush2.msra.mxu0 0.0
    %4078 = vmatprep.subr.mxu0 0.0
    %4079 = vmatpush2.msra.mxu0 0.0
    %4080 = vmatprep.subr.mxu0 0.0
    %4081 = vmatpush2.msra.mxu0 0.0
    %4082 = vmatprep.mubr.f32.mxu0 0.0
    %4083 = vmatmul.mubr.f32.gmra.mxu0 %v4014
    %v4084 = vpop.f32.mrf.mxu0
    %v4085 = vadd.f32 0.0, %v4084
    %v4086 = vpop.f32.mrf.mxu0
    %4087 = vdwg.mxu0
    %v4088 = vrot.slane %v3395, 4
    %v4090 = vsel %vm909, %v3555, 0
    %v4092 = vsel %vm913, %v4088, 0
    %4094 = vmatprep.subr.mxu0 0.0
    %4095 = vmatpush1.msra.mxu0 0.0
    %4096 = vmatprep.subr.mxu0 0.0
    %4097 = vmatpush1.msra.mxu0 0.0
    %4098 = vmatprep.subr.mxu0 0.0
    %4099 = vmatpush1.msra.mxu0 0.0
    %4100 = vmatprep.subr.mxu0 0.0
    %4101 = vmatpush1.msra.mxu0 0.0
    %4102 = vmatprep.subr.mxu0 0.0
    %4103 = vmatpush1.msra.mxu0 0.0
    %4104 = vmatprep.subr.mxu0 0.0
    %4105 = vmatpush1.msra.mxu0 0.0
    %4106 = vmatprep.subr.mxu0 0.0
    %4107 = vmatpush1.msra.mxu0 0.0
    %4108 = vmatprep.subr.mxu0 0.0
    %4109 = vmatpush1.msra.mxu0 0.0
    %4110 = vmatprep.subr.mxu0 0.0
    %4111 = vmatpush1.msra.mxu0 0.0
    %4112 = vmatprep.subr.mxu0 0.0
    %4113 = vmatpush1.msra.mxu0 0.0
    %4114 = vmatprep.subr.mxu0 0.0
    %4115 = vmatpush1.msra.mxu0 0.0
    %4116 = vmatprep.subr.mxu0 0.0
    %4117 = vmatpush1.msra.mxu0 0.0
    %4118 = vmatprep.subr.mxu0 0.0
    %4119 = vmatpush1.msra.mxu0 0.0
    %4120 = vmatprep.subr.mxu0 0.0
    %4121 = vmatpush1.msra.mxu0 0.0
    %4122 = vmatprep.subr.mxu0 0.0
    %4123 = vmatpush1.msra.mxu0 0.0
    %4124 = vmatprep.subr.mxu0 0.0
    %4125 = vmatpush1.msra.mxu0 %v4092
    %4126 = vmatprep.subr.mxu0 0.0
    %4127 = vmatpush2.msra.mxu0 0.0
    %4128 = vmatprep.subr.mxu0 0.0
    %4129 = vmatpush2.msra.mxu0 0.0
    %4130 = vmatprep.subr.mxu0 0.0
    %4131 = vmatpush2.msra.mxu0 0.0
    %4132 = vmatprep.subr.mxu0 0.0
    %4133 = vmatpush2.msra.mxu0 0.0
    %4134 = vmatprep.subr.mxu0 0.0
    %4135 = vmatpush2.msra.mxu0 0.0
    %4136 = vmatprep.subr.mxu0 0.0
    %4137 = vmatpush2.msra.mxu0 0.0
    %4138 = vmatprep.subr.mxu0 0.0
    %4139 = vmatpush2.msra.mxu0 0.0
    %4140 = vmatprep.subr.mxu0 0.0
    %4141 = vmatpush2.msra.mxu0 0.0
    %4142 = vmatprep.subr.mxu0 0.0
    %4143 = vmatpush2.msra.mxu0 0.0
    %4144 = vmatprep.subr.mxu0 0.0
    %4145 = vmatpush2.msra.mxu0 0.0
    %4146 = vmatprep.subr.mxu0 0.0
    %4147 = vmatpush2.msra.mxu0 0.0
    %4148 = vmatprep.subr.mxu0 0.0
    %4149 = vmatpush2.msra.mxu0 0.0
    %4150 = vmatprep.subr.mxu0 0.0
    %4151 = vmatpush2.msra.mxu0 0.0
    %4152 = vmatprep.subr.mxu0 0.0
    %4153 = vmatpush2.msra.mxu0 0.0
    %4154 = vmatprep.subr.mxu0 0.0
    %4155 = vmatpush2.msra.mxu0 0.0
    %4156 = vmatprep.subr.mxu0 0.0
    %4157 = vmatpush2.msra.mxu0 0.0
    %4158 = vmatprep.mubr.f32.mxu0 0.0
    %4159 = vmatmul.mubr.f32.gmra.mxu0 %v4090
    %v4160 = vpop.f32.mrf.mxu0
    %v4161 = vadd.f32 0.0, %v4160
    %v4162 = vpop.f32.mrf.mxu0
    %4163 = vdwg.mxu0
    %v4172 = vrot.slane %v3705, 7
    %v4173 = vsel %vm1527, %v4172, %v3629
    %v4174 = vrot.slane %v3781, 6
    %v4175 = vsel %vm1530, %v4174, %v4173
    %v4176 = vrot.slane %v3857, 5
    %v4177 = vsel %vm1533, %v4176, %v4175
    %v4178 = vrot.slane %v3933, 4
    %v4179 = vsel %vm1536, %v4178, %v4177
    %v4180 = vrot.slane %v4009, 3
    %v4181 = vsel %vm1539, %v4180, %v4179
    %v4182 = vrot.slane %v4085, 2
    %v4183 = vsel %vm1542, %v4182, %v4181
    %v4184 = vrot.slane %v4161, 1
    %v4185 = vsel %vm1545, %v4184, %v4183
    %4186 = vrot.lane.b32.xlu0 %v4185, 64
    %v4187 = vpop.permute.xlu0 %4186
    %vm4189 = vcmask 785920
    %4190 = vst.msk [vmem:[#allocation2] sm:$0xff] %vm4189, %v4187
    %4191 = vrot.lane.b32.xlu0 %v1552, 32
    %v4192 = vpop.permute.xlu0 %4191
    %4193 = vrot.lane.b32.xlu0 %v230, 32
    %v4194 = vpop.permute.xlu0 %4193
    %v4195 = vsel %vm239, %v4192, 0
    %v4197 = vsel %vm239, %v4194, 0
    %4199 = vmatprep.subr.mxu0 0.0
    %4200 = vmatpush1.xpose.msra.mxu0 0.0
    %4201 = vmatprep.subr.mxu0 0.0
    %4202 = vmatpush1.xpose.msra.mxu0 0.0
    %4203 = vmatprep.subr.mxu0 0.0
    %4204 = vmatpush1.xpose.msra.mxu0 0.0
    %4205 = vmatprep.subr.mxu0 0.0
    %4206 = vmatpush1.xpose.msra.mxu0 0.0
    %4207 = vmatprep.subr.mxu0 0.0
    %4208 = vmatpush1.xpose.msra.mxu0 0.0
    %4209 = vmatprep.subr.mxu0 0.0
    %4210 = vmatpush1.xpose.msra.mxu0 0.0
    %4211 = vmatprep.subr.mxu0 0.0
    %4212 = vmatpush1.xpose.msra.mxu0 0.0
    %4213 = vmatprep.subr.mxu0 0.0
    %4214 = vmatpush1.xpose.msra.mxu0 0.0
    %4215 = vmatprep.subr.mxu0 0.0
    %4216 = vmatpush1.xpose.msra.mxu0 0.0
    %4217 = vmatprep.subr.mxu0 0.0
    %4218 = vmatpush1.xpose.msra.mxu0 0.0
    %4219 = vmatprep.subr.mxu0 0.0
    %4220 = vmatpush1.xpose.msra.mxu0 0.0
    %4221 = vmatprep.subr.mxu0 0.0
    %4222 = vmatpush1.xpose.msra.mxu0 0.0
    %4223 = vmatprep.subr.mxu0 0.0
    %4224 = vmatpush1.xpose.msra.mxu0 0.0
    %4225 = vmatprep.subr.mxu0 0.0
    %4226 = vmatpush1.xpose.msra.mxu0 0.0
    %4227 = vmatprep.subr.mxu0 0.0
    %4228 = vmatpush1.xpose.msra.mxu0 0.0
    %4229 = vmatprep.subr.mxu0 0.0
    %4230 = vmatpush1.xpose.msra.mxu0 %v4197
    %4231 = vmatprep.subr.mxu0 0.0
    %4232 = vmatpush2.xpose.msra.mxu0 0.0
    %4233 = vmatprep.subr.mxu0 0.0
    %4234 = vmatpush2.xpose.msra.mxu0 0.0
    %4235 = vmatprep.subr.mxu0 0.0
    %4236 = vmatpush2.xpose.msra.mxu0 0.0
    %4237 = vmatprep.subr.mxu0 0.0
    %4238 = vmatpush2.xpose.msra.mxu0 0.0
    %4239 = vmatprep.subr.mxu0 0.0
    %4240 = vmatpush2.xpose.msra.mxu0 0.0
    %4241 = vmatprep.subr.mxu0 0.0
    %4242 = vmatpush2.xpose.msra.mxu0 0.0
    %4243 = vmatprep.subr.mxu0 0.0
    %4244 = vmatpush2.xpose.msra.mxu0 0.0
    %4245 = vmatprep.subr.mxu0 0.0
    %4246 = vmatpush2.xpose.msra.mxu0 0.0
    %4247 = vmatprep.subr.mxu0 0.0
    %4248 = vmatpush2.xpose.msra.mxu0 0.0
    %4249 = vmatprep.subr.mxu0 0.0
    %4250 = vmatpush2.xpose.msra.mxu0 0.0
    %4251 = vmatprep.subr.mxu0 0.0
    %4252 = vmatpush2.xpose.msra.mxu0 0.0
    %4253 = vmatprep.subr.mxu0 0.0
    %4254 = vmatpush2.xpose.msra.mxu0 0.0
    %4255 = vmatprep.subr.mxu0 0.0
    %4256 = vmatpush2.xpose.msra.mxu0 0.0
    %4257 = vmatprep.subr.mxu0 0.0
    %4258 = vmatpush2.xpose.msra.mxu0 0.0
    %4259 = vmatprep.subr.mxu0 0.0
    %4260 = vmatpush2.xpose.msra.mxu0 0.0
    %4261 = vmatprep.subr.mxu0 0.0
    %4262 = vmatpush2.xpose.msra.mxu0 0.0
    %4263 = vmatprep.mubr.f32.mxu0 0.0
    %4264 = vmatmul.mubr.f32.gmra.mxu0 %v4195
    %v4265 = vpop.f32.mrf.mxu0
    %v4266 = vadd.f32 0.0, %v4265
    %v4267 = vpop.f32.mrf.mxu0
    %4268 = vdwg.mxu0
    %4269 = vrot.lane.b32.xlu0 %v231, 32
    %v4270 = vpop.permute.xlu0 %4269
    %v4271 = vsel %vm239, %v4270, 0
    %4273 = vmatprep.subr.mxu0 0.0
    %4274 = vmatpush1.xpose.msra.mxu0 0.0
    %4275 = vmatprep.subr.mxu0 0.0
    %4276 = vmatpush1.xpose.msra.mxu0 0.0
    %4277 = vmatprep.subr.mxu0 0.0
    %4278 = vmatpush1.xpose.msra.mxu0 0.0
    %4279 = vmatprep.subr.mxu0 0.0
    %4280 = vmatpush1.xpose.msra.mxu0 0.0
    %4281 = vmatprep.subr.mxu0 0.0
    %4282 = vmatpush1.xpose.msra.mxu0 0.0
    %4283 = vmatprep.subr.mxu0 0.0
    %4284 = vmatpush1.xpose.msra.mxu0 0.0
    %4285 = vmatprep.subr.mxu0 0.0
    %4286 = vmatpush1.xpose.msra.mxu0 0.0
    %4287 = vmatprep.subr.mxu0 0.0
    %4288 = vmatpush1.xpose.msra.mxu0 0.0
    %4289 = vmatprep.subr.mxu0 0.0
    %4290 = vmatpush1.xpose.msra.mxu0 0.0
    %4291 = vmatprep.subr.mxu0 0.0
    %4292 = vmatpush1.xpose.msra.mxu0 0.0
    %4293 = vmatprep.subr.mxu0 0.0
    %4294 = vmatpush1.xpose.msra.mxu0 0.0
    %4295 = vmatprep.subr.mxu0 0.0
    %4296 = vmatpush1.xpose.msra.mxu0 0.0
    %4297 = vmatprep.subr.mxu0 0.0
    %4298 = vmatpush1.xpose.msra.mxu0 0.0
    %4299 = vmatprep.subr.mxu0 0.0
    %4300 = vmatpush1.xpose.msra.mxu0 0.0
    %4301 = vmatprep.subr.mxu0 0.0
    %4302 = vmatpush1.xpose.msra.mxu0 0.0
    %4303 = vmatprep.subr.mxu0 0.0
    %4304 = vmatpush1.xpose.msra.mxu0 %v4271
    %4305 = vmatprep.subr.mxu0 0.0
    %4306 = vmatpush2.xpose.msra.mxu0 0.0
    %4307 = vmatprep.subr.mxu0 0.0
    %4308 = vmatpush2.xpose.msra.mxu0 0.0
    %4309 = vmatprep.subr.mxu0 0.0
    %4310 = vmatpush2.xpose.msra.mxu0 0.0
    %4311 = vmatprep.subr.mxu0 0.0
    %4312 = vmatpush2.xpose.msra.mxu0 0.0
    %4313 = vmatprep.subr.mxu0 0.0
    %4314 = vmatpush2.xpose.msra.mxu0 0.0
    %4315 = vmatprep.subr.mxu0 0.0
    %4316 = vmatpush2.xpose.msra.mxu0 0.0
    %4317 = vmatprep.subr.mxu0 0.0
    %4318 = vmatpush2.xpose.msra.mxu0 0.0
    %4319 = vmatprep.subr.mxu0 0.0
    %4320 = vmatpush2.xpose.msra.mxu0 0.0
    %4321 = vmatprep.subr.mxu0 0.0
    %4322 = vmatpush2.xpose.msra.mxu0 0.0
    %4323 = vmatprep.subr.mxu0 0.0
    %4324 = vmatpush2.xpose.msra.mxu0 0.0
    %4325 = vmatprep.subr.mxu0 0.0
    %4326 = vmatpush2.xpose.msra.mxu0 0.0
    %4327 = vmatprep.subr.mxu0 0.0
    %4328 = vmatpush2.xpose.msra.mxu0 0.0
    %4329 = vmatprep.subr.mxu0 0.0
    %4330 = vmatpush2.xpose.msra.mxu0 0.0
    %4331 = vmatprep.subr.mxu0 0.0
    %4332 = vmatpush2.xpose.msra.mxu0 0.0
    %4333 = vmatprep.subr.mxu0 0.0
    %4334 = vmatpush2.xpose.msra.mxu0 0.0
    %4335 = vmatprep.subr.mxu0 0.0
    %4336 = vmatpush2.xpose.msra.mxu0 0.0
    %4337 = vmatprep.mubr.f32.mxu0 0.0
    %4338 = vmatmul.mubr.f32.gmra.mxu0 %v4195
    %v4339 = vpop.f32.mrf.mxu0
    %v4340 = vadd.f32 0.0, %v4339
    %v4341 = vpop.f32.mrf.mxu0
    %4342 = vdwg.mxu0
    %4343 = vrot.lane.b32.xlu0 %v232, 32
    %v4344 = vpop.permute.xlu0 %4343
    %v4345 = vsel %vm239, %v4344, 0
    %4347 = vmatprep.subr.mxu0 0.0
    %4348 = vmatpush1.xpose.msra.mxu0 0.0
    %4349 = vmatprep.subr.mxu0 0.0
    %4350 = vmatpush1.xpose.msra.mxu0 0.0
    %4351 = vmatprep.subr.mxu0 0.0
    %4352 = vmatpush1.xpose.msra.mxu0 0.0
    %4353 = vmatprep.subr.mxu0 0.0
    %4354 = vmatpush1.xpose.msra.mxu0 0.0
    %4355 = vmatprep.subr.mxu0 0.0
    %4356 = vmatpush1.xpose.msra.mxu0 0.0
    %4357 = vmatprep.subr.mxu0 0.0
    %4358 = vmatpush1.xpose.msra.mxu0 0.0
    %4359 = vmatprep.subr.mxu0 0.0
    %4360 = vmatpush1.xpose.msra.mxu0 0.0
    %4361 = vmatprep.subr.mxu0 0.0
    %4362 = vmatpush1.xpose.msra.mxu0 0.0
    %4363 = vmatprep.subr.mxu0 0.0
    %4364 = vmatpush1.xpose.msra.mxu0 0.0
    %4365 = vmatprep.subr.mxu0 0.0
    %4366 = vmatpush1.xpose.msra.mxu0 0.0
    %4367 = vmatprep.subr.mxu0 0.0
    %4368 = vmatpush1.xpose.msra.mxu0 0.0
    %4369 = vmatprep.subr.mxu0 0.0
    %4370 = vmatpush1.xpose.msra.mxu0 0.0
    %4371 = vmatprep.subr.mxu0 0.0
    %4372 = vmatpush1.xpose.msra.mxu0 0.0
    %4373 = vmatprep.subr.mxu0 0.0
    %4374 = vmatpush1.xpose.msra.mxu0 0.0
    %4375 = vmatprep.subr.mxu0 0.0
    %4376 = vmatpush1.xpose.msra.mxu0 0.0
    %4377 = vmatprep.subr.mxu0 0.0
    %4378 = vmatpush1.xpose.msra.mxu0 %v4345
    %4379 = vmatprep.subr.mxu0 0.0
    %4380 = vmatpush2.xpose.msra.mxu0 0.0
    %4381 = vmatprep.subr.mxu0 0.0
    %4382 = vmatpush2.xpose.msra.mxu0 0.0
    %4383 = vmatprep.subr.mxu0 0.0
    %4384 = vmatpush2.xpose.msra.mxu0 0.0
    %4385 = vmatprep.subr.mxu0 0.0
    %4386 = vmatpush2.xpose.msra.mxu0 0.0
    %4387 = vmatprep.subr.mxu0 0.0
    %4388 = vmatpush2.xpose.msra.mxu0 0.0
    %4389 = vmatprep.subr.mxu0 0.0
    %4390 = vmatpush2.xpose.msra.mxu0 0.0
    %4391 = vmatprep.subr.mxu0 0.0
    %4392 = vmatpush2.xpose.msra.mxu0 0.0
    %4393 = vmatprep.subr.mxu0 0.0
    %4394 = vmatpush2.xpose.msra.mxu0 0.0
    %4395 = vmatprep.subr.mxu0 0.0
    %4396 = vmatpush2.xpose.msra.mxu0 0.0
    %4397 = vmatprep.subr.mxu0 0.0
    %4398 = vmatpush2.xpose.msra.mxu0 0.0
    %4399 = vmatprep.subr.mxu0 0.0
    %4400 = vmatpush2.xpose.msra.mxu0 0.0
    %4401 = vmatprep.subr.mxu0 0.0
    %4402 = vmatpush2.xpose.msra.mxu0 0.0
    %4403 = vmatprep.subr.mxu0 0.0
    %4404 = vmatpush2.xpose.msra.mxu0 0.0
    %4405 = vmatprep.subr.mxu0 0.0
    %4406 = vmatpush2.xpose.msra.mxu0 0.0
    %4407 = vmatprep.subr.mxu0 0.0
    %4408 = vmatpush2.xpose.msra.mxu0 0.0
    %4409 = vmatprep.subr.mxu0 0.0
    %4410 = vmatpush2.xpose.msra.mxu0 0.0
    %4411 = vmatprep.mubr.f32.mxu0 0.0
    %4412 = vmatmul.mubr.f32.gmra.mxu0 %v4195
    %v4413 = vpop.f32.mrf.mxu0
    %v4414 = vadd.f32 0.0, %v4413
    %v4415 = vpop.f32.mrf.mxu0
    %4416 = vdwg.mxu0
    %4417 = vrot.lane.b32.xlu0 %v233, 32
    %v4418 = vpop.permute.xlu0 %4417
    %v4419 = vsel %vm239, %v4418, 0
    %4421 = vmatprep.subr.mxu0 0.0
    %4422 = vmatpush1.xpose.msra.mxu0 0.0
    %4423 = vmatprep.subr.mxu0 0.0
    %4424 = vmatpush1.xpose.msra.mxu0 0.0
    %4425 = vmatprep.subr.mxu0 0.0
    %4426 = vmatpush1.xpose.msra.mxu0 0.0
    %4427 = vmatprep.subr.mxu0 0.0
    %4428 = vmatpush1.xpose.msra.mxu0 0.0
    %4429 = vmatprep.subr.mxu0 0.0
    %4430 = vmatpush1.xpose.msra.mxu0 0.0
    %4431 = vmatprep.subr.mxu0 0.0
    %4432 = vmatpush1.xpose.msra.mxu0 0.0
    %4433 = vmatprep.subr.mxu0 0.0
    %4434 = vmatpush1.xpose.msra.mxu0 0.0
    %4435 = vmatprep.subr.mxu0 0.0
    %4436 = vmatpush1.xpose.msra.mxu0 0.0
    %4437 = vmatprep.subr.mxu0 0.0
    %4438 = vmatpush1.xpose.msra.mxu0 0.0
    %4439 = vmatprep.subr.mxu0 0.0
    %4440 = vmatpush1.xpose.msra.mxu0 0.0
    %4441 = vmatprep.subr.mxu0 0.0
    %4442 = vmatpush1.xpose.msra.mxu0 0.0
    %4443 = vmatprep.subr.mxu0 0.0
    %4444 = vmatpush1.xpose.msra.mxu0 0.0
    %4445 = vmatprep.subr.mxu0 0.0
    %4446 = vmatpush1.xpose.msra.mxu0 0.0
    %4447 = vmatprep.subr.mxu0 0.0
    %4448 = vmatpush1.xpose.msra.mxu0 0.0
    %4449 = vmatprep.subr.mxu0 0.0
    %4450 = vmatpush1.xpose.msra.mxu0 0.0
    %4451 = vmatprep.subr.mxu0 0.0
    %4452 = vmatpush1.xpose.msra.mxu0 %v4419
    %4453 = vmatprep.subr.mxu0 0.0
    %4454 = vmatpush2.xpose.msra.mxu0 0.0
    %4455 = vmatprep.subr.mxu0 0.0
    %4456 = vmatpush2.xpose.msra.mxu0 0.0
    %4457 = vmatprep.subr.mxu0 0.0
    %4458 = vmatpush2.xpose.msra.mxu0 0.0
    %4459 = vmatprep.subr.mxu0 0.0
    %4460 = vmatpush2.xpose.msra.mxu0 0.0
    %4461 = vmatprep.subr.mxu0 0.0
    %4462 = vmatpush2.xpose.msra.mxu0 0.0
    %4463 = vmatprep.subr.mxu0 0.0
    %4464 = vmatpush2.xpose.msra.mxu0 0.0
    %4465 = vmatprep.subr.mxu0 0.0
    %4466 = vmatpush2.xpose.msra.mxu0 0.0
    %4467 = vmatprep.subr.mxu0 0.0
    %4468 = vmatpush2.xpose.msra.mxu0 0.0
    %4469 = vmatprep.subr.mxu0 0.0
    %4470 = vmatpush2.xpose.msra.mxu0 0.0
    %4471 = vmatprep.subr.mxu0 0.0
    %4472 = vmatpush2.xpose.msra.mxu0 0.0
    %4473 = vmatprep.subr.mxu0 0.0
    %4474 = vmatpush2.xpose.msra.mxu0 0.0
    %4475 = vmatprep.subr.mxu0 0.0
    %4476 = vmatpush2.xpose.msra.mxu0 0.0
    %4477 = vmatprep.subr.mxu0 0.0
    %4478 = vmatpush2.xpose.msra.mxu0 0.0
    %4479 = vmatprep.subr.mxu0 0.0
    %4480 = vmatpush2.xpose.msra.mxu0 0.0
    %4481 = vmatprep.subr.mxu0 0.0
    %4482 = vmatpush2.xpose.msra.mxu0 0.0
    %4483 = vmatprep.subr.mxu0 0.0
    %4484 = vmatpush2.xpose.msra.mxu0 0.0
    %4485 = vmatprep.mubr.f32.mxu0 0.0
    %4486 = vmatmul.mubr.f32.gmra.mxu0 %v4195
    %v4487 = vpop.f32.mrf.mxu0
    %v4488 = vadd.f32 0.0, %v4487
    %v4489 = vpop.f32.mrf.mxu0
    %4490 = vdwg.mxu0
    %4491 = vrot.lane.b32.xlu0 %v234, 32
    %v4492 = vpop.permute.xlu0 %4491
    %v4493 = vsel %vm239, %v4492, 0
    %4495 = vmatprep.subr.mxu0 0.0
    %4496 = vmatpush1.xpose.msra.mxu0 0.0
    %4497 = vmatprep.subr.mxu0 0.0
    %4498 = vmatpush1.xpose.msra.mxu0 0.0
    %4499 = vmatprep.subr.mxu0 0.0
    %4500 = vmatpush1.xpose.msra.mxu0 0.0
    %4501 = vmatprep.subr.mxu0 0.0
    %4502 = vmatpush1.xpose.msra.mxu0 0.0
    %4503 = vmatprep.subr.mxu0 0.0
    %4504 = vmatpush1.xpose.msra.mxu0 0.0
    %4505 = vmatprep.subr.mxu0 0.0
    %4506 = vmatpush1.xpose.msra.mxu0 0.0
    %4507 = vmatprep.subr.mxu0 0.0
    %4508 = vmatpush1.xpose.msra.mxu0 0.0
    %4509 = vmatprep.subr.mxu0 0.0
    %4510 = vmatpush1.xpose.msra.mxu0 0.0
    %4511 = vmatprep.subr.mxu0 0.0
    %4512 = vmatpush1.xpose.msra.mxu0 0.0
    %4513 = vmatprep.subr.mxu0 0.0
    %4514 = vmatpush1.xpose.msra.mxu0 0.0
    %4515 = vmatprep.subr.mxu0 0.0
    %4516 = vmatpush1.xpose.msra.mxu0 0.0
    %4517 = vmatprep.subr.mxu0 0.0
    %4518 = vmatpush1.xpose.msra.mxu0 0.0
    %4519 = vmatprep.subr.mxu0 0.0
    %4520 = vmatpush1.xpose.msra.mxu0 0.0
    %4521 = vmatprep.subr.mxu0 0.0
    %4522 = vmatpush1.xpose.msra.mxu0 0.0
    %4523 = vmatprep.subr.mxu0 0.0
    %4524 = vmatpush1.xpose.msra.mxu0 0.0
    %4525 = vmatprep.subr.mxu0 0.0
    %4526 = vmatpush1.xpose.msra.mxu0 %v4493
    %4527 = vmatprep.subr.mxu0 0.0
    %4528 = vmatpush2.xpose.msra.mxu0 0.0
    %4529 = vmatprep.subr.mxu0 0.0
    %4530 = vmatpush2.xpose.msra.mxu0 0.0
    %4531 = vmatprep.subr.mxu0 0.0
    %4532 = vmatpush2.xpose.msra.mxu0 0.0
    %4533 = vmatprep.subr.mxu0 0.0
    %4534 = vmatpush2.xpose.msra.mxu0 0.0
    %4535 = vmatprep.subr.mxu0 0.0
    %4536 = vmatpush2.xpose.msra.mxu0 0.0
    %4537 = vmatprep.subr.mxu0 0.0
    %4538 = vmatpush2.xpose.msra.mxu0 0.0
    %4539 = vmatprep.subr.mxu0 0.0
    %4540 = vmatpush2.xpose.msra.mxu0 0.0
    %4541 = vmatprep.subr.mxu0 0.0
    %4542 = vmatpush2.xpose.msra.mxu0 0.0
    %4543 = vmatprep.subr.mxu0 0.0
    %4544 = vmatpush2.xpose.msra.mxu0 0.0
    %4545 = vmatprep.subr.mxu0 0.0
    %4546 = vmatpush2.xpose.msra.mxu0 0.0
    %4547 = vmatprep.subr.mxu0 0.0
    %4548 = vmatpush2.xpose.msra.mxu0 0.0
    %4549 = vmatprep.subr.mxu0 0.0
    %4550 = vmatpush2.xpose.msra.mxu0 0.0
    %4551 = vmatprep.subr.mxu0 0.0
    %4552 = vmatpush2.xpose.msra.mxu0 0.0
    %4553 = vmatprep.subr.mxu0 0.0
    %4554 = vmatpush2.xpose.msra.mxu0 0.0
    %4555 = vmatprep.subr.mxu0 0.0
    %4556 = vmatpush2.xpose.msra.mxu0 0.0
    %4557 = vmatprep.subr.mxu0 0.0
    %4558 = vmatpush2.xpose.msra.mxu0 0.0
    %4559 = vmatprep.mubr.f32.mxu0 0.0
    %4560 = vmatmul.mubr.f32.gmra.mxu0 %v4195
    %v4561 = vpop.f32.mrf.mxu0
    %v4562 = vadd.f32 0.0, %v4561
    %v4563 = vpop.f32.mrf.mxu0
    %4564 = vdwg.mxu0
    %4565 = vrot.lane.b32.xlu0 %v235, 32
    %v4566 = vpop.permute.xlu0 %4565
    %v4567 = vsel %vm239, %v4566, 0
    %4569 = vmatprep.subr.mxu0 0.0
    %4570 = vmatpush1.xpose.msra.mxu0 0.0
    %4571 = vmatprep.subr.mxu0 0.0
    %4572 = vmatpush1.xpose.msra.mxu0 0.0
    %4573 = vmatprep.subr.mxu0 0.0
    %4574 = vmatpush1.xpose.msra.mxu0 0.0
    %4575 = vmatprep.subr.mxu0 0.0
    %4576 = vmatpush1.xpose.msra.mxu0 0.0
    %4577 = vmatprep.subr.mxu0 0.0
    %4578 = vmatpush1.xpose.msra.mxu0 0.0
    %4579 = vmatprep.subr.mxu0 0.0
    %4580 = vmatpush1.xpose.msra.mxu0 0.0
    %4581 = vmatprep.subr.mxu0 0.0
    %4582 = vmatpush1.xpose.msra.mxu0 0.0
    %4583 = vmatprep.subr.mxu0 0.0
    %4584 = vmatpush1.xpose.msra.mxu0 0.0
    %4585 = vmatprep.subr.mxu0 0.0
    %4586 = vmatpush1.xpose.msra.mxu0 0.0
    %4587 = vmatprep.subr.mxu0 0.0
    %4588 = vmatpush1.xpose.msra.mxu0 0.0
    %4589 = vmatprep.subr.mxu0 0.0
    %4590 = vmatpush1.xpose.msra.mxu0 0.0
    %4591 = vmatprep.subr.mxu0 0.0
    %4592 = vmatpush1.xpose.msra.mxu0 0.0
    %4593 = vmatprep.subr.mxu0 0.0
    %4594 = vmatpush1.xpose.msra.mxu0 0.0
    %4595 = vmatprep.subr.mxu0 0.0
    %4596 = vmatpush1.xpose.msra.mxu0 0.0
    %4597 = vmatprep.subr.mxu0 0.0
    %4598 = vmatpush1.xpose.msra.mxu0 0.0
    %4599 = vmatprep.subr.mxu0 0.0
    %4600 = vmatpush1.xpose.msra.mxu0 %v4567
    %4601 = vmatprep.subr.mxu0 0.0
    %4602 = vmatpush2.xpose.msra.mxu0 0.0
    %4603 = vmatprep.subr.mxu0 0.0
    %4604 = vmatpush2.xpose.msra.mxu0 0.0
    %4605 = vmatprep.subr.mxu0 0.0
    %4606 = vmatpush2.xpose.msra.mxu0 0.0
    %4607 = vmatprep.subr.mxu0 0.0
    %4608 = vmatpush2.xpose.msra.mxu0 0.0
    %4609 = vmatprep.subr.mxu0 0.0
    %4610 = vmatpush2.xpose.msra.mxu0 0.0
    %4611 = vmatprep.subr.mxu0 0.0
    %4612 = vmatpush2.xpose.msra.mxu0 0.0
    %4613 = vmatprep.subr.mxu0 0.0
    %4614 = vmatpush2.xpose.msra.mxu0 0.0
    %4615 = vmatprep.subr.mxu0 0.0
    %4616 = vmatpush2.xpose.msra.mxu0 0.0
    %4617 = vmatprep.subr.mxu0 0.0
    %4618 = vmatpush2.xpose.msra.mxu0 0.0
    %4619 = vmatprep.subr.mxu0 0.0
    %4620 = vmatpush2.xpose.msra.mxu0 0.0
    %4621 = vmatprep.subr.mxu0 0.0
    %4622 = vmatpush2.xpose.msra.mxu0 0.0
    %4623 = vmatprep.subr.mxu0 0.0
    %4624 = vmatpush2.xpose.msra.mxu0 0.0
    %4625 = vmatprep.subr.mxu0 0.0
    %4626 = vmatpush2.xpose.msra.mxu0 0.0
    %4627 = vmatprep.subr.mxu0 0.0
    %4628 = vmatpush2.xpose.msra.mxu0 0.0
    %4629 = vmatprep.subr.mxu0 0.0
    %4630 = vmatpush2.xpose.msra.mxu0 0.0
    %4631 = vmatprep.subr.mxu0 0.0
    %4632 = vmatpush2.xpose.msra.mxu0 0.0
    %4633 = vmatprep.mubr.f32.mxu0 0.0
    %4634 = vmatmul.mubr.f32.gmra.mxu0 %v4195
    %v4635 = vpop.f32.mrf.mxu0
    %v4636 = vadd.f32 0.0, %v4635
    %v4637 = vpop.f32.mrf.mxu0
    %4638 = vdwg.mxu0
    %4639 = vrot.lane.b32.xlu0 %v236, 32
    %v4640 = vpop.permute.xlu0 %4639
    %v4641 = vsel %vm239, %v4640, 0
    %4643 = vmatprep.subr.mxu0 0.0
    %4644 = vmatpush1.xpose.msra.mxu0 0.0
    %4645 = vmatprep.subr.mxu0 0.0
    %4646 = vmatpush1.xpose.msra.mxu0 0.0
    %4647 = vmatprep.subr.mxu0 0.0
    %4648 = vmatpush1.xpose.msra.mxu0 0.0
    %4649 = vmatprep.subr.mxu0 0.0
    %4650 = vmatpush1.xpose.msra.mxu0 0.0
    %4651 = vmatprep.subr.mxu0 0.0
    %4652 = vmatpush1.xpose.msra.mxu0 0.0
    %4653 = vmatprep.subr.mxu0 0.0
    %4654 = vmatpush1.xpose.msra.mxu0 0.0
    %4655 = vmatprep.subr.mxu0 0.0
    %4656 = vmatpush1.xpose.msra.mxu0 0.0
    %4657 = vmatprep.subr.mxu0 0.0
    %4658 = vmatpush1.xpose.msra.mxu0 0.0
    %4659 = vmatprep.subr.mxu0 0.0
    %4660 = vmatpush1.xpose.msra.mxu0 0.0
    %4661 = vmatprep.subr.mxu0 0.0
    %4662 = vmatpush1.xpose.msra.mxu0 0.0
    %4663 = vmatprep.subr.mxu0 0.0
    %4664 = vmatpush1.xpose.msra.mxu0 0.0
    %4665 = vmatprep.subr.mxu0 0.0
    %4666 = vmatpush1.xpose.msra.mxu0 0.0
    %4667 = vmatprep.subr.mxu0 0.0
    %4668 = vmatpush1.xpose.msra.mxu0 0.0
    %4669 = vmatprep.subr.mxu0 0.0
    %4670 = vmatpush1.xpose.msra.mxu0 0.0
    %4671 = vmatprep.subr.mxu0 0.0
    %4672 = vmatpush1.xpose.msra.mxu0 0.0
    %4673 = vmatprep.subr.mxu0 0.0
    %4674 = vmatpush1.xpose.msra.mxu0 %v4641
    %4675 = vmatprep.subr.mxu0 0.0
    %4676 = vmatpush2.xpose.msra.mxu0 0.0
    %4677 = vmatprep.subr.mxu0 0.0
    %4678 = vmatpush2.xpose.msra.mxu0 0.0
    %4679 = vmatprep.subr.mxu0 0.0
    %4680 = vmatpush2.xpose.msra.mxu0 0.0
    %4681 = vmatprep.subr.mxu0 0.0
    %4682 = vmatpush2.xpose.msra.mxu0 0.0
    %4683 = vmatprep.subr.mxu0 0.0
    %4684 = vmatpush2.xpose.msra.mxu0 0.0
    %4685 = vmatprep.subr.mxu0 0.0
    %4686 = vmatpush2.xpose.msra.mxu0 0.0
    %4687 = vmatprep.subr.mxu0 0.0
    %4688 = vmatpush2.xpose.msra.mxu0 0.0
    %4689 = vmatprep.subr.mxu0 0.0
    %4690 = vmatpush2.xpose.msra.mxu0 0.0
    %4691 = vmatprep.subr.mxu0 0.0
    %4692 = vmatpush2.xpose.msra.mxu0 0.0
    %4693 = vmatprep.subr.mxu0 0.0
    %4694 = vmatpush2.xpose.msra.mxu0 0.0
    %4695 = vmatprep.subr.mxu0 0.0
    %4696 = vmatpush2.xpose.msra.mxu0 0.0
    %4697 = vmatprep.subr.mxu0 0.0
    %4698 = vmatpush2.xpose.msra.mxu0 0.0
    %4699 = vmatprep.subr.mxu0 0.0
    %4700 = vmatpush2.xpose.msra.mxu0 0.0
    %4701 = vmatprep.subr.mxu0 0.0
    %4702 = vmatpush2.xpose.msra.mxu0 0.0
    %4703 = vmatprep.subr.mxu0 0.0
    %4704 = vmatpush2.xpose.msra.mxu0 0.0
    %4705 = vmatprep.subr.mxu0 0.0
    %4706 = vmatpush2.xpose.msra.mxu0 0.0
    %4707 = vmatprep.mubr.f32.mxu0 0.0
    %4708 = vmatmul.mubr.f32.gmra.mxu0 %v4195
    %v4709 = vpop.f32.mrf.mxu0
    %v4710 = vadd.f32 0.0, %v4709
    %v4711 = vpop.f32.mrf.mxu0
    %4712 = vdwg.mxu0
    %4713 = vrot.lane.b32.xlu0 %v237, 32
    %v4714 = vpop.permute.xlu0 %4713
    %v4715 = vsel %vm239, %v4714, 0
    %4717 = vmatprep.subr.mxu0 0.0
    %4718 = vmatpush1.xpose.msra.mxu0 0.0
    %4719 = vmatprep.subr.mxu0 0.0
    %4720 = vmatpush1.xpose.msra.mxu0 0.0
    %4721 = vmatprep.subr.mxu0 0.0
    %4722 = vmatpush1.xpose.msra.mxu0 0.0
    %4723 = vmatprep.subr.mxu0 0.0
    %4724 = vmatpush1.xpose.msra.mxu0 0.0
    %4725 = vmatprep.subr.mxu0 0.0
    %4726 = vmatpush1.xpose.msra.mxu0 0.0
    %4727 = vmatprep.subr.mxu0 0.0
    %4728 = vmatpush1.xpose.msra.mxu0 0.0
    %4729 = vmatprep.subr.mxu0 0.0
    %4730 = vmatpush1.xpose.msra.mxu0 0.0
    %4731 = vmatprep.subr.mxu0 0.0
    %4732 = vmatpush1.xpose.msra.mxu0 0.0
    %4733 = vmatprep.subr.mxu0 0.0
    %4734 = vmatpush1.xpose.msra.mxu0 0.0
    %4735 = vmatprep.subr.mxu0 0.0
    %4736 = vmatpush1.xpose.msra.mxu0 0.0
    %4737 = vmatprep.subr.mxu0 0.0
    %4738 = vmatpush1.xpose.msra.mxu0 0.0
    %4739 = vmatprep.subr.mxu0 0.0
    %4740 = vmatpush1.xpose.msra.mxu0 0.0
    %4741 = vmatprep.subr.mxu0 0.0
    %4742 = vmatpush1.xpose.msra.mxu0 0.0
    %4743 = vmatprep.subr.mxu0 0.0
    %4744 = vmatpush1.xpose.msra.mxu0 0.0
    %4745 = vmatprep.subr.mxu0 0.0
    %4746 = vmatpush1.xpose.msra.mxu0 0.0
    %4747 = vmatprep.subr.mxu0 0.0
    %4748 = vmatpush1.xpose.msra.mxu0 %v4715
    %4749 = vmatprep.subr.mxu0 0.0
    %4750 = vmatpush2.xpose.msra.mxu0 0.0
    %4751 = vmatprep.subr.mxu0 0.0
    %4752 = vmatpush2.xpose.msra.mxu0 0.0
    %4753 = vmatprep.subr.mxu0 0.0
    %4754 = vmatpush2.xpose.msra.mxu0 0.0
    %4755 = vmatprep.subr.mxu0 0.0
    %4756 = vmatpush2.xpose.msra.mxu0 0.0
    %4757 = vmatprep.subr.mxu0 0.0
    %4758 = vmatpush2.xpose.msra.mxu0 0.0
    %4759 = vmatprep.subr.mxu0 0.0
    %4760 = vmatpush2.xpose.msra.mxu0 0.0
    %4761 = vmatprep.subr.mxu0 0.0
    %4762 = vmatpush2.xpose.msra.mxu0 0.0
    %4763 = vmatprep.subr.mxu0 0.0
    %4764 = vmatpush2.xpose.msra.mxu0 0.0
    %4765 = vmatprep.subr.mxu0 0.0
    %4766 = vmatpush2.xpose.msra.mxu0 0.0
    %4767 = vmatprep.subr.mxu0 0.0
    %4768 = vmatpush2.xpose.msra.mxu0 0.0
    %4769 = vmatprep.subr.mxu0 0.0
    %4770 = vmatpush2.xpose.msra.mxu0 0.0
    %4771 = vmatprep.subr.mxu0 0.0
    %4772 = vmatpush2.xpose.msra.mxu0 0.0
    %4773 = vmatprep.subr.mxu0 0.0
    %4774 = vmatpush2.xpose.msra.mxu0 0.0
    %4775 = vmatprep.subr.mxu0 0.0
    %4776 = vmatpush2.xpose.msra.mxu0 0.0
    %4777 = vmatprep.subr.mxu0 0.0
    %4778 = vmatpush2.xpose.msra.mxu0 0.0
    %4779 = vmatprep.subr.mxu0 0.0
    %4780 = vmatpush2.xpose.msra.mxu0 0.0
    %4781 = vmatprep.mubr.f32.mxu0 0.0
    %4782 = vmatmul.mubr.f32.gmra.mxu0 %v4195
    %v4783 = vpop.f32.mrf.mxu0
    %v4784 = vadd.f32 0.0, %v4783
    %v4785 = vpop.f32.mrf.mxu0
    %4786 = vdwg.mxu0
    %v4787 = vsel %vm819, %v4266, -inf
    %4788 = vmax.xlane.f32.xlu0 %v4787
    %v4789 = vpop.xlane.xlu0 %4788
    %v4790 = vsel %vm819, %v4340, -inf
    %4791 = vmax.xlane.f32.xlu0 %v4790
    %v4792 = vpop.xlane.xlu0 %4791
    %v4793 = vsel %vm819, %v4414, -inf
    %4794 = vmax.xlane.f32.xlu0 %v4793
    %v4795 = vpop.xlane.xlu0 %4794
    %v4796 = vsel %vm819, %v4488, -inf
    %4797 = vmax.xlane.f32.xlu0 %v4796
    %v4798 = vpop.xlane.xlu0 %4797
    %v4799 = vsel %vm819, %v4562, -inf
    %4800 = vmax.xlane.f32.xlu0 %v4799
    %v4801 = vpop.xlane.xlu0 %4800
    %v4802 = vsel %vm819, %v4636, -inf
    %4803 = vmax.xlane.f32.xlu0 %v4802
    %v4804 = vpop.xlane.xlu0 %4803
    %v4805 = vsel %vm819, %v4710, -inf
    %4806 = vmax.xlane.f32.xlu0 %v4805
    %v4807 = vpop.xlane.xlu0 %4806
    %v4808 = vsel %vm819, %v4784, -inf
    %4809 = vmax.xlane.f32.xlu0 %v4808
    %v4810 = vpop.xlane.xlu0 %4809
    %v4811 = vsub.f32 %v4266, %v4789
    %v4812 = vsub.f32 %v4340, %v4792
    %v4813 = vsub.f32 %v4414, %v4795
    %v4814 = vsub.f32 %v4488, %v4798
    %v4815 = vsub.f32 %v4562, %v4801
    %v4816 = vsub.f32 %v4636, %v4804
    %v4817 = vsub.f32 %v4710, %v4807
    %v4818 = vsub.f32 %v4784, %v4810
    %v4819 = vmul.f32 %v4811, 1.442695
    %v4820 = vpow.pop %v4819
    %v4821 = vmul.f32 %v4812, 1.442695
    %v4822 = vpow.pop %v4821
    %v4823 = vmul.f32 %v4813, 1.442695
    %v4824 = vpow.pop %v4823
    %v4825 = vmul.f32 %v4814, 1.442695
    %v4826 = vpow.pop %v4825
    %v4827 = vmul.f32 %v4815, 1.442695
    %v4828 = vpow.pop %v4827
    %v4829 = vmul.f32 %v4816, 1.442695
    %v4830 = vpow.pop %v4829
    %v4831 = vmul.f32 %v4817, 1.442695
    %v4832 = vpow.pop %v4831
    %v4833 = vmul.f32 %v4818, 1.442695
    %v4834 = vpow.pop %v4833
    %v4835 = vsel %vm819, %v4820, 0.0
    %4836 = vadd.xlane.f32.xlu0 %v4835
    %v4837 = vpop.xlane.xlu0 %4836
    %v4838 = vsel %vm819, %v4822, 0.0
    %4839 = vadd.xlane.f32.xlu0 %v4838
    %v4840 = vpop.xlane.xlu0 %4839
    %v4841 = vsel %vm819, %v4824, 0.0
    %4842 = vadd.xlane.f32.xlu0 %v4841
    %v4843 = vpop.xlane.xlu0 %4842
    %v4844 = vsel %vm819, %v4826, 0.0
    %4845 = vadd.xlane.f32.xlu0 %v4844
    %v4846 = vpop.xlane.xlu0 %4845
    %v4847 = vsel %vm819, %v4828, 0.0
    %4848 = vadd.xlane.f32.xlu0 %v4847
    %v4849 = vpop.xlane.xlu0 %4848
    %v4850 = vsel %vm819, %v4830, 0.0
    %4851 = vadd.xlane.f32.xlu0 %v4850
    %v4852 = vpop.xlane.xlu0 %4851
    %v4853 = vsel %vm819, %v4832, 0.0
    %4854 = vadd.xlane.f32.xlu0 %v4853
    %v4855 = vpop.xlane.xlu0 %4854
    %v4856 = vsel %vm819, %v4834, 0.0
    %4857 = vadd.xlane.f32.xlu0 %v4856
    %v4858 = vpop.xlane.xlu0 %4857
    %v4859 = vrcp.pop %v4837
    %v4860 = vmul.f32 %v4820, %v4859
    %v4861 = vrcp.pop %v4840
    %v4862 = vmul.f32 %v4822, %v4861
    %v4863 = vrcp.pop %v4843
    %v4864 = vmul.f32 %v4824, %v4863
    %v4865 = vrcp.pop %v4846
    %v4866 = vmul.f32 %v4826, %v4865
    %v4867 = vrcp.pop %v4849
    %v4868 = vmul.f32 %v4828, %v4867
    %v4869 = vrcp.pop %v4852
    %v4870 = vmul.f32 %v4830, %v4869
    %v4871 = vrcp.pop %v4855
    %v4872 = vmul.f32 %v4832, %v4871
    %v4873 = vrcp.pop %v4858
    %v4874 = vmul.f32 %v4834, %v4873
    %v4875 = vrot.slane %v4194, 4
    %v4877 = vsel %vm909, %v4860, 0
    %v4879 = vsel %vm913, %v4875, 0
    %4881 = vmatprep.subr.mxu0 0.0
    %4882 = vmatpush1.msra.mxu0 0.0
    %4883 = vmatprep.subr.mxu0 0.0
    %4884 = vmatpush1.msra.mxu0 0.0
    %4885 = vmatprep.subr.mxu0 0.0
    %4886 = vmatpush1.msra.mxu0 0.0
    %4887 = vmatprep.subr.mxu0 0.0
    %4888 = vmatpush1.msra.mxu0 0.0
    %4889 = vmatprep.subr.mxu0 0.0
    %4890 = vmatpush1.msra.mxu0 0.0
    %4891 = vmatprep.subr.mxu0 0.0
    %4892 = vmatpush1.msra.mxu0 0.0
    %4893 = vmatprep.subr.mxu0 0.0
    %4894 = vmatpush1.msra.mxu0 0.0
    %4895 = vmatprep.subr.mxu0 0.0
    %4896 = vmatpush1.msra.mxu0 0.0
    %4897 = vmatprep.subr.mxu0 0.0
    %4898 = vmatpush1.msra.mxu0 0.0
    %4899 = vmatprep.subr.mxu0 0.0
    %4900 = vmatpush1.msra.mxu0 0.0
    %4901 = vmatprep.subr.mxu0 0.0
    %4902 = vmatpush1.msra.mxu0 0.0
    %4903 = vmatprep.subr.mxu0 0.0
    %4904 = vmatpush1.msra.mxu0 0.0
    %4905 = vmatprep.subr.mxu0 0.0
    %4906 = vmatpush1.msra.mxu0 0.0
    %4907 = vmatprep.subr.mxu0 0.0
    %4908 = vmatpush1.msra.mxu0 0.0
    %4909 = vmatprep.subr.mxu0 0.0
    %4910 = vmatpush1.msra.mxu0 0.0
    %4911 = vmatprep.subr.mxu0 0.0
    %4912 = vmatpush1.msra.mxu0 %v4879
    %4913 = vmatprep.subr.mxu0 0.0
    %4914 = vmatpush2.msra.mxu0 0.0
    %4915 = vmatprep.subr.mxu0 0.0
    %4916 = vmatpush2.msra.mxu0 0.0
    %4917 = vmatprep.subr.mxu0 0.0
    %4918 = vmatpush2.msra.mxu0 0.0
    %4919 = vmatprep.subr.mxu0 0.0
    %4920 = vmatpush2.msra.mxu0 0.0
    %4921 = vmatprep.subr.mxu0 0.0
    %4922 = vmatpush2.msra.mxu0 0.0
    %4923 = vmatprep.subr.mxu0 0.0
    %4924 = vmatpush2.msra.mxu0 0.0
    %4925 = vmatprep.subr.mxu0 0.0
    %4926 = vmatpush2.msra.mxu0 0.0
    %4927 = vmatprep.subr.mxu0 0.0
    %4928 = vmatpush2.msra.mxu0 0.0
    %4929 = vmatprep.subr.mxu0 0.0
    %4930 = vmatpush2.msra.mxu0 0.0
    %4931 = vmatprep.subr.mxu0 0.0
    %4932 = vmatpush2.msra.mxu0 0.0
    %4933 = vmatprep.subr.mxu0 0.0
    %4934 = vmatpush2.msra.mxu0 0.0
    %4935 = vmatprep.subr.mxu0 0.0
    %4936 = vmatpush2.msra.mxu0 0.0
    %4937 = vmatprep.subr.mxu0 0.0
    %4938 = vmatpush2.msra.mxu0 0.0
    %4939 = vmatprep.subr.mxu0 0.0
    %4940 = vmatpush2.msra.mxu0 0.0
    %4941 = vmatprep.subr.mxu0 0.0
    %4942 = vmatpush2.msra.mxu0 0.0
    %4943 = vmatprep.subr.mxu0 0.0
    %4944 = vmatpush2.msra.mxu0 0.0
    %4945 = vmatprep.mubr.f32.mxu0 0.0
    %4946 = vmatmul.mubr.f32.gmra.mxu0 %v4877
    %v4947 = vpop.f32.mrf.mxu0
    %v4948 = vadd.f32 0.0, %v4947
    %v4949 = vpop.f32.mrf.mxu0
    %4950 = vdwg.mxu0
    %v4951 = vrot.slane %v4270, 4
    %v4953 = vsel %vm909, %v4862, 0
    %v4955 = vsel %vm913, %v4951, 0
    %4957 = vmatprep.subr.mxu0 0.0
    %4958 = vmatpush1.msra.mxu0 0.0
    %4959 = vmatprep.subr.mxu0 0.0
    %4960 = vmatpush1.msra.mxu0 0.0
    %4961 = vmatprep.subr.mxu0 0.0
    %4962 = vmatpush1.msra.mxu0 0.0
    %4963 = vmatprep.subr.mxu0 0.0
    %4964 = vmatpush1.msra.mxu0 0.0
    %4965 = vmatprep.subr.mxu0 0.0
    %4966 = vmatpush1.msra.mxu0 0.0
    %4967 = vmatprep.subr.mxu0 0.0
    %4968 = vmatpush1.msra.mxu0 0.0
    %4969 = vmatprep.subr.mxu0 0.0
    %4970 = vmatpush1.msra.mxu0 0.0
    %4971 = vmatprep.subr.mxu0 0.0
    %4972 = vmatpush1.msra.mxu0 0.0
    %4973 = vmatprep.subr.mxu0 0.0
    %4974 = vmatpush1.msra.mxu0 0.0
    %4975 = vmatprep.subr.mxu0 0.0
    %4976 = vmatpush1.msra.mxu0 0.0
    %4977 = vmatprep.subr.mxu0 0.0
    %4978 = vmatpush1.msra.mxu0 0.0
    %4979 = vmatprep.subr.mxu0 0.0
    %4980 = vmatpush1.msra.mxu0 0.0
    %4981 = vmatprep.subr.mxu0 0.0
    %4982 = vmatpush1.msra.mxu0 0.0
    %4983 = vmatprep.subr.mxu0 0.0
    %4984 = vmatpush1.msra.mxu0 0.0
    %4985 = vmatprep.subr.mxu0 0.0
    %4986 = vmatpush1.msra.mxu0 0.0
    %4987 = vmatprep.subr.mxu0 0.0
    %4988 = vmatpush1.msra.mxu0 %v4955
    %4989 = vmatprep.subr.mxu0 0.0
    %4990 = vmatpush2.msra.mxu0 0.0
    %4991 = vmatprep.subr.mxu0 0.0
    %4992 = vmatpush2.msra.mxu0 0.0
    %4993 = vmatprep.subr.mxu0 0.0
    %4994 = vmatpush2.msra.mxu0 0.0
    %4995 = vmatprep.subr.mxu0 0.0
    %4996 = vmatpush2.msra.mxu0 0.0
    %4997 = vmatprep.subr.mxu0 0.0
    %4998 = vmatpush2.msra.mxu0 0.0
    %4999 = vmatprep.subr.mxu0 0.0
    %5000 = vmatpush2.msra.mxu0 0.0
    %5001 = vmatprep.subr.mxu0 0.0
    %5002 = vmatpush2.msra.mxu0 0.0
    %5003 = vmatprep.subr.mxu0 0.0
    %5004 = vmatpush2.msra.mxu0 0.0
    %5005 = vmatprep.subr.mxu0 0.0
    %5006 = vmatpush2.msra.mxu0 0.0
    %5007 = vmatprep.subr.mxu0 0.0
    %5008 = vmatpush2.msra.mxu0 0.0
    %5009 = vmatprep.subr.mxu0 0.0
    %5010 = vmatpush2.msra.mxu0 0.0
    %5011 = vmatprep.subr.mxu0 0.0
    %5012 = vmatpush2.msra.mxu0 0.0
    %5013 = vmatprep.subr.mxu0 0.0
    %5014 = vmatpush2.msra.mxu0 0.0
    %5015 = vmatprep.subr.mxu0 0.0
    %5016 = vmatpush2.msra.mxu0 0.0
    %5017 = vmatprep.subr.mxu0 0.0
    %5018 = vmatpush2.msra.mxu0 0.0
    %5019 = vmatprep.subr.mxu0 0.0
    %5020 = vmatpush2.msra.mxu0 0.0
    %5021 = vmatprep.mubr.f32.mxu0 0.0
    %5022 = vmatmul.mubr.f32.gmra.mxu0 %v4953
    %v5023 = vpop.f32.mrf.mxu0
    %v5024 = vadd.f32 0.0, %v5023
    %v5025 = vpop.f32.mrf.mxu0
    %5026 = vdwg.mxu0
    %v5027 = vrot.slane %v4344, 4
    %v5029 = vsel %vm909, %v4864, 0
    %v5031 = vsel %vm913, %v5027, 0
    %5033 = vmatprep.subr.mxu0 0.0
    %5034 = vmatpush1.msra.mxu0 0.0
    %5035 = vmatprep.subr.mxu0 0.0
    %5036 = vmatpush1.msra.mxu0 0.0
    %5037 = vmatprep.subr.mxu0 0.0
    %5038 = vmatpush1.msra.mxu0 0.0
    %5039 = vmatprep.subr.mxu0 0.0
    %5040 = vmatpush1.msra.mxu0 0.0
    %5041 = vmatprep.subr.mxu0 0.0
    %5042 = vmatpush1.msra.mxu0 0.0
    %5043 = vmatprep.subr.mxu0 0.0
    %5044 = vmatpush1.msra.mxu0 0.0
    %5045 = vmatprep.subr.mxu0 0.0
    %5046 = vmatpush1.msra.mxu0 0.0
    %5047 = vmatprep.subr.mxu0 0.0
    %5048 = vmatpush1.msra.mxu0 0.0
    %5049 = vmatprep.subr.mxu0 0.0
    %5050 = vmatpush1.msra.mxu0 0.0
    %5051 = vmatprep.subr.mxu0 0.0
    %5052 = vmatpush1.msra.mxu0 0.0
    %5053 = vmatprep.subr.mxu0 0.0
    %5054 = vmatpush1.msra.mxu0 0.0
    %5055 = vmatprep.subr.mxu0 0.0
    %5056 = vmatpush1.msra.mxu0 0.0
    %5057 = vmatprep.subr.mxu0 0.0
    %5058 = vmatpush1.msra.mxu0 0.0
    %5059 = vmatprep.subr.mxu0 0.0
    %5060 = vmatpush1.msra.mxu0 0.0
    %5061 = vmatprep.subr.mxu0 0.0
    %5062 = vmatpush1.msra.mxu0 0.0
    %5063 = vmatprep.subr.mxu0 0.0
    %5064 = vmatpush1.msra.mxu0 %v5031
    %5065 = vmatprep.subr.mxu0 0.0
    %5066 = vmatpush2.msra.mxu0 0.0
    %5067 = vmatprep.subr.mxu0 0.0
    %5068 = vmatpush2.msra.mxu0 0.0
    %5069 = vmatprep.subr.mxu0 0.0
    %5070 = vmatpush2.msra.mxu0 0.0
    %5071 = vmatprep.subr.mxu0 0.0
    %5072 = vmatpush2.msra.mxu0 0.0
    %5073 = vmatprep.subr.mxu0 0.0
    %5074 = vmatpush2.msra.mxu0 0.0
    %5075 = vmatprep.subr.mxu0 0.0
    %5076 = vmatpush2.msra.mxu0 0.0
    %5077 = vmatprep.subr.mxu0 0.0
    %5078 = vmatpush2.msra.mxu0 0.0
    %5079 = vmatprep.subr.mxu0 0.0
    %5080 = vmatpush2.msra.mxu0 0.0
    %5081 = vmatprep.subr.mxu0 0.0
    %5082 = vmatpush2.msra.mxu0 0.0
    %5083 = vmatprep.subr.mxu0 0.0
    %5084 = vmatpush2.msra.mxu0 0.0
    %5085 = vmatprep.subr.mxu0 0.0
    %5086 = vmatpush2.msra.mxu0 0.0
    %5087 = vmatprep.subr.mxu0 0.0
    %5088 = vmatpush2.msra.mxu0 0.0
    %5089 = vmatprep.subr.mxu0 0.0
    %5090 = vmatpush2.msra.mxu0 0.0
    %5091 = vmatprep.subr.mxu0 0.0
    %5092 = vmatpush2.msra.mxu0 0.0
    %5093 = vmatprep.subr.mxu0 0.0
    %5094 = vmatpush2.msra.mxu0 0.0
    %5095 = vmatprep.subr.mxu0 0.0
    %5096 = vmatpush2.msra.mxu0 0.0
    %5097 = vmatprep.mubr.f32.mxu0 0.0
    %5098 = vmatmul.mubr.f32.gmra.mxu0 %v5029
    %v5099 = vpop.f32.mrf.mxu0
    %v5100 = vadd.f32 0.0, %v5099
    %v5101 = vpop.f32.mrf.mxu0
    %5102 = vdwg.mxu0
    %v5103 = vrot.slane %v4418, 4
    %v5105 = vsel %vm909, %v4866, 0
    %v5107 = vsel %vm913, %v5103, 0
    %5109 = vmatprep.subr.mxu0 0.0
    %5110 = vmatpush1.msra.mxu0 0.0
    %5111 = vmatprep.subr.mxu0 0.0
    %5112 = vmatpush1.msra.mxu0 0.0
    %5113 = vmatprep.subr.mxu0 0.0
    %5114 = vmatpush1.msra.mxu0 0.0
    %5115 = vmatprep.subr.mxu0 0.0
    %5116 = vmatpush1.msra.mxu0 0.0
    %5117 = vmatprep.subr.mxu0 0.0
    %5118 = vmatpush1.msra.mxu0 0.0
    %5119 = vmatprep.subr.mxu0 0.0
    %5120 = vmatpush1.msra.mxu0 0.0
    %5121 = vmatprep.subr.mxu0 0.0
    %5122 = vmatpush1.msra.mxu0 0.0
    %5123 = vmatprep.subr.mxu0 0.0
    %5124 = vmatpush1.msra.mxu0 0.0
    %5125 = vmatprep.subr.mxu0 0.0
    %5126 = vmatpush1.msra.mxu0 0.0
    %5127 = vmatprep.subr.mxu0 0.0
    %5128 = vmatpush1.msra.mxu0 0.0
    %5129 = vmatprep.subr.mxu0 0.0
    %5130 = vmatpush1.msra.mxu0 0.0
    %5131 = vmatprep.subr.mxu0 0.0
    %5132 = vmatpush1.msra.mxu0 0.0
    %5133 = vmatprep.subr.mxu0 0.0
    %5134 = vmatpush1.msra.mxu0 0.0
    %5135 = vmatprep.subr.mxu0 0.0
    %5136 = vmatpush1.msra.mxu0 0.0
    %5137 = vmatprep.subr.mxu0 0.0
    %5138 = vmatpush1.msra.mxu0 0.0
    %5139 = vmatprep.subr.mxu0 0.0
    %5140 = vmatpush1.msra.mxu0 %v5107
    %5141 = vmatprep.subr.mxu0 0.0
    %5142 = vmatpush2.msra.mxu0 0.0
    %5143 = vmatprep.subr.mxu0 0.0
    %5144 = vmatpush2.msra.mxu0 0.0
    %5145 = vmatprep.subr.mxu0 0.0
    %5146 = vmatpush2.msra.mxu0 0.0
    %5147 = vmatprep.subr.mxu0 0.0
    %5148 = vmatpush2.msra.mxu0 0.0
    %5149 = vmatprep.subr.mxu0 0.0
    %5150 = vmatpush2.msra.mxu0 0.0
    %5151 = vmatprep.subr.mxu0 0.0
    %5152 = vmatpush2.msra.mxu0 0.0
    %5153 = vmatprep.subr.mxu0 0.0
    %5154 = vmatpush2.msra.mxu0 0.0
    %5155 = vmatprep.subr.mxu0 0.0
    %5156 = vmatpush2.msra.mxu0 0.0
    %5157 = vmatprep.subr.mxu0 0.0
    %5158 = vmatpush2.msra.mxu0 0.0
    %5159 = vmatprep.subr.mxu0 0.0
    %5160 = vmatpush2.msra.mxu0 0.0
    %5161 = vmatprep.subr.mxu0 0.0
    %5162 = vmatpush2.msra.mxu0 0.0
    %5163 = vmatprep.subr.mxu0 0.0
    %5164 = vmatpush2.msra.mxu0 0.0
    %5165 = vmatprep.subr.mxu0 0.0
    %5166 = vmatpush2.msra.mxu0 0.0
    %5167 = vmatprep.subr.mxu0 0.0
    %5168 = vmatpush2.msra.mxu0 0.0
    %5169 = vmatprep.subr.mxu0 0.0
    %5170 = vmatpush2.msra.mxu0 0.0
    %5171 = vmatprep.subr.mxu0 0.0
    %5172 = vmatpush2.msra.mxu0 0.0
    %5173 = vmatprep.mubr.f32.mxu0 0.0
    %5174 = vmatmul.mubr.f32.gmra.mxu0 %v5105
    %v5175 = vpop.f32.mrf.mxu0
    %v5176 = vadd.f32 0.0, %v5175
    %v5177 = vpop.f32.mrf.mxu0
    %5178 = vdwg.mxu0
    %v5179 = vrot.slane %v4492, 4
    %v5181 = vsel %vm909, %v4868, 0
    %v5183 = vsel %vm913, %v5179, 0
    %5185 = vmatprep.subr.mxu0 0.0
    %5186 = vmatpush1.msra.mxu0 0.0
    %5187 = vmatprep.subr.mxu0 0.0
    %5188 = vmatpush1.msra.mxu0 0.0
    %5189 = vmatprep.subr.mxu0 0.0
    %5190 = vmatpush1.msra.mxu0 0.0
    %5191 = vmatprep.subr.mxu0 0.0
    %5192 = vmatpush1.msra.mxu0 0.0
    %5193 = vmatprep.subr.mxu0 0.0
    %5194 = vmatpush1.msra.mxu0 0.0
    %5195 = vmatprep.subr.mxu0 0.0
    %5196 = vmatpush1.msra.mxu0 0.0
    %5197 = vmatprep.subr.mxu0 0.0
    %5198 = vmatpush1.msra.mxu0 0.0
    %5199 = vmatprep.subr.mxu0 0.0
    %5200 = vmatpush1.msra.mxu0 0.0
    %5201 = vmatprep.subr.mxu0 0.0
    %5202 = vmatpush1.msra.mxu0 0.0
    %5203 = vmatprep.subr.mxu0 0.0
    %5204 = vmatpush1.msra.mxu0 0.0
    %5205 = vmatprep.subr.mxu0 0.0
    %5206 = vmatpush1.msra.mxu0 0.0
    %5207 = vmatprep.subr.mxu0 0.0
    %5208 = vmatpush1.msra.mxu0 0.0
    %5209 = vmatprep.subr.mxu0 0.0
    %5210 = vmatpush1.msra.mxu0 0.0
    %5211 = vmatprep.subr.mxu0 0.0
    %5212 = vmatpush1.msra.mxu0 0.0
    %5213 = vmatprep.subr.mxu0 0.0
    %5214 = vmatpush1.msra.mxu0 0.0
    %5215 = vmatprep.subr.mxu0 0.0
    %5216 = vmatpush1.msra.mxu0 %v5183
    %5217 = vmatprep.subr.mxu0 0.0
    %5218 = vmatpush2.msra.mxu0 0.0
    %5219 = vmatprep.subr.mxu0 0.0
    %5220 = vmatpush2.msra.mxu0 0.0
    %5221 = vmatprep.subr.mxu0 0.0
    %5222 = vmatpush2.msra.mxu0 0.0
    %5223 = vmatprep.subr.mxu0 0.0
    %5224 = vmatpush2.msra.mxu0 0.0
    %5225 = vmatprep.subr.mxu0 0.0
    %5226 = vmatpush2.msra.mxu0 0.0
    %5227 = vmatprep.subr.mxu0 0.0
    %5228 = vmatpush2.msra.mxu0 0.0
    %5229 = vmatprep.subr.mxu0 0.0
    %5230 = vmatpush2.msra.mxu0 0.0
    %5231 = vmatprep.subr.mxu0 0.0
    %5232 = vmatpush2.msra.mxu0 0.0
    %5233 = vmatprep.subr.mxu0 0.0
    %5234 = vmatpush2.msra.mxu0 0.0
    %5235 = vmatprep.subr.mxu0 0.0
    %5236 = vmatpush2.msra.mxu0 0.0
    %5237 = vmatprep.subr.mxu0 0.0
    %5238 = vmatpush2.msra.mxu0 0.0
    %5239 = vmatprep.subr.mxu0 0.0
    %5240 = vmatpush2.msra.mxu0 0.0
    %5241 = vmatprep.subr.mxu0 0.0
    %5242 = vmatpush2.msra.mxu0 0.0
    %5243 = vmatprep.subr.mxu0 0.0
    %5244 = vmatpush2.msra.mxu0 0.0
    %5245 = vmatprep.subr.mxu0 0.0
    %5246 = vmatpush2.msra.mxu0 0.0
    %5247 = vmatprep.subr.mxu0 0.0
    %5248 = vmatpush2.msra.mxu0 0.0
    %5249 = vmatprep.mubr.f32.mxu0 0.0
    %5250 = vmatmul.mubr.f32.gmra.mxu0 %v5181
    %v5251 = vpop.f32.mrf.mxu0
    %v5252 = vadd.f32 0.0, %v5251
    %v5253 = vpop.f32.mrf.mxu0
    %5254 = vdwg.mxu0
    %v5255 = vrot.slane %v4566, 4
    %v5257 = vsel %vm909, %v4870, 0
    %v5259 = vsel %vm913, %v5255, 0
    %5261 = vmatprep.subr.mxu0 0.0
    %5262 = vmatpush1.msra.mxu0 0.0
    %5263 = vmatprep.subr.mxu0 0.0
    %5264 = vmatpush1.msra.mxu0 0.0
    %5265 = vmatprep.subr.mxu0 0.0
    %5266 = vmatpush1.msra.mxu0 0.0
    %5267 = vmatprep.subr.mxu0 0.0
    %5268 = vmatpush1.msra.mxu0 0.0
    %5269 = vmatprep.subr.mxu0 0.0
    %5270 = vmatpush1.msra.mxu0 0.0
    %5271 = vmatprep.subr.mxu0 0.0
    %5272 = vmatpush1.msra.mxu0 0.0
    %5273 = vmatprep.subr.mxu0 0.0
    %5274 = vmatpush1.msra.mxu0 0.0
    %5275 = vmatprep.subr.mxu0 0.0
    %5276 = vmatpush1.msra.mxu0 0.0
    %5277 = vmatprep.subr.mxu0 0.0
    %5278 = vmatpush1.msra.mxu0 0.0
    %5279 = vmatprep.subr.mxu0 0.0
    %5280 = vmatpush1.msra.mxu0 0.0
    %5281 = vmatprep.subr.mxu0 0.0
    %5282 = vmatpush1.msra.mxu0 0.0
    %5283 = vmatprep.subr.mxu0 0.0
    %5284 = vmatpush1.msra.mxu0 0.0
    %5285 = vmatprep.subr.mxu0 0.0
    %5286 = vmatpush1.msra.mxu0 0.0
    %5287 = vmatprep.subr.mxu0 0.0
    %5288 = vmatpush1.msra.mxu0 0.0
    %5289 = vmatprep.subr.mxu0 0.0
    %5290 = vmatpush1.msra.mxu0 0.0
    %5291 = vmatprep.subr.mxu0 0.0
    %5292 = vmatpush1.msra.mxu0 %v5259
    %5293 = vmatprep.subr.mxu0 0.0
    %5294 = vmatpush2.msra.mxu0 0.0
    %5295 = vmatprep.subr.mxu0 0.0
    %5296 = vmatpush2.msra.mxu0 0.0
    %5297 = vmatprep.subr.mxu0 0.0
    %5298 = vmatpush2.msra.mxu0 0.0
    %5299 = vmatprep.subr.mxu0 0.0
    %5300 = vmatpush2.msra.mxu0 0.0
    %5301 = vmatprep.subr.mxu0 0.0
    %5302 = vmatpush2.msra.mxu0 0.0
    %5303 = vmatprep.subr.mxu0 0.0
    %5304 = vmatpush2.msra.mxu0 0.0
    %5305 = vmatprep.subr.mxu0 0.0
    %5306 = vmatpush2.msra.mxu0 0.0
    %5307 = vmatprep.subr.mxu0 0.0
    %5308 = vmatpush2.msra.mxu0 0.0
    %5309 = vmatprep.subr.mxu0 0.0
    %5310 = vmatpush2.msra.mxu0 0.0
    %5311 = vmatprep.subr.mxu0 0.0
    %5312 = vmatpush2.msra.mxu0 0.0
    %5313 = vmatprep.subr.mxu0 0.0
    %5314 = vmatpush2.msra.mxu0 0.0
    %5315 = vmatprep.subr.mxu0 0.0
    %5316 = vmatpush2.msra.mxu0 0.0
    %5317 = vmatprep.subr.mxu0 0.0
    %5318 = vmatpush2.msra.mxu0 0.0
    %5319 = vmatprep.subr.mxu0 0.0
    %5320 = vmatpush2.msra.mxu0 0.0
    %5321 = vmatprep.subr.mxu0 0.0
    %5322 = vmatpush2.msra.mxu0 0.0
    %5323 = vmatprep.subr.mxu0 0.0
    %5324 = vmatpush2.msra.mxu0 0.0
    %5325 = vmatprep.mubr.f32.mxu0 0.0
    %5326 = vmatmul.mubr.f32.gmra.mxu0 %v5257
    %v5327 = vpop.f32.mrf.mxu0
    %v5328 = vadd.f32 0.0, %v5327
    %v5329 = vpop.f32.mrf.mxu0
    %5330 = vdwg.mxu0
    %v5331 = vrot.slane %v4640, 4
    %v5333 = vsel %vm909, %v4872, 0
    %v5335 = vsel %vm913, %v5331, 0
    %5337 = vmatprep.subr.mxu0 0.0
    %5338 = vmatpush1.msra.mxu0 0.0
    %5339 = vmatprep.subr.mxu0 0.0
    %5340 = vmatpush1.msra.mxu0 0.0
    %5341 = vmatprep.subr.mxu0 0.0
    %5342 = vmatpush1.msra.mxu0 0.0
    %5343 = vmatprep.subr.mxu0 0.0
    %5344 = vmatpush1.msra.mxu0 0.0
    %5345 = vmatprep.subr.mxu0 0.0
    %5346 = vmatpush1.msra.mxu0 0.0
    %5347 = vmatprep.subr.mxu0 0.0
    %5348 = vmatpush1.msra.mxu0 0.0
    %5349 = vmatprep.subr.mxu0 0.0
    %5350 = vmatpush1.msra.mxu0 0.0
    %5351 = vmatprep.subr.mxu0 0.0
    %5352 = vmatpush1.msra.mxu0 0.0
    %5353 = vmatprep.subr.mxu0 0.0
    %5354 = vmatpush1.msra.mxu0 0.0
    %5355 = vmatprep.subr.mxu0 0.0
    %5356 = vmatpush1.msra.mxu0 0.0
    %5357 = vmatprep.subr.mxu0 0.0
    %5358 = vmatpush1.msra.mxu0 0.0
    %5359 = vmatprep.subr.mxu0 0.0
    %5360 = vmatpush1.msra.mxu0 0.0
    %5361 = vmatprep.subr.mxu0 0.0
    %5362 = vmatpush1.msra.mxu0 0.0
    %5363 = vmatprep.subr.mxu0 0.0
    %5364 = vmatpush1.msra.mxu0 0.0
    %5365 = vmatprep.subr.mxu0 0.0
    %5366 = vmatpush1.msra.mxu0 0.0
    %5367 = vmatprep.subr.mxu0 0.0
    %5368 = vmatpush1.msra.mxu0 %v5335
    %5369 = vmatprep.subr.mxu0 0.0
    %5370 = vmatpush2.msra.mxu0 0.0
    %5371 = vmatprep.subr.mxu0 0.0
    %5372 = vmatpush2.msra.mxu0 0.0
    %5373 = vmatprep.subr.mxu0 0.0
    %5374 = vmatpush2.msra.mxu0 0.0
    %5375 = vmatprep.subr.mxu0 0.0
    %5376 = vmatpush2.msra.mxu0 0.0
    %5377 = vmatprep.subr.mxu0 0.0
    %5378 = vmatpush2.msra.mxu0 0.0
    %5379 = vmatprep.subr.mxu0 0.0
    %5380 = vmatpush2.msra.mxu0 0.0
    %5381 = vmatprep.subr.mxu0 0.0
    %5382 = vmatpush2.msra.mxu0 0.0
    %5383 = vmatprep.subr.mxu0 0.0
    %5384 = vmatpush2.msra.mxu0 0.0
    %5385 = vmatprep.subr.mxu0 0.0
    %5386 = vmatpush2.msra.mxu0 0.0
    %5387 = vmatprep.subr.mxu0 0.0
    %5388 = vmatpush2.msra.mxu0 0.0
    %5389 = vmatprep.subr.mxu0 0.0
    %5390 = vmatpush2.msra.mxu0 0.0
    %5391 = vmatprep.subr.mxu0 0.0
    %5392 = vmatpush2.msra.mxu0 0.0
    %5393 = vmatprep.subr.mxu0 0.0
    %5394 = vmatpush2.msra.mxu0 0.0
    %5395 = vmatprep.subr.mxu0 0.0
    %5396 = vmatpush2.msra.mxu0 0.0
    %5397 = vmatprep.subr.mxu0 0.0
    %5398 = vmatpush2.msra.mxu0 0.0
    %5399 = vmatprep.subr.mxu0 0.0
    %5400 = vmatpush2.msra.mxu0 0.0
    %5401 = vmatprep.mubr.f32.mxu0 0.0
    %5402 = vmatmul.mubr.f32.gmra.mxu0 %v5333
    %v5403 = vpop.f32.mrf.mxu0
    %v5404 = vadd.f32 0.0, %v5403
    %v5405 = vpop.f32.mrf.mxu0
    %5406 = vdwg.mxu0
    %v5407 = vrot.slane %v4714, 4
    %v5409 = vsel %vm909, %v4874, 0
    %v5411 = vsel %vm913, %v5407, 0
    %5413 = vmatprep.subr.mxu0 0.0
    %5414 = vmatpush1.msra.mxu0 0.0
    %5415 = vmatprep.subr.mxu0 0.0
    %5416 = vmatpush1.msra.mxu0 0.0
    %5417 = vmatprep.subr.mxu0 0.0
    %5418 = vmatpush1.msra.mxu0 0.0
    %5419 = vmatprep.subr.mxu0 0.0
    %5420 = vmatpush1.msra.mxu0 0.0
    %5421 = vmatprep.subr.mxu0 0.0
    %5422 = vmatpush1.msra.mxu0 0.0
    %5423 = vmatprep.subr.mxu0 0.0
    %5424 = vmatpush1.msra.mxu0 0.0
    %5425 = vmatprep.subr.mxu0 0.0
    %5426 = vmatpush1.msra.mxu0 0.0
    %5427 = vmatprep.subr.mxu0 0.0
    %5428 = vmatpush1.msra.mxu0 0.0
    %5429 = vmatprep.subr.mxu0 0.0
    %5430 = vmatpush1.msra.mxu0 0.0
    %5431 = vmatprep.subr.mxu0 0.0
    %5432 = vmatpush1.msra.mxu0 0.0
    %5433 = vmatprep.subr.mxu0 0.0
    %5434 = vmatpush1.msra.mxu0 0.0
    %5435 = vmatprep.subr.mxu0 0.0
    %5436 = vmatpush1.msra.mxu0 0.0
    %5437 = vmatprep.subr.mxu0 0.0
    %5438 = vmatpush1.msra.mxu0 0.0
    %5439 = vmatprep.subr.mxu0 0.0
    %5440 = vmatpush1.msra.mxu0 0.0
    %5441 = vmatprep.subr.mxu0 0.0
    %5442 = vmatpush1.msra.mxu0 0.0
    %5443 = vmatprep.subr.mxu0 0.0
    %5444 = vmatpush1.msra.mxu0 %v5411
    %5445 = vmatprep.subr.mxu0 0.0
    %5446 = vmatpush2.msra.mxu0 0.0
    %5447 = vmatprep.subr.mxu0 0.0
    %5448 = vmatpush2.msra.mxu0 0.0
    %5449 = vmatprep.subr.mxu0 0.0
    %5450 = vmatpush2.msra.mxu0 0.0
    %5451 = vmatprep.subr.mxu0 0.0
    %5452 = vmatpush2.msra.mxu0 0.0
    %5453 = vmatprep.subr.mxu0 0.0
    %5454 = vmatpush2.msra.mxu0 0.0
    %5455 = vmatprep.subr.mxu0 0.0
    %5456 = vmatpush2.msra.mxu0 0.0
    %5457 = vmatprep.subr.mxu0 0.0
    %5458 = vmatpush2.msra.mxu0 0.0
    %5459 = vmatprep.subr.mxu0 0.0
    %5460 = vmatpush2.msra.mxu0 0.0
    %5461 = vmatprep.subr.mxu0 0.0
    %5462 = vmatpush2.msra.mxu0 0.0
    %5463 = vmatprep.subr.mxu0 0.0
    %5464 = vmatpush2.msra.mxu0 0.0
    %5465 = vmatprep.subr.mxu0 0.0
    %5466 = vmatpush2.msra.mxu0 0.0
    %5467 = vmatprep.subr.mxu0 0.0
    %5468 = vmatpush2.msra.mxu0 0.0
    %5469 = vmatprep.subr.mxu0 0.0
    %5470 = vmatpush2.msra.mxu0 0.0
    %5471 = vmatprep.subr.mxu0 0.0
    %5472 = vmatpush2.msra.mxu0 0.0
    %5473 = vmatprep.subr.mxu0 0.0
    %5474 = vmatpush2.msra.mxu0 0.0
    %5475 = vmatprep.subr.mxu0 0.0
    %5476 = vmatpush2.msra.mxu0 0.0
    %5477 = vmatprep.mubr.f32.mxu0 0.0
    %5478 = vmatmul.mubr.f32.gmra.mxu0 %v5409
    %v5479 = vpop.f32.mrf.mxu0
    %v5480 = vadd.f32 0.0, %v5479
    %v5481 = vpop.f32.mrf.mxu0
    %5482 = vdwg.mxu0
    %v5491 = vrot.slane %v5024, 7
    %v5492 = vsel %vm1527, %v5491, %v4948
    %v5493 = vrot.slane %v5100, 6
    %v5494 = vsel %vm1530, %v5493, %v5492
    %v5495 = vrot.slane %v5176, 5
    %v5496 = vsel %vm1533, %v5495, %v5494
    %v5497 = vrot.slane %v5252, 4
    %v5498 = vsel %vm1536, %v5497, %v5496
    %v5499 = vrot.slane %v5328, 3
    %v5500 = vsel %vm1539, %v5499, %v5498
    %v5501 = vrot.slane %v5404, 2
    %v5502 = vsel %vm1542, %v5501, %v5500
    %v5503 = vrot.slane %v5480, 1
    %v5504 = vsel %vm1545, %v5503, %v5502
    %5505 = vrot.lane.b32.xlu0 %v5504, 96
    %v5506 = vpop.permute.xlu0 %5505
    %vm5508 = vcmask 1048320
    %5509 = vst.msk [vmem:[#allocation2] sm:$0xff] %vm5508, %v5506
    %v5510 = vld [vmem:[#allocation2] sm:$0xff]
    %v5511 = vld [vmem:[#allocation8] sm:$0xff]
    %v5512 = vld [vmem:[#allocation8 + $0x8] sm:$0xff]
    %v5513 = vld [vmem:[#allocation8 + $0x10] sm:$0xff]
    %v5514 = vld [vmem:[#allocation8 + $0x18] sm:$0xff]
    %v5515 = vld [vmem:[#allocation8 + $0x20] sm:$0xff]
    %v5516 = vld [vmem:[#allocation8 + $0x28] sm:$0xff]
    %v5517 = vld [vmem:[#allocation8 + $0x30] sm:$0xff]
    %v5518 = vld [vmem:[#allocation8 + $0x38] sm:$0xff]
    %v5519 = vld [vmem:[#allocation8 + $0x40] sm:$0xff]
    %v5520 = vld [vmem:[#allocation8 + $0x48] sm:$0xff]
    %v5521 = vld [vmem:[#allocation8 + $0x50] sm:$0xff]
    %v5522 = vld [vmem:[#allocation8 + $0x58] sm:$0xff]
    %v5523 = vld [vmem:[#allocation8 + $0x60] sm:$0xff]
    %v5524 = vld [vmem:[#allocation8 + $0x68] sm:$0xff]
    %v5525 = vld [vmem:[#allocation8 + $0x70] sm:$0xff]
    %v5526 = vld [vmem:[#allocation8 + $0x78] sm:$0xff]
    %v5527 = vld [vmem:[%s5] sm:$0x1]
    %v5529 = vlaneseq
    %v5530 = vshrl.u32 %v5529, 7
    %v5531 = vsub.s32 0, %v5530
    %v5532 = vrot.slane %v5527, %v5531
    %5534 = vmatprep.subr.mxu0 0.0
    %5535 = vmatpush1.msra.mxu0 %v5526
    %5536 = vmatprep.subr.mxu0 0.0
    %5537 = vmatpush1.msra.mxu0 %v5525
    %5538 = vmatprep.subr.mxu0 0.0
    %5539 = vmatpush1.msra.mxu0 %v5524
    %5540 = vmatprep.subr.mxu0 0.0
    %5541 = vmatpush1.msra.mxu0 %v5523
    %5542 = vmatprep.subr.mxu0 0.0
    %5543 = vmatpush1.msra.mxu0 %v5522
    %5544 = vmatprep.subr.mxu0 0.0
    %5545 = vmatpush1.msra.mxu0 %v5521
    %5546 = vmatprep.subr.mxu0 0.0
    %5547 = vmatpush1.msra.mxu0 %v5520
    %5548 = vmatprep.subr.mxu0 0.0
    %5549 = vmatpush1.msra.mxu0 %v5519
    %5550 = vmatprep.subr.mxu0 0.0
    %5551 = vmatpush1.msra.mxu0 %v5518
    %5552 = vmatprep.subr.mxu0 0.0
    %5553 = vmatpush1.msra.mxu0 %v5517
    %5554 = vmatprep.subr.mxu0 0.0
    %5555 = vmatpush1.msra.mxu0 %v5516
    %5556 = vmatprep.subr.mxu0 0.0
    %5557 = vmatpush1.msra.mxu0 %v5515
    %5558 = vmatprep.subr.mxu0 0.0
    %5559 = vmatpush1.msra.mxu0 %v5514
    %5560 = vmatprep.subr.mxu0 0.0
    %5561 = vmatpush1.msra.mxu0 %v5513
    %5562 = vmatprep.subr.mxu0 0.0
    %5563 = vmatpush1.msra.mxu0 %v5512
    %5564 = vmatprep.subr.mxu0 0.0
    %5565 = vmatpush1.msra.mxu0 %v5511
    %5566 = vmatprep.subr.mxu0 0.0
    %5567 = vmatpush2.msra.mxu0 0.0
    %5568 = vmatprep.subr.mxu0 0.0
    %5569 = vmatpush2.msra.mxu0 0.0
    %5570 = vmatprep.subr.mxu0 0.0
    %5571 = vmatpush2.msra.mxu0 0.0
    %5572 = vmatprep.subr.mxu0 0.0
    %5573 = vmatpush2.msra.mxu0 0.0
    %5574 = vmatprep.subr.mxu0 0.0
    %5575 = vmatpush2.msra.mxu0 0.0
    %5576 = vmatprep.subr.mxu0 0.0
    %5577 = vmatpush2.msra.mxu0 0.0
    %5578 = vmatprep.subr.mxu0 0.0
    %5579 = vmatpush2.msra.mxu0 0.0
    %5580 = vmatprep.subr.mxu0 0.0
    %5581 = vmatpush2.msra.mxu0 0.0
    %5582 = vmatprep.subr.mxu0 0.0
    %5583 = vmatpush2.msra.mxu0 0.0
    %5584 = vmatprep.subr.mxu0 0.0
    %5585 = vmatpush2.msra.mxu0 0.0
    %5586 = vmatprep.subr.mxu0 0.0
    %5587 = vmatpush2.msra.mxu0 0.0
    %5588 = vmatprep.subr.mxu0 0.0
    %5589 = vmatpush2.msra.mxu0 0.0
    %5590 = vmatprep.subr.mxu0 0.0
    %5591 = vmatpush2.msra.mxu0 0.0
    %5592 = vmatprep.subr.mxu0 0.0
    %5593 = vmatpush2.msra.mxu0 0.0
    %5594 = vmatprep.subr.mxu0 0.0
    %5595 = vmatpush2.msra.mxu0 0.0
    %5596 = vmatprep.subr.mxu0 0.0
    %5597 = vmatpush2.msra.mxu0 0.0
    %5598 = vmatprep.mubr.f32.mxu0 0.0
    %5599 = vmatmul.mubr.f32.gmra.mxu0 %v5510
    %v5600 = vpop.f32.mrf.mxu0
    %v5601 = vadd.f32 %v5532, %v5600
    %v5602 = vpop.f32.mrf.mxu0
    %5603 = vdwg.mxu0
    %5604 = vst [vmem:[#allocation9] sm:$0xff] %v5601
    // Predicated region
    $region38: #{tpu_custom_call.1} parent=1 // pred_check
      _
    $region39: #{tpu_custom_call.1} parent=1 // pred_check_branch
      %5606 = sbr.rel (0) target = $region41
    $region40: #{tpu_custom_call.1} parent=1 // pred_region
      %s5608 = ssub.s32 128, 128
      %5609 = vsyncadd [#allocation5], %s5608
      %s5611 = sshll.u32 [#allocation9], 4
      %s5612 = int_to_ptr.vmem [resolvable:$true] %s5611
      %5614 = dma.vmem_to_hbm [thread:$0]  %s5612, 128, %s6, [#allocation5]
    $region41: #{tpu_custom_call.1} parent=1 // pred_fallthru
      _
    // Predicated region
    $region42: #{tpu_custom_call.1} parent=1 // pred_check
      _
    $region43: #{tpu_custom_call.1} parent=1 // pred_check_branch
      %5616 = sbr.rel (0) target = $region45
    $region44: #{tpu_custom_call.1} parent=1 // pred_region
      %5617 = dma.done [#allocation5], 128
    $region45: #{tpu_custom_call.1} parent=1 // pred_fallthru
      _
    %5618 = vsyncpa [#allocation4], 1
    %5619 = vsyncpa [#allocation7], 1
    %5620 = vsyncpa [#allocation5], 1

</llo_original>
